<compile_context>
chip_gen: v7x
topology: tpu7x:2x2x1
jax: 0.10.0
libtpu: 0.0.40
codegen_flags: <defaults>
</compile_context>

<pallas_src>
import functools

import numpy as np
import jax
import jax.numpy as jnp
from jax.experimental import pallas as pl
from jax.experimental.pallas import tpu as pltpu

C = 1.0                  # self.c = 1
MIN_NORM = 1e-15         # PoincareBall.min_norm
BALL_EPS = 4e-3          # PoincareBall.eps[float32]
LANE = 128               # lane width; feature dims are zero-padded to this
NODE_PAD = 128           # node-count padding multiple (256 also fine on v6e/v7x)
NEG_INF = -1e30
USE_BF16_MXU = False     # optionally cast MXU operands to bf16 (f32 accumulate)
VMEM_LIMIT = 48 * 1024 * 1024


def _round_up(n, m):
    return ((n + m - 1) // m) * m


def _mxu(a):
    return a.astype(jnp.bfloat16) if USE_BF16_MXU else a


# ---------------- Poincare-ball math (runs *inside* the kernels) ---------------
def _lnorm(x):
    return jnp.maximum(jnp.sqrt(jnp.sum(x * x, axis=-1, keepdims=True)), MIN_NORM)


def _artanh(x):
    # NOTE: reference clamps at 1 - 1e-15 (underflows in f32); 1e-7 is the safe choice.
    x = jnp.clip(x, -1.0 + 1e-7, 1.0 - 1e-7)
    return 0.5 * (jnp.log1p(x) - jnp.log(1.0 - x))


def _proj(x, c):
    maxnorm = (1.0 - BALL_EPS) / jnp.sqrt(c)
    n = _lnorm(x)
    return jnp.where(n > maxnorm, x / n * maxnorm, x)


def _expmap0(u, c):
    sc = jnp.sqrt(c)
    n = _lnorm(u)
    return jnp.tanh(sc * n) * u / (sc * n)


def _logmap0(p, c):
    sc = jnp.sqrt(c)
    n = _lnorm(p)
    return _artanh(sc * n) * p / (sc * n)


def _mobius_add(x, y, c):
    x2 = jnp.sum(x * x, axis=-1, keepdims=True)
    y2 = jnp.sum(y * y, axis=-1, keepdims=True)
    xy = jnp.sum(x * y, axis=-1, keepdims=True)
    num = (1.0 + 2.0 * c * xy + c * y2) * x + (1.0 - c * x2) * y
    den = 1.0 + 2.0 * c * xy + c * c * x2 * y2
    return num / jnp.maximum(den, MIN_NORM)


def _mobius_matvec(x, w, c):
    # torch does mx = x @ m.T ; w is pre-transposed so this is one MXU matmul.
    sc = jnp.sqrt(c)
    xn = _lnorm(x)
    mx = jnp.dot(_mxu(x), _mxu(w), preferred_element_type=jnp.float32)
    mxn = _lnorm(mx)
    res = jnp.tanh(mxn / xn * _artanh(sc * xn)) * mx / (mxn * sc)
    allzero = jnp.sum(jnp.abs(mx), axis=-1, keepdims=True) == 0.0
    return jnp.where(allzero, jnp.zeros_like(res), res)


# ---------------------------------- kernels ------------------------------------
def _tangent_scores_kernel(c, has_prologue, *refs):
    """Per-node transform: [linear+initHyperX] -> HypLinear -> logmap0 + att scores."""
    if has_prologue:
        (x_ref, wl_ref, bl_ref, w_ref, b_ref, att_ref, xt_ref, s_ref) = refs
        h = jnp.dot(_mxu(x_ref[...]), _mxu(wl_ref[...]),
                    preferred_element_type=jnp.float32) + bl_ref[...]
        x_hyp = _proj(_expmap0(h, c), c)            # initHyperX + extra proj (idempotent)
    else:
        (x_ref, w_ref, b_ref, att_ref, xt_ref, s_ref) = refs
        x_hyp = x_ref[...]

    # HypLinear (dropout = 0 in eval): mobius matvec + hyperbolic bias.
    res = _proj(_mobius_matvec(x_hyp, w_ref[...], c), c)
    hyp_bias = _proj(_expmap0(b_ref[...], c), c)
    res = _proj(_mobius_add(res, hyp_bias, c), c)

    # Tangent-space features + one fused attention-score matmul (TM, 2H):
    # columns [0, H) = target scores (att_i), columns [H, 2H) = source scores (att_j).
    x_tan = _logmap0(res, c)
    xt_ref[...] = x_tan
    s_ref[...] = jnp.dot(_mxu(x_tan), _mxu(att_ref[...]),
                         preferred_element_type=jnp.float32)


def _attn_agg_kernel(heads, d_head, concat, to_tangent, c,
                     si_ref, sjt_ref, xt_ref, adj_ref, o_ref,
                     m_sc, l_sc, acc_sc):
    """Masked GAT attention + aggregation, online softmax over source tiles."""
    k = pl.program_id(1)
    n_k = pl.num_programs(1)

    @pl.when(k == 0)
    def _():
        m_sc[...] = jnp.full_like(m_sc, NEG_INF)
        l_sc[...] = jnp.zeros_like(l_sc)
        acc_sc[...] = jnp.zeros_like(acc_sc)

    x_tan = xt_ref[...]                          # (TK, d_p)  source tile
    si = si_ref[...]                             # (TM, H)    target scores
    sjt = sjt_ref[...]                           # (H, TK)    source scores
    mask = adj_ref[...] != 0                     # (TM, TK)   int8 adjacency tile
    neg = jnp.float32(NEG_INF)

    for h in range(heads):                       # heads is a small static python int
        e = si[:, h:h + 1] + sjt[h:h + 1, :]                    # (TM, TK)
        e = jnp.maximum(e, 0.2 * e)                             # leaky_relu(0.2)
        e = jnp.where(mask, e, neg)
        m_old = m_sc[h]                                         # (TM, 1)
        m_new = jnp.maximum(m_old, jnp.max(e, axis=-1, keepdims=True))
        p = jnp.exp(e - m_new)                                  # masked entries -> 0
        corr = jnp.exp(m_old - m_new)
        l_sc[h] = corr * l_sc[h] + jnp.sum(p, axis=-1, keepdims=True)
        # unnormalised aggregation against the FULL 128-lane x_tan (no N-sized slices)
        acc_sc[h] = corr * acc_sc[h] + jnp.dot(
            _mxu(p), _mxu(x_tan), preferred_element_type=jnp.float32)
        m_sc[h] = m_new

    @pl.when(k == n_k - 1)
    def _():
        tm_rows = o_ref.shape[0]
        d_p = xt_ref.shape[1]
        d_out_p = o_ref.shape[1]
        col = jax.lax.broadcasted_iota(jnp.int32, (1, d_p), 1)
        support = jnp.zeros((tm_rows, d_out_p), jnp.float32)
        for h in range(heads):
            # PyG softmax denom (+1e-16); normalisation applied after the matmul.
            inv = pl.reciprocal(l_sc[h] + 1e-16, approx=True)    # (TM, 1)
            full = acc_sc[h] * inv                               # (TM, d_p)
            if concat:
                hm = (col >= h * d_head) & (col < (h + 1) * d_head)
                support = support + jnp.where(hm, full, 0.0)     # head cols in place
            else:
                part = full[:, h * d_head:(h + 1) * d_head]      # small (TM, d_head)
                part = jnp.concatenate(
                    [part, jnp.zeros((tm_rows, d_out_p - d_head), jnp.float32)],
                    axis=-1)
                support = support + part
        if not concat:
            support = support * (1.0 / heads)                    # mean over heads

        out = _proj(_expmap0(support, c), c)                     # back onto the ball
        xt = _logmap0(out, c)                                    # HypAct: leaky(0.01)
        xt = jnp.maximum(xt, 0.01 * xt)
        out = _proj(_expmap0(xt, c), c)
        if to_tangent:                                           # fused toTangentX
            out = _logmap0(out, c)
        o_ref[...] = out


# ---------------------------- pallas_call wrappers ------------------------------
def _pick_rows(n_pad, candidates):
    for t in candidates:
        if n_pad % t == 0:
            return t
    return candidates[-1]


def _run_tangent_scores(x, layer, c, lin=None):
    n, d_in = x.shape
    tm = _pick_rows(n, (512, 256, 128))           # stage A: big tiles, weights resident
    grid = (n // tm,)
    d_p = layer["w"].shape[1]
    heads = layer["heads"]

    def row_spec(d):
        return pl.BlockSpec((tm, d), lambda i: (i, 0))

    def full_spec(a):
        return pl.BlockSpec(a.shape, lambda i: (0,) * a.ndim)

    if lin is not None:
        kernel = functools.partial(_tangent_scores_kernel, c, True)
        args = (x, lin["w"], lin["b"], layer["w"], layer["b"], layer["att"])
    else:
        kernel = functools.partial(_tangent_scores_kernel, c, False)
        args = (x, layer["w"], layer["b"], layer["att"])
    in_specs = [row_spec(d_in)] + [full_spec(a) for a in args[1:]]

    out_shape = (
        jax.ShapeDtypeStruct((n, d_p), jnp.float32),         # x_tan
        jax.ShapeDtypeStruct((n, 2 * heads), jnp.float32),   # [si | sj] scores
    )
    out_specs = [
        pl.BlockSpec((tm, d_p), lambda i: (i, 0)),
        pl.BlockSpec((tm, 2 * heads), lambda i: (i, 0)),
    ]
    return pl.pallas_call(
        kernel, grid=grid, out_shape=out_shape,
        in_specs=in_specs, out_specs=out_specs,
        compiler_params=pltpu.CompilerParams(
            dimension_semantics=("parallel",),
            vmem_limit_bytes=VMEM_LIMIT),
    )(*args)


def _run_attn_agg(x_tan, si, sjt, adj, layer, c, to_tangent):
    n, d_p = x_tan.shape
    heads = layer["heads"]
    tm = _pick_rows(n, (256, 128))                # target-row tile
    tk = _pick_rows(n, (512, 256, 128))           # source-column tile (online softmax)
    grid = (n // tm, n // tk)
    d_out_p = layer["d_sup_p"]
    kernel = functools.partial(_attn_agg_kernel, heads, layer["d_head"],
                               layer["concat"], to_tangent, c)
    return pl.pallas_call(
        kernel, grid=grid,
        out_shape=jax.ShapeDtypeStruct((n, d_out_p), jnp.float32),
        in_specs=[
            pl.BlockSpec((tm, heads), lambda i, k: (i, 0)),    # si (target scores)
            pl.BlockSpec((heads, tk), lambda i, k: (0, k)),    # sj^T (source scores)
            pl.BlockSpec((tk, d_p), lambda i, k: (k, 0)),      # x_tan source tile
            pl.BlockSpec((tm, tk), lambda i, k: (i, k)),       # int8 adjacency tile
        ],
        out_specs=pl.BlockSpec((tm, d_out_p), lambda i, k: (i, 0)),
        scratch_shapes=[
            pltpu.VMEM((heads, tm, 1), jnp.float32),           # running max
            pltpu.VMEM((heads, tm, 1), jnp.float32),           # running sum
            pltpu.VMEM((heads, tm, d_p), jnp.float32),         # unnormalised agg
        ],
        compiler_params=pltpu.CompilerParams(
            dimension_semantics=("parallel", "arbitrary"),
            vmem_limit_bytes=VMEM_LIMIT),
    )(si, sjt, x_tan, adj)


# ------------------------------ parameter glue ----------------------------------
def _glorot(key, shape):
    fan = shape[-2] + shape[-1]
    std = float(np.sqrt(6.0 / fan))
    return jax.random.uniform(key, shape, jnp.float32, -std, std)


def _pad2(a, rows, cols):
    a = np.asarray(a, np.float32)
    out = np.zeros((rows, cols), np.float32)
    out[: a.shape[0], : a.shape[1]] = a
    return jnp.asarray(out)


def make_hgat_params(key, d_in, out_features, heads, concat):
    d_lin = out_features * heads if concat else out_features
    d_head = d_lin // heads
    d_sup = d_lin if concat else d_head
    d_in_p = _round_up(d_in, LANE)
    d_lin_p = _round_up(d_lin, LANE)
    d_sup_p = _round_up(d_sup, LANE)
    k1, k2, k3, k4 = jax.random.split(key, 4)
    w = _pad2(_glorot(k1, (d_in, d_lin)), d_in_p, d_lin_p)           # x @ w (pre-T)
    b = _pad2(0.01 * jax.random.normal(k2, (1, d_lin), jnp.float32), 1, d_lin_p)
    att_i = np.asarray(_glorot(k3, (heads, d_head)))
    att_j = np.asarray(_glorot(k4, (heads, d_head)))
    # fused score matrix: x_tan @ att -> (N, 2H); cols [0,H)=att_i, [H,2H)=att_j
    att = np.zeros((d_lin_p, 2 * heads), np.float32)
    for h in range(heads):
        att[h * d_head:(h + 1) * d_head, h] = att_i[h]
        att[h * d_head:(h + 1) * d_head, heads + h] = att_j[h]
    return dict(w=w, b=b, att=jnp.asarray(att),
                heads=heads, concat=concat,
                d_head=d_head, d_sup=d_sup, d_sup_p=d_sup_p)


def build_dense_adj(edge_index, num_nodes, n_pad):
    # adj[i, j] = 1 iff edge (target i = edge_index[0], source j = edge_index[1]);
    # full diagonal forced to 1 (remove_self_loops + add_self_loops; padded target
    # rows also get a self-loop so their row max stays finite). Built ONCE.
    # TODO(synk): for very large N, replace the dense mask with a scalar-prefetched
    # neighbor/offset list (PrefetchScalarGridSpec) + manual DMA gather of sources.
    adj = np.zeros((n_pad, n_pad), np.int8)
    adj[np.asarray(edge_index[0]), np.asarray(edge_index[1])] = 1
    np.fill_diagonal(adj, 1)
    return jnp.asarray(adj)


def adihs_forward(params, adj, x_feat, num_nodes):
    l1, l2 = params["layer1"], params["layer2"]
    h = l1["heads"]
    # layer1: (linear -> initHyperX -> proj) fused into stage A, then attention.
    xt1, s1 = _run_tangent_scores(x_feat, l1, C, lin=params["lin"])
    h1 = _run_attn_agg(xt1, s1[:, :h], s1[:, h:].T, adj, l1, C, to_tangent=False)
    # the manifold.proj between layers is idempotent with the kernel's final proj.
    # layer2 (concat=False) with toTangentX fused into the epilogue.
    xt2, s2 = _run_tangent_scores(h1, l2, C)
    out = _run_attn_agg(xt2, s2[:, :h], s2[:, h:].T, adj, l2, C, to_tangent=True)
    return out[:num_nodes, : l2["d_sup"]]         # strip node + lane padding


# ---------------------------------- demo ----------------------------------------
if __name__ == "__main__":
    NUM_NODES, NFEAT, NOUT, NHID, HEADS = 8, 32, 16, 16, 2
    N_PAD = _round_up(NUM_NODES, NODE_PAD)

    root = jax.random.PRNGKey(0)
    kf, kl, kb, k1, k2 = jax.random.split(root, 5)

    params = {
        "lin": dict(
            w=_pad2(_glorot(kl, (NFEAT, NOUT)),
                    _round_up(NFEAT, LANE), _round_up(NOUT, LANE)),   # nn.Linear w.T
            b=_pad2(0.01 * jax.random.normal(kb, (1, NOUT), jnp.float32),
                    1, _round_up(NOUT, LANE)),
        ),
        "layer1": make_hgat_params(k1, NOUT, NHID, HEADS, concat=True),
        "layer2": make_hgat_params(k2, NHID * HEADS, NOUT, HEADS, concat=False),
    }

    # x plays the role of self.feat: glorot-initialised (num_nodes, nfeat),
    # zero-padded to (N_PAD, 128) so every pallas grid is tiled.
    x_feat = _pad2(_glorot(kf, (NUM_NODES, NFEAT)), N_PAD, _round_up(NFEAT, LANE))

    # deterministic small graph: bidirectional ring + two bidirectional chords
    src = np.arange(NUM_NODES)
    dst = (src + 1) % NUM_NODES
    chords = np.array([[0, 4], [2, 6]])
    edge_index = np.concatenate(
        [np.stack([src, dst], 0), np.stack([dst, src], 0),
         chords.T, chords[:, ::-1].T], axis=1).astype(np.int32)
    adj = build_dense_adj(edge_index, NUM_NODES, N_PAD)

    # TODO(synk): ddy_attention_layer (TemporalAttentionLayer) is built in __init__
    # but never used in forward(), so it is intentionally not implemented.

    out = adihs_forward(params, adj, x_feat, NUM_NODES)
    out = jax.block_until_ready(out)
    assert out.shape == (NUM_NODES, NOUT // HEADS)   # concat=False mean over heads
    assert bool(jnp.all(jnp.isfinite(out)))
    print("KERNEL_OK")
</pallas_src>

<mosaic_0001>
module attributes {stable_mosaic.version = 11 : i64} {
  func.func @_tangent_scores_kernel(%arg0: i32, %arg1: memref<128x128xf32, #tpu.memory_space<vmem>>, %arg2: memref<128x128xf32, #tpu.memory_space<vmem>>, %arg3: memref<1x128xf32, #tpu.memory_space<vmem>>, %arg4: memref<128x128xf32, #tpu.memory_space<vmem>>, %arg5: memref<1x128xf32, #tpu.memory_space<vmem>>, %arg6: memref<128x4xf32, #tpu.memory_space<vmem>>, %arg7: memref<128x128xf32, #tpu.memory_space<vmem>>, %arg8: memref<128x4xf32, #tpu.memory_space<vmem>>) attributes {dimension_semantics = [#tpu.dimension_semantics<parallel>], iteration_bounds = array<i64: 1>, scalar_prefetch = 0 : i64, scratch_operands = 0 : i64, tpu.core_type = #tpu.core_type<tc>, window_params = [{transform_indices = @transform_0, window_bounds = array<i64: 128, 128>}, {pipeline_mode = #tpu.pipeline_mode<synchronous>, transform_indices = @transform_1, window_bounds = array<i64: 128, 128>}, {pipeline_mode = #tpu.pipeline_mode<synchronous>, transform_indices = @transform_2, window_bounds = array<i64: 1, 128>}, {pipeline_mode = #tpu.pipeline_mode<synchronous>, transform_indices = @transform_3, window_bounds = array<i64: 128, 128>}, {pipeline_mode = #tpu.pipeline_mode<synchronous>, transform_indices = @transform_4, window_bounds = array<i64: 1, 128>}, {pipeline_mode = #tpu.pipeline_mode<synchronous>, transform_indices = @transform_5, window_bounds = array<i64: 128, 4>}, {transform_indices = @transform_6, window_bounds = array<i64: 128, 128>}, {transform_indices = @transform_7, window_bounds = array<i64: 128, 4>}]} {
    %c0 = arith.constant 0 : index
    %c0_0 = arith.constant 0 : index
    %0 = vector.load %arg1[%c0, %c0_0] : memref<128x128xf32, #tpu.memory_space<vmem>>, vector<128x128xf32>
    %c0_1 = arith.constant 0 : index
    %c0_2 = arith.constant 0 : index
    %1 = vector.load %arg2[%c0_1, %c0_2] : memref<128x128xf32, #tpu.memory_space<vmem>>, vector<128x128xf32>
    %cst = arith.constant dense<0.000000e+00> : vector<128x128xf32>
    %2 = tpu.matmul %0, %1, %cst {dimension_numbers = #tpu.dot_dimension_numbers<[1], [0], [0], [1], [0, 0, 1, 1], [], []>} : vector<128x128xf32>, vector<128x128xf32>, vector<128x128xf32> -> vector<128x128xf32>
    %c0_3 = arith.constant 0 : index
    %c0_4 = arith.constant 0 : index
    %3 = vector.load %arg3[%c0_3, %c0_4] : memref<1x128xf32, #tpu.memory_space<vmem>>, vector<1x128xf32>
    %4 = vector.broadcast %3 : vector<1x128xf32> to vector<128x128xf32>
    %5 = arith.addf %2, %4 : vector<128x128xf32>
    %cst_5 = arith.constant 1.000000e+00 : f32
    %6 = math.sqrt %cst_5 : f32
    %7 = arith.mulf %5, %5 : vector<128x128xf32>
    %cst_6 = arith.constant dense<0.000000e+00> : vector<128xf32>
    %8 = vector.multi_reduction <add>, %7, %cst_6 [1] : vector<128x128xf32> to vector<128xf32>
    %9 = vector.shape_cast %8 : vector<128xf32> to vector<128x1xf32>
    %10 = math.sqrt %9 : vector<128x1xf32>
    %cst_7 = arith.constant 1.000000e-15 : f32
    %11 = vector.broadcast %cst_7 : f32 to vector<128x1xf32>
    %12 = arith.maximumf %10, %11 : vector<128x1xf32>
    %13 = vector.broadcast %6 : f32 to vector<128x1xf32>
    %14 = arith.mulf %13, %12 : vector<128x1xf32>
    %15 = math.tanh %14 : vector<128x1xf32>
    %16 = vector.broadcast %15 : vector<128x1xf32> to vector<128x128xf32>
    %17 = arith.mulf %16, %5 : vector<128x128xf32>
    %18 = vector.broadcast %6 : f32 to vector<128x1xf32>
    %19 = arith.mulf %18, %12 : vector<128x1xf32>
    %20 = vector.broadcast %19 : vector<128x1xf32> to vector<128x128xf32>
    %21 = arith.divf %17, %20 : vector<128x128xf32>
    %cst_8 = arith.constant 1.000000e+00 : f32
    %22 = math.sqrt %cst_8 : f32
    %cst_9 = arith.constant 0.995999991 : f32
    %23 = arith.divf %cst_9, %22 : f32
    %24 = arith.mulf %21, %21 : vector<128x128xf32>
    %cst_10 = arith.constant dense<0.000000e+00> : vector<128xf32>
    %25 = vector.multi_reduction <add>, %24, %cst_10 [1] : vector<128x128xf32> to vector<128xf32>
    %26 = vector.shape_cast %25 : vector<128xf32> to vector<128x1xf32>
    %27 = math.sqrt %26 : vector<128x1xf32>
    %cst_11 = arith.constant 1.000000e-15 : f32
    %28 = vector.broadcast %cst_11 : f32 to vector<128x1xf32>
    %29 = arith.maximumf %27, %28 : vector<128x1xf32>
    %30 = vector.broadcast %23 : f32 to vector<128x1xf32>
    %31 = arith.cmpf ogt, %29, %30 : vector<128x1xf32>
    %32 = vector.broadcast %29 : vector<128x1xf32> to vector<128x128xf32>
    %33 = arith.divf %21, %32 : vector<128x128xf32>
    %34 = vector.broadcast %23 : f32 to vector<128x128xf32>
    %35 = arith.mulf %33, %34 : vector<128x128xf32>
    %36 = vector.shape_cast %31 : vector<128x1xi1> to vector<128x1xi1>
    %37 = vector.broadcast %36 : vector<128x1xi1> to vector<128x128xi1>
    %38 = arith.select %37, %35, %21 : vector<128x128xi1>, vector<128x128xf32>
    %c0_12 = arith.constant 0 : index
    %c0_13 = arith.constant 0 : index
    %39 = vector.load %arg4[%c0_12, %c0_13] : memref<128x128xf32, #tpu.memory_space<vmem>>, vector<128x128xf32>
    %cst_14 = arith.constant 1.000000e+00 : f32
    %40 = math.sqrt %cst_14 : f32
    %41 = arith.mulf %38, %38 : vector<128x128xf32>
    %cst_15 = arith.constant dense<0.000000e+00> : vector<128xf32>
    %42 = vector.multi_reduction <add>, %41, %cst_15 [1] : vector<128x128xf32> to vector<128xf32>
    %43 = vector.shape_cast %42 : vector<128xf32> to vector<128x1xf32>
    %44 = math.sqrt %43 : vector<128x1xf32>
    %cst_16 = arith.constant 1.000000e-15 : f32
    %45 = vector.broadcast %cst_16 : f32 to vector<128x1xf32>
    %46 = arith.maximumf %44, %45 : vector<128x1xf32>
    %cst_17 = arith.constant dense<0.000000e+00> : vector<128x128xf32>
    %47 = tpu.matmul %38, %39, %cst_17 {dimension_numbers = #tpu.dot_dimension_numbers<[1], [0], [0], [1], [0, 0, 1, 1], [], []>} : vector<128x128xf32>, vector<128x128xf32>, vector<128x128xf32> -> vector<128x128xf32>
    %48 = arith.mulf %47, %47 : vector<128x128xf32>
    %cst_18 = arith.constant dense<0.000000e+00> : vector<128xf32>
    %49 = vector.multi_reduction <add>, %48, %cst_18 [1] : vector<128x128xf32> to vector<128xf32>
    %50 = vector.shape_cast %49 : vector<128xf32> to vector<128x1xf32>
    %51 = math.sqrt %50 : vector<128x1xf32>
    %cst_19 = arith.constant 1.000000e-15 : f32
    %52 = vector.broadcast %cst_19 : f32 to vector<128x1xf32>
    %53 = arith.maximumf %51, %52 : vector<128x1xf32>
    %54 = arith.divf %53, %46 : vector<128x1xf32>
    %55 = vector.broadcast %40 : f32 to vector<128x1xf32>
    %56 = arith.mulf %55, %46 : vector<128x1xf32>
    %cst_20 = arith.constant -0.99999988 : f32
    %cst_21 = arith.constant 0.99999988 : f32
    %57 = vector.broadcast %cst_20 : f32 to vector<128x1xf32>
    %58 = arith.maximumf %57, %56 : vector<128x1xf32>
    %59 = vector.broadcast %cst_21 : f32 to vector<128x1xf32>
    %60 = arith.minimumf %59, %58 : vector<128x1xf32>
    %61 = math.log1p %60 : vector<128x1xf32>
    %cst_22 = arith.constant 1.000000e+00 : f32
    %62 = vector.broadcast %cst_22 : f32 to vector<128x1xf32>
    %63 = arith.subf %62, %60 : vector<128x1xf32>
    %64 = math.log %63 : vector<128x1xf32>
    %65 = arith.subf %61, %64 : vector<128x1xf32>
    %cst_23 = arith.constant 5.000000e-01 : f32
    %66 = vector.broadcast %cst_23 : f32 to vector<128x1xf32>
    %67 = arith.mulf %66, %65 : vector<128x1xf32>
    %68 = arith.mulf %54, %67 : vector<128x1xf32>
    %69 = math.tanh %68 : vector<128x1xf32>
    %70 = vector.broadcast %69 : vector<128x1xf32> to vector<128x128xf32>
    %71 = arith.mulf %70, %47 : vector<128x128xf32>
    %72 = vector.broadcast %40 : f32 to vector<128x1xf32>
    %73 = arith.mulf %53, %72 : vector<128x1xf32>
    %74 = vector.broadcast %73 : vector<128x1xf32> to vector<128x128xf32>
    %75 = arith.divf %71, %74 : vector<128x128xf32>
    %76 = math.absf %47 : vector<128x128xf32>
    %cst_24 = arith.constant dense<0.000000e+00> : vector<128xf32>
    %77 = vector.multi_reduction <add>, %76, %cst_24 [1] : vector<128x128xf32> to vector<128xf32>
    %78 = vector.shape_cast %77 : vector<128xf32> to vector<128x1xf32>
    %cst_25 = arith.constant 0.000000e+00 : f32
    %79 = vector.broadcast %cst_25 : f32 to vector<128x1xf32>
    %80 = arith.cmpf oeq, %78, %79 : vector<128x1xf32>
    %cst_26 = arith.constant 0.000000e+00 : f32
    %81 = vector.broadcast %cst_26 : f32 to vector<128x128xf32>
    %82 = vector.shape_cast %80 : vector<128x1xi1> to vector<128x1xi1>
    %83 = vector.broadcast %82 : vector<128x1xi1> to vector<128x128xi1>
    %84 = arith.select %83, %81, %75 : vector<128x128xi1>, vector<128x128xf32>
    %cst_27 = arith.constant 1.000000e+00 : f32
    %85 = math.sqrt %cst_27 : f32
    %cst_28 = arith.constant 0.995999991 : f32
    %86 = arith.divf %cst_28, %85 : f32
    %87 = arith.mulf %84, %84 : vector<128x128xf32>
    %cst_29 = arith.constant dense<0.000000e+00> : vector<128xf32>
    %88 = vector.multi_reduction <add>, %87, %cst_29 [1] : vector<128x128xf32> to vector<128xf32>
    %89 = vector.shape_cast %88 : vector<128xf32> to vector<128x1xf32>
    %90 = math.sqrt %89 : vector<128x1xf32>
    %cst_30 = arith.constant 1.000000e-15 : f32
    %91 = vector.broadcast %cst_30 : f32 to vector<128x1xf32>
    %92 = arith.maximumf %90, %91 : vector<128x1xf32>
    %93 = vector.broadcast %86 : f32 to vector<128x1xf32>
    %94 = arith.cmpf ogt, %92, %93 : vector<128x1xf32>
    %95 = vector.broadcast %92 : vector<128x1xf32> to vector<128x128xf32>
    %96 = arith.divf %84, %95 : vector<128x128xf32>
    %97 = vector.broadcast %86 : f32 to vector<128x128xf32>
    %98 = arith.mulf %96, %97 : vector<128x128xf32>
    %99 = vector.shape_cast %94 : vector<128x1xi1> to vector<128x1xi1>
    %100 = vector.broadcast %99 : vector<128x1xi1> to vector<128x128xi1>
    %101 = arith.select %100, %98, %84 : vector<128x128xi1>, vector<128x128xf32>
    %c0_31 = arith.constant 0 : index
    %c0_32 = arith.constant 0 : index
    %102 = vector.load %arg5[%c0_31, %c0_32] : memref<1x128xf32, #tpu.memory_space<vmem>>, vector<1x128xf32>
    %cst_33 = arith.constant 1.000000e+00 : f32
    %103 = math.sqrt %cst_33 : f32
    %104 = arith.mulf %102, %102 : vector<1x128xf32>
    %cst_34 = arith.constant dense<0.000000e+00> : vector<1xf32>
    %105 = vector.multi_reduction <add>, %104, %cst_34 [1] : vector<1x128xf32> to vector<1xf32>
    %106 = vector.shape_cast %105 : vector<1xf32> to vector<1x1xf32>
    %107 = math.sqrt %106 : vector<1x1xf32>
    %cst_35 = arith.constant 1.000000e-15 : f32
    %108 = vector.broadcast %cst_35 : f32 to vector<1x1xf32>
    %109 = arith.maximumf %107, %108 : vector<1x1xf32>
    %110 = vector.broadcast %103 : f32 to vector<1x1xf32>
    %111 = arith.mulf %110, %109 : vector<1x1xf32>
    %112 = math.tanh %111 : vector<1x1xf32>
    %113 = vector.broadcast %112 : vector<1x1xf32> to vector<1x128xf32>
    %114 = arith.mulf %113, %102 : vector<1x128xf32>
    %115 = vector.broadcast %103 : f32 to vector<1x1xf32>
    %116 = arith.mulf %115, %109 : vector<1x1xf32>
    %117 = vector.broadcast %116 : vector<1x1xf32> to vector<1x128xf32>
    %118 = arith.divf %114, %117 : vector<1x128xf32>
    %cst_36 = arith.constant 1.000000e+00 : f32
    %119 = math.sqrt %cst_36 : f32
    %cst_37 = arith.constant 0.995999991 : f32
    %120 = arith.divf %cst_37, %119 : f32
    %121 = arith.mulf %118, %118 : vector<1x128xf32>
    %cst_38 = arith.constant dense<0.000000e+00> : vector<1xf32>
    %122 = vector.multi_reduction <add>, %121, %cst_38 [1] : vector<1x128xf32> to vector<1xf32>
    %123 = vector.shape_cast %122 : vector<1xf32> to vector<1x1xf32>
    %124 = math.sqrt %123 : vector<1x1xf32>
    %cst_39 = arith.constant 1.000000e-15 : f32
    %125 = vector.broadcast %cst_39 : f32 to vector<1x1xf32>
    %126 = arith.maximumf %124, %125 : vector<1x1xf32>
    %127 = vector.broadcast %120 : f32 to vector<1x1xf32>
    %128 = arith.cmpf ogt, %126, %127 : vector<1x1xf32>
    %129 = vector.broadcast %126 : vector<1x1xf32> to vector<1x128xf32>
    %130 = arith.divf %118, %129 : vector<1x128xf32>
    %131 = vector.broadcast %120 : f32 to vector<1x128xf32>
    %132 = arith.mulf %130, %131 : vector<1x128xf32>
    %133 = vector.shape_cast %128 : vector<1x1xi1> to vector<1x1xi1>
    %134 = vector.broadcast %133 : vector<1x1xi1> to vector<1x128xi1>
    %135 = arith.select %134, %132, %118 : vector<1x128xi1>, vector<1x128xf32>
    %136 = arith.mulf %101, %101 : vector<128x128xf32>
    %cst_40 = arith.constant dense<0.000000e+00> : vector<128xf32>
    %137 = vector.multi_reduction <add>, %136, %cst_40 [1] : vector<128x128xf32> to vector<128xf32>
    %138 = vector.shape_cast %137 : vector<128xf32> to vector<128x1xf32>
    %139 = arith.mulf %135, %135 : vector<1x128xf32>
    %cst_41 = arith.constant dense<0.000000e+00> : vector<1xf32>
    %140 = vector.multi_reduction <add>, %139, %cst_41 [1] : vector<1x128xf32> to vector<1xf32>
    %141 = vector.shape_cast %140 : vector<1xf32> to vector<1x1xf32>
    %142 = vector.broadcast %135 : vector<1x128xf32> to vector<128x128xf32>
    %143 = arith.mulf %101, %142 : vector<128x128xf32>
    %cst_42 = arith.constant dense<0.000000e+00> : vector<128xf32>
    %144 = vector.multi_reduction <add>, %143, %cst_42 [1] : vector<128x128xf32> to vector<128xf32>
    %145 = vector.shape_cast %144 : vector<128xf32> to vector<128x1xf32>
    %cst_43 = arith.constant 2.000000e+00 : f32
    %146 = vector.broadcast %cst_43 : f32 to vector<128x1xf32>
    %147 = arith.mulf %146, %145 : vector<128x1xf32>
    %cst_44 = arith.constant 1.000000e+00 : f32
    %148 = vector.broadcast %cst_44 : f32 to vector<128x1xf32>
    %149 = arith.addf %148, %147 : vector<128x1xf32>
    %cst_45 = arith.constant 1.000000e+00 : f32
    %150 = vector.broadcast %cst_45 : f32 to vector<1x1xf32>
    %151 = arith.mulf %150, %141 : vector<1x1xf32>
    %152 = vector.broadcast %151 : vector<1x1xf32> to vector<128x1xf32>
    %153 = arith.addf %149, %152 : vector<128x1xf32>
    %154 = vector.broadcast %153 : vector<128x1xf32> to vector<128x128xf32>
    %155 = arith.mulf %154, %101 : vector<128x128xf32>
    %cst_46 = arith.constant 1.000000e+00 : f32
    %156 = vector.broadcast %cst_46 : f32 to vector<128x1xf32>
    %157 = arith.mulf %156, %138 : vector<128x1xf32>
    %cst_47 = arith.constant 1.000000e+00 : f32
    %158 = vector.broadcast %cst_47 : f32 to vector<128x1xf32>
    %159 = arith.subf %158, %157 : vector<128x1xf32>
    %160 = vector.broadcast %159 : vector<128x1xf32> to vector<128x128xf32>
    %161 = vector.broadcast %135 : vector<1x128xf32> to vector<128x128xf32>
    %162 = arith.mulf %160, %161 : vector<128x128xf32>
    %163 = arith.addf %155, %162 : vector<128x128xf32>
    %cst_48 = arith.constant 2.000000e+00 : f32
    %164 = vector.broadcast %cst_48 : f32 to vector<128x1xf32>
    %165 = arith.mulf %164, %145 : vector<128x1xf32>
    %cst_49 = arith.constant 1.000000e+00 : f32
    %166 = vector.broadcast %cst_49 : f32 to vector<128x1xf32>
    %167 = arith.addf %166, %165 : vector<128x1xf32>
    %cst_50 = arith.constant 1.000000e+00 : f32
    %168 = vector.broadcast %cst_50 : f32 to vector<128x1xf32>
    %169 = arith.mulf %168, %138 : vector<128x1xf32>
    %170 = vector.broadcast %141 : vector<1x1xf32> to vector<128x1xf32>
    %171 = arith.mulf %169, %170 : vector<128x1xf32>
    %172 = arith.addf %167, %171 : vector<128x1xf32>
    %cst_51 = arith.constant 1.000000e-15 : f32
    %173 = vector.broadcast %cst_51 : f32 to vector<128x1xf32>
    %174 = arith.maximumf %172, %173 : vector<128x1xf32>
    %175 = vector.broadcast %174 : vector<128x1xf32> to vector<128x128xf32>
    %176 = arith.divf %163, %175 : vector<128x128xf32>
    %cst_52 = arith.constant 1.000000e+00 : f32
    %177 = math.sqrt %cst_52 : f32
    %cst_53 = arith.constant 0.995999991 : f32
    %178 = arith.divf %cst_53, %177 : f32
    %179 = arith.mulf %176, %176 : vector<128x128xf32>
    %cst_54 = arith.constant dense<0.000000e+00> : vector<128xf32>
    %180 = vector.multi_reduction <add>, %179, %cst_54 [1] : vector<128x128xf32> to vector<128xf32>
    %181 = vector.shape_cast %180 : vector<128xf32> to vector<128x1xf32>
    %182 = math.sqrt %181 : vector<128x1xf32>
    %cst_55 = arith.constant 1.000000e-15 : f32
    %183 = vector.broadcast %cst_55 : f32 to vector<128x1xf32>
    %184 = arith.maximumf %182, %183 : vector<128x1xf32>
    %185 = vector.broadcast %178 : f32 to vector<128x1xf32>
    %186 = arith.cmpf ogt, %184, %185 : vector<128x1xf32>
    %187 = vector.broadcast %184 : vector<128x1xf32> to vector<128x128xf32>
    %188 = arith.divf %176, %187 : vector<128x128xf32>
    %189 = vector.broadcast %178 : f32 to vector<128x128xf32>
    %190 = arith.mulf %188, %189 : vector<128x128xf32>
    %191 = vector.shape_cast %186 : vector<128x1xi1> to vector<128x1xi1>
    %192 = vector.broadcast %191 : vector<128x1xi1> to vector<128x128xi1>
    %193 = arith.select %192, %190, %176 : vector<128x128xi1>, vector<128x128xf32>
    %cst_56 = arith.constant 1.000000e+00 : f32
    %194 = math.sqrt %cst_56 : f32
    %195 = arith.mulf %193, %193 : vector<128x128xf32>
    %cst_57 = arith.constant dense<0.000000e+00> : vector<128xf32>
    %196 = vector.multi_reduction <add>, %195, %cst_57 [1] : vector<128x128xf32> to vector<128xf32>
    %197 = vector.shape_cast %196 : vector<128xf32> to vector<128x1xf32>
    %198 = math.sqrt %197 : vector<128x1xf32>
    %cst_58 = arith.constant 1.000000e-15 : f32
    %199 = vector.broadcast %cst_58 : f32 to vector<128x1xf32>
    %200 = arith.maximumf %198, %199 : vector<128x1xf32>
    %201 = vector.broadcast %194 : f32 to vector<128x1xf32>
    %202 = arith.mulf %201, %200 : vector<128x1xf32>
    %cst_59 = arith.constant -0.99999988 : f32
    %cst_60 = arith.constant 0.99999988 : f32
    %203 = vector.broadcast %cst_59 : f32 to vector<128x1xf32>
    %204 = arith.maximumf %203, %202 : vector<128x1xf32>
    %205 = vector.broadcast %cst_60 : f32 to vector<128x1xf32>
    %206 = arith.minimumf %205, %204 : vector<128x1xf32>
    %207 = math.log1p %206 : vector<128x1xf32>
    %cst_61 = arith.constant 1.000000e+00 : f32
    %208 = vector.broadcast %cst_61 : f32 to vector<128x1xf32>
    %209 = arith.subf %208, %206 : vector<128x1xf32>
    %210 = math.log %209 : vector<128x1xf32>
    %211 = arith.subf %207, %210 : vector<128x1xf32>
    %cst_62 = arith.constant 5.000000e-01 : f32
    %212 = vector.broadcast %cst_62 : f32 to vector<128x1xf32>
    %213 = arith.mulf %212, %211 : vector<128x1xf32>
    %214 = vector.broadcast %213 : vector<128x1xf32> to vector<128x128xf32>
    %215 = arith.mulf %214, %193 : vector<128x128xf32>
    %216 = vector.broadcast %194 : f32 to vector<128x1xf32>
    %217 = arith.mulf %216, %200 : vector<128x1xf32>
    %218 = vector.broadcast %217 : vector<128x1xf32> to vector<128x128xf32>
    %219 = arith.divf %215, %218 : vector<128x128xf32>
    %c0_63 = arith.constant 0 : index
    %c0_64 = arith.constant 0 : index
    %220 = vector.load %arg7[%c0_63, %c0_64] : memref<128x128xf32, #tpu.memory_space<vmem>>, vector<128x128xf32>
    tpu.vector_store %arg7[%c0_63, %c0_64], %219 {strides = array<i32>} : memref<128x128xf32, #tpu.memory_space<vmem>>, vector<128x128xf32>,
    %c0_65 = arith.constant 0 : index
    %c0_66 = arith.constant 0 : index
    %221 = vector.load %arg6[%c0_65, %c0_66] : memref<128x4xf32, #tpu.memory_space<vmem>>, vector<128x4xf32>
    %cst_67 = arith.constant dense<0.000000e+00> : vector<128x4xf32>
    %222 = tpu.matmul %219, %221, %cst_67 {dimension_numbers = #tpu.dot_dimension_numbers<[1], [0], [0], [1], [0, 0, 1, 1], [], []>} : vector<128x128xf32>, vector<128x4xf32>, vector<128x4xf32> -> vector<128x4xf32>
    %c0_68 = arith.constant 0 : index
    %c0_69 = arith.constant 0 : index
    %223 = vector.load %arg8[%c0_68, %c0_69] : memref<128x4xf32, #tpu.memory_space<vmem>>, vector<128x4xf32>
    tpu.vector_store %arg8[%c0_68, %c0_69], %222 {strides = array<i32>} : memref<128x4xf32, #tpu.memory_space<vmem>>, vector<128x4xf32>,
    return
  }
  func.func @transform_0(%arg0: i32) -> (i32, i32) {
    %c0_i32 = arith.constant 0 : i32
    %c0_i32_0 = arith.constant 0 : i32
    return %arg0, %c0_i32 : i32, i32
  }
  func.func @transform_1(%arg0: i32) -> (i32, i32) {
    %c0_i32 = arith.constant 0 : i32
    %c0_i32_0 = arith.constant 0 : i32
    %c0_i32_1 = arith.constant 0 : i32
    return %c0_i32, %c0_i32_0 : i32, i32
  }
  func.func @transform_2(%arg0: i32) -> (i32, i32) {
    %c0_i32 = arith.constant 0 : i32
    %c0_i32_0 = arith.constant 0 : i32
    %c0_i32_1 = arith.constant 0 : i32
    return %c0_i32, %c0_i32_0 : i32, i32
  }
  func.func @transform_3(%arg0: i32) -> (i32, i32) {
    %c0_i32 = arith.constant 0 : i32
    %c0_i32_0 = arith.constant 0 : i32
    %c0_i32_1 = arith.constant 0 : i32
    return %c0_i32, %c0_i32_0 : i32, i32
  }
  func.func @transform_4(%arg0: i32) -> (i32, i32) {
    %c0_i32 = arith.constant 0 : i32
    %c0_i32_0 = arith.constant 0 : i32
    %c0_i32_1 = arith.constant 0 : i32
    return %c0_i32, %c0_i32_0 : i32, i32
  }
  func.func @transform_5(%arg0: i32) -> (i32, i32) {
    %c0_i32 = arith.constant 0 : i32
    %c0_i32_0 = arith.constant 0 : i32
    %c0_i32_1 = arith.constant 0 : i32
    return %c0_i32, %c0_i32_0 : i32, i32
  }
  func.func @transform_6(%arg0: i32) -> (i32, i32) {
    %c0_i32 = arith.constant 0 : i32
    %c0_i32_0 = arith.constant 0 : i32
    return %arg0, %c0_i32 : i32, i32
  }
  func.func @transform_7(%arg0: i32) -> (i32, i32) {
    %c0_i32 = arith.constant 0 : i32
    %c0_i32_0 = arith.constant 0 : i32
    return %arg0, %c0_i32 : i32, i32
  }
}

</mosaic_0001>

<llo_original>
// kernel: tpu_custom_call.1
$region0: #{tpu_custom_call.1}
  #allocation0 [shape = 'u32[]', space=smem, size = 0x4, offset = 0x4, fixed_abs, tag = 'smem constant byte address 0x4 - core index']
  #allocation1 [shape = 'u32[144,128]{1,0:T(1,128)}', space=vmem, size = 0x12000, scoped, tag = 'internal scratch']
  %s0 = inlined_call_operand.vmem [shape: f32[128,128], index: 0, kind: input, shape index: {}]
  %s1 = inlined_call_operand.hbm [shape: f32[128,128], index: 1, kind: input, shape index: {}]
  %s2 = inlined_call_operand.vmem [shape: f32[1,128], index: 2, kind: input, shape index: {}]
  %s3 = inlined_call_operand.hbm [shape: f32[128,128], index: 3, kind: input, shape index: {}]
  %s4 = inlined_call_operand.vmem [shape: f32[1,128], index: 4, kind: input, shape index: {}]
  %s5 = inlined_call_operand.vmem [shape: f32[128,4], index: 5, kind: input, shape index: {}]
  %s6 = inlined_call_operand.hbm [shape: f32[128,128], index: 6, kind: output, shape index: {0}]
  %s7 = inlined_call_operand.vmem [shape: f32[128,4], index: 7, kind: output, shape index: {1}]
  %8 = xla_tuple %s6, %s7
  %s9 = sld [smem:[#allocation0]]
  $region50: #{tpu_custom_call.1} parent=0
    _
  %s11 = ssub.s32 1, %s9
  %s12 = scalar_select 0, %s11, %s9
  $region1: #{tpu_custom_call.1} parent=0
    #allocation2 [shape = 'u8[65536]{0}', space=vmem, size = 0x10000, scoped, tag = 'input window, operand 1, single buffered']
    #allocation3 [shape = 's32[1]{0}', space=sflag, size = 0x4, scoped, tag = 'scoped memory for tpu_custom_call.1']
    #allocation4 [shape = 's32[1]{0}', space=sflag, size = 0x4, scoped, tag = 'scoped memory for tpu_custom_call.1']
    #allocation5 [shape = 'u8[65536]{0}', space=vmem, size = 0x10000, scoped, tag = 'input window, operand 3, single buffered']
    #allocation6 [shape = 's32[1]{0}', space=sflag, size = 0x4, scoped, tag = 'scoped memory for tpu_custom_call.1']
    #allocation7 [shape = 'u8[65536]{0}', space=vmem, size = 0x10000, scoped, tag = 'output window, operand 0, single buffered']
    %13 = vsyncpa [#allocation3], 0
    %14 = vsyncpa [#allocation6], 0
    %15 = vsyncpa [#allocation4], 0
    // Predicated region
    $region2: #{tpu_custom_call.1} parent=1 // pred_check
      _
    $region3: #{tpu_custom_call.1} parent=1 // pred_check_branch
      %17 = sbr.rel (0) target = $region5
    $region4: #{tpu_custom_call.1} parent=1 // pred_region
      _
    $region5: #{tpu_custom_call.1} parent=1 // pred_fallthru
      _
    // Predicated region
    $region6: #{tpu_custom_call.1} parent=1 // pred_check
      _
    $region7: #{tpu_custom_call.1} parent=1 // pred_check_branch
      %19 = sbr.rel (0) target = $region9
    $region8: #{tpu_custom_call.1} parent=1 // pred_region
      %s21 = ssub.s32 2048, 2048
      %22 = vsyncadd [#allocation3], %s21
      %s23 = sshll.u32 [#allocation2], 4
      %s24 = int_to_ptr.vmem [resolvable:$true] %s23
      %29 = dma.hbm_to_vmem [thread:$0]  %s1, 2048, %s24, [#allocation3], 128, 128, 8
    $region9: #{tpu_custom_call.1} parent=1 // pred_fallthru
      _
    // Predicated region
    $region10: #{tpu_custom_call.1} parent=1 // pred_check
      _
    $region11: #{tpu_custom_call.1} parent=1 // pred_check_branch
      %31 = sbr.rel (0) target = $region13
    $region12: #{tpu_custom_call.1} parent=1 // pred_region
      _
    $region13: #{tpu_custom_call.1} parent=1 // pred_fallthru
      _
    // Predicated region
    $region14: #{tpu_custom_call.1} parent=1 // pred_check
      _
    $region15: #{tpu_custom_call.1} parent=1 // pred_check_branch
      %33 = sbr.rel (0) target = $region17
    $region16: #{tpu_custom_call.1} parent=1 // pred_region
      %s35 = ssub.s32 2048, 2048
      %36 = vsyncadd [#allocation6], %s35
      %s37 = sshll.u32 [#allocation5], 4
      %s38 = int_to_ptr.vmem [resolvable:$true] %s37
      %43 = dma.hbm_to_vmem [thread:$0]  %s3, 2048, %s38, [#allocation6], 128, 128, 8
    $region17: #{tpu_custom_call.1} parent=1 // pred_fallthru
      _
    // Predicated region
    $region18: #{tpu_custom_call.1} parent=1 // pred_check
      _
    $region19: #{tpu_custom_call.1} parent=1 // pred_check_branch
      %45 = sbr.rel (0) target = $region21
    $region20: #{tpu_custom_call.1} parent=1 // pred_region
      _
    $region21: #{tpu_custom_call.1} parent=1 // pred_fallthru
      _
    // Predicated region
    $region22: #{tpu_custom_call.1} parent=1 // pred_check
      _
    $region23: #{tpu_custom_call.1} parent=1 // pred_check_branch
      %47 = sbr.rel (0) target = $region25
    $region24: #{tpu_custom_call.1} parent=1 // pred_region
      _
    $region25: #{tpu_custom_call.1} parent=1 // pred_fallthru
      _
    // Predicated region
    $region26: #{tpu_custom_call.1} parent=1 // pred_check
      _
    $region27: #{tpu_custom_call.1} parent=1 // pred_check_branch
      %49 = sbr.rel (0) target = $region29
    $region28: #{tpu_custom_call.1} parent=1 // pred_region
      %50 = dma.done [#allocation3], 2048
    $region29: #{tpu_custom_call.1} parent=1 // pred_fallthru
      _
    // Predicated region
    $region30: #{tpu_custom_call.1} parent=1 // pred_check
      _
    $region31: #{tpu_custom_call.1} parent=1 // pred_check_branch
      %52 = sbr.rel (0) target = $region33
    $region32: #{tpu_custom_call.1} parent=1 // pred_region
      %53 = dma.done [#allocation6], 2048
    $region33: #{tpu_custom_call.1} parent=1 // pred_fallthru
      _
    %v54 = vld [vmem:[%s0] sm:$0xff]
    %v55 = vld [vmem:[%s0 + $0x8] sm:$0xff]
    %v56 = vld [vmem:[%s0 + $0x10] sm:$0xff]
    %v57 = vld [vmem:[%s0 + $0x18] sm:$0xff]
    %v58 = vld [vmem:[%s0 + $0x20] sm:$0xff]
    %v59 = vld [vmem:[%s0 + $0x28] sm:$0xff]
    %v60 = vld [vmem:[%s0 + $0x30] sm:$0xff]
    %v61 = vld [vmem:[%s0 + $0x38] sm:$0xff]
    %v62 = vld [vmem:[%s0 + $0x40] sm:$0xff]
    %v63 = vld [vmem:[%s0 + $0x48] sm:$0xff]
    %v64 = vld [vmem:[%s0 + $0x50] sm:$0xff]
    %v65 = vld [vmem:[%s0 + $0x58] sm:$0xff]
    %v66 = vld [vmem:[%s0 + $0x60] sm:$0xff]
    %v67 = vld [vmem:[%s0 + $0x68] sm:$0xff]
    %v68 = vld [vmem:[%s0 + $0x70] sm:$0xff]
    %v69 = vld [vmem:[%s0 + $0x78] sm:$0xff]
    %v70 = vld [vmem:[#allocation2] sm:$0xff]
    %v71 = vld [vmem:[#allocation2 + $0x8] sm:$0xff]
    %v72 = vld [vmem:[#allocation2 + $0x10] sm:$0xff]
    %v73 = vld [vmem:[#allocation2 + $0x18] sm:$0xff]
    %v74 = vld [vmem:[#allocation2 + $0x20] sm:$0xff]
    %v75 = vld [vmem:[#allocation2 + $0x28] sm:$0xff]
    %v76 = vld [vmem:[#allocation2 + $0x30] sm:$0xff]
    %v77 = vld [vmem:[#allocation2 + $0x38] sm:$0xff]
    %v78 = vld [vmem:[#allocation2 + $0x40] sm:$0xff]
    %v79 = vld [vmem:[#allocation2 + $0x48] sm:$0xff]
    %v80 = vld [vmem:[#allocation2 + $0x50] sm:$0xff]
    %v81 = vld [vmem:[#allocation2 + $0x58] sm:$0xff]
    %v82 = vld [vmem:[#allocation2 + $0x60] sm:$0xff]
    %v83 = vld [vmem:[#allocation2 + $0x68] sm:$0xff]
    %v84 = vld [vmem:[#allocation2 + $0x70] sm:$0xff]
    %v85 = vld [vmem:[#allocation2 + $0x78] sm:$0xff]
    %v86 = vld [vmem:[%s2] sm:$0x1]
    %v88 = vlaneseq
    %v89 = vshrl.u32 %v88, 7
    %v90 = vsub.s32 0, %v89
    %v91 = vrot.slane %v86, %v90
    %93 = vmatprep.subr.mxu0 0.0
    %94 = vmatpush1.msra.mxu0 %v70
    %95 = vmatprep.subr.mxu0 0.0
    %96 = vmatpush1.msra.mxu0 %v71
    %97 = vmatprep.subr.mxu0 0.0
    %98 = vmatpush1.msra.mxu0 %v72
    %99 = vmatprep.subr.mxu0 0.0
    %100 = vmatpush1.msra.mxu0 %v73
    %101 = vmatprep.subr.mxu0 0.0
    %102 = vmatpush1.msra.mxu0 %v74
    %103 = vmatprep.subr.mxu0 0.0
    %104 = vmatpush1.msra.mxu0 %v75
    %105 = vmatprep.subr.mxu0 0.0
    %106 = vmatpush1.msra.mxu0 %v76
    %107 = vmatprep.subr.mxu0 0.0
    %108 = vmatpush1.msra.mxu0 %v77
    %109 = vmatprep.subr.mxu0 0.0
    %110 = vmatpush1.msra.mxu0 %v78
    %111 = vmatprep.subr.mxu0 0.0
    %112 = vmatpush1.msra.mxu0 %v79
    %113 = vmatprep.subr.mxu0 0.0
    %114 = vmatpush1.msra.mxu0 %v80
    %115 = vmatprep.subr.mxu0 0.0
    %116 = vmatpush1.msra.mxu0 %v81
    %117 = vmatprep.subr.mxu0 0.0
    %118 = vmatpush1.msra.mxu0 %v82
    %119 = vmatprep.subr.mxu0 0.0
    %120 = vmatpush1.msra.mxu0 %v83
    %121 = vmatprep.subr.mxu0 0.0
    %122 = vmatpush1.msra.mxu0 %v84
    %123 = vmatprep.subr.mxu0 0.0
    %124 = vmatpush1.msra.mxu0 %v85
    %125 = vmatprep.subr.mxu0 0.0
    %126 = vmatpush1.msra.mxu0 0.0
    %127 = vmatprep.subr.mxu0 0.0
    %128 = vmatpush1.msra.mxu0 0.0
    %129 = vmatprep.subr.mxu0 0.0
    %130 = vmatpush1.msra.mxu0 0.0
    %131 = vmatprep.subr.mxu0 0.0
    %132 = vmatpush1.msra.mxu0 0.0
    %133 = vmatprep.subr.mxu0 0.0
    %134 = vmatpush1.msra.mxu0 0.0
    %135 = vmatprep.subr.mxu0 0.0
    %136 = vmatpush1.msra.mxu0 0.0
    %137 = vmatprep.subr.mxu0 0.0
    %138 = vmatpush1.msra.mxu0 0.0
    %139 = vmatprep.subr.mxu0 0.0
    %140 = vmatpush1.msra.mxu0 0.0
    %141 = vmatprep.subr.mxu0 0.0
    %142 = vmatpush1.msra.mxu0 0.0
    %143 = vmatprep.subr.mxu0 0.0
    %144 = vmatpush1.msra.mxu0 0.0
    %145 = vmatprep.subr.mxu0 0.0
    %146 = vmatpush1.msra.mxu0 0.0
    %147 = vmatprep.subr.mxu0 0.0
    %148 = vmatpush1.msra.mxu0 0.0
    %149 = vmatprep.subr.mxu0 0.0
    %150 = vmatpush1.msra.mxu0 0.0
    %151 = vmatprep.subr.mxu0 0.0
    %152 = vmatpush1.msra.mxu0 0.0
    %153 = vmatprep.subr.mxu0 0.0
    %154 = vmatpush1.msra.mxu0 0.0
    %155 = vmatprep.subr.mxu0 0.0
    %156 = vmatpush1.msra.mxu0 0.0
    %157 = vmatprep.mubr.f32.mxu0 0.0
    %158 = vmatmul.mubr.f32.gmra.mrb[0].mxu0 %v54
    %v159 = vpop.f32.mrb[0].mxu0
    %v160 = vadd.f32 %v91, %v159
    %v161 = vpop.f32.mrb[0].mxu0
    %162 = vmatprep.mubr.f32.mxu0 0.0
    %163 = vmatmul.mubr.f32.gmra.mrb[0].mxu0 %v55
    %v164 = vpop.f32.mrb[0].mxu0
    %v165 = vadd.f32 %v91, %v164
    %v166 = vpop.f32.mrb[0].mxu0
    %167 = vmatprep.mubr.f32.mxu0 0.0
    %168 = vmatmul.mubr.f32.gmra.mrb[0].mxu0 %v56
    %v169 = vpop.f32.mrb[0].mxu0
    %v170 = vadd.f32 %v91, %v169
    %v171 = vpop.f32.mrb[0].mxu0
    %172 = vmatprep.mubr.f32.mxu0 0.0
    %173 = vmatmul.mubr.f32.gmra.mrb[0].mxu0 %v57
    %v174 = vpop.f32.mrb[0].mxu0
    %v175 = vadd.f32 %v91, %v174
    %v176 = vpop.f32.mrb[0].mxu0
    %177 = vmatprep.mubr.f32.mxu0 0.0
    %178 = vmatmul.mubr.f32.gmra.mrb[0].mxu0 %v58
    %v179 = vpop.f32.mrb[0].mxu0
    %v180 = vadd.f32 %v91, %v179
    %v181 = vpop.f32.mrb[0].mxu0
    %182 = vmatprep.mubr.f32.mxu0 0.0
    %183 = vmatmul.mubr.f32.gmra.mrb[0].mxu0 %v59
    %v184 = vpop.f32.mrb[0].mxu0
    %v185 = vadd.f32 %v91, %v184
    %v186 = vpop.f32.mrb[0].mxu0
    %187 = vmatprep.mubr.f32.mxu0 0.0
    %188 = vmatmul.mubr.f32.gmra.mrb[0].mxu0 %v60
    %v189 = vpop.f32.mrb[0].mxu0
    %v190 = vadd.f32 %v91, %v189
    %v191 = vpop.f32.mrb[0].mxu0
    %192 = vmatprep.mubr.f32.mxu0 0.0
    %193 = vmatmul.mubr.f32.gmra.mrb[0].mxu0 %v61
    %v194 = vpop.f32.mrb[0].mxu0
    %v195 = vadd.f32 %v91, %v194
    %v196 = vpop.f32.mrb[0].mxu0
    %197 = vmatprep.mubr.f32.mxu0 0.0
    %198 = vmatmul.mubr.f32.gmra.mrb[0].mxu0 %v62
    %v199 = vpop.f32.mrb[0].mxu0
    %v200 = vadd.f32 %v91, %v199
    %v201 = vpop.f32.mrb[0].mxu0
    %202 = vmatprep.mubr.f32.mxu0 0.0
    %203 = vmatmul.mubr.f32.gmra.mrb[0].mxu0 %v63
    %v204 = vpop.f32.mrb[0].mxu0
    %v205 = vadd.f32 %v91, %v204
    %v206 = vpop.f32.mrb[0].mxu0
    %207 = vmatprep.mubr.f32.mxu0 0.0
    %208 = vmatmul.mubr.f32.gmra.mrb[0].mxu0 %v64
    %v209 = vpop.f32.mrb[0].mxu0
    %v210 = vadd.f32 %v91, %v209
    %v211 = vpop.f32.mrb[0].mxu0
    %212 = vmatprep.mubr.f32.mxu0 0.0
    %213 = vmatmul.mubr.f32.gmra.mrb[0].mxu0 %v65
    %v214 = vpop.f32.mrb[0].mxu0
    %v215 = vadd.f32 %v91, %v214
    %v216 = vpop.f32.mrb[0].mxu0
    %217 = vmatprep.mubr.f32.mxu0 0.0
    %218 = vmatmul.mubr.f32.gmra.mrb[0].mxu0 %v66
    %v219 = vpop.f32.mrb[0].mxu0
    %v220 = vadd.f32 %v91, %v219
    %v221 = vpop.f32.mrb[0].mxu0
    %222 = vmatprep.mubr.f32.mxu0 0.0
    %223 = vmatmul.mubr.f32.gmra.mrb[0].mxu0 %v67
    %v224 = vpop.f32.mrb[0].mxu0
    %v225 = vadd.f32 %v91, %v224
    %v226 = vpop.f32.mrb[0].mxu0
    %227 = vmatprep.mubr.f32.mxu0 0.0
    %228 = vmatmul.mubr.f32.gmra.mrb[0].mxu0 %v68
    %v229 = vpop.f32.mrb[0].mxu0
    %v230 = vadd.f32 %v91, %v229
    %v231 = vpop.f32.mrb[0].mxu0
    %232 = vmatprep.mubr.f32.mxu0 0.0
    %233 = vmatmul.mubr.f32.gmra.mrb[0].mxu0 %v69
    %v234 = vpop.f32.mrb[0].mxu0
    %v235 = vadd.f32 %v91, %v234
    %v236 = vpop.f32.mrb[0].mxu0
    %237 = vdwg.mxu0
    %v238 = vmul.f32 %v160, %v160
    %v239 = vmul.f32 %v165, %v165
    %v240 = vmul.f32 %v170, %v170
    %v241 = vmul.f32 %v175, %v175
    %v242 = vmul.f32 %v180, %v180
    %v243 = vmul.f32 %v185, %v185
    %v244 = vmul.f32 %v190, %v190
    %v245 = vmul.f32 %v195, %v195
    %v246 = vmul.f32 %v200, %v200
    %v247 = vmul.f32 %v205, %v205
    %v248 = vmul.f32 %v210, %v210
    %v249 = vmul.f32 %v215, %v215
    %v250 = vmul.f32 %v220, %v220
    %v251 = vmul.f32 %v225, %v225
    %v252 = vmul.f32 %v230, %v230
    %v253 = vmul.f32 %v235, %v235
    %254 = vadd.xlane.f32.xlu0 %v238
    %v255 = vpop.xlane.xlu0 %254
    %256 = vadd.xlane.f32.xlu0 %v239
    %v257 = vpop.xlane.xlu0 %256
    %258 = vadd.xlane.f32.xlu0 %v240
    %v259 = vpop.xlane.xlu0 %258
    %260 = vadd.xlane.f32.xlu0 %v241
    %v261 = vpop.xlane.xlu0 %260
    %262 = vadd.xlane.f32.xlu0 %v242
    %v263 = vpop.xlane.xlu0 %262
    %264 = vadd.xlane.f32.xlu0 %v243
    %v265 = vpop.xlane.xlu0 %264
    %266 = vadd.xlane.f32.xlu0 %v244
    %v267 = vpop.xlane.xlu0 %266
    %268 = vadd.xlane.f32.xlu0 %v245
    %v269 = vpop.xlane.xlu0 %268
    %270 = vadd.xlane.f32.xlu0 %v246
    %v271 = vpop.xlane.xlu0 %270
    %272 = vadd.xlane.f32.xlu0 %v247
    %v273 = vpop.xlane.xlu0 %272
    %274 = vadd.xlane.f32.xlu0 %v248
    %v275 = vpop.xlane.xlu0 %274
    %276 = vadd.xlane.f32.xlu0 %v249
    %v277 = vpop.xlane.xlu0 %276
    %278 = vadd.xlane.f32.xlu0 %v250
    %v279 = vpop.xlane.xlu0 %278
    %280 = vadd.xlane.f32.xlu0 %v251
    %v281 = vpop.xlane.xlu0 %280
    %282 = vadd.xlane.f32.xlu0 %v252
    %v283 = vpop.xlane.xlu0 %282
    %284 = vadd.xlane.f32.xlu0 %v253
    %v285 = vpop.xlane.xlu0 %284
    %v286 = vrsqrt.pop %v255
    %v287 = vmul.f32 %v255, %v286
    %vm288 = vcmp.eq.f32.partialorder %v255, inf
    %v289 = vsel %vm288, %v255, %v287
    %vm290 = vcmp.eq.f32.partialorder %v255, 0.0
    %v291 = vand.u32 %v255, 2147483648
    %v292 = vsel %vm290, %v291, %v289
    %v293 = vrsqrt.pop %v257
    %v294 = vmul.f32 %v257, %v293
    %vm295 = vcmp.eq.f32.partialorder %v257, inf
    %v296 = vsel %vm295, %v257, %v294
    %vm297 = vcmp.eq.f32.partialorder %v257, 0.0
    %v298 = vand.u32 %v257, 2147483648
    %v299 = vsel %vm297, %v298, %v296
    %v300 = vrsqrt.pop %v259
    %v301 = vmul.f32 %v259, %v300
    %vm302 = vcmp.eq.f32.partialorder %v259, inf
    %v303 = vsel %vm302, %v259, %v301
    %vm304 = vcmp.eq.f32.partialorder %v259, 0.0
    %v305 = vand.u32 %v259, 2147483648
    %v306 = vsel %vm304, %v305, %v303
    %v307 = vrsqrt.pop %v261
    %v308 = vmul.f32 %v261, %v307
    %vm309 = vcmp.eq.f32.partialorder %v261, inf
    %v310 = vsel %vm309, %v261, %v308
    %vm311 = vcmp.eq.f32.partialorder %v261, 0.0
    %v312 = vand.u32 %v261, 2147483648
    %v313 = vsel %vm311, %v312, %v310
    %v314 = vrsqrt.pop %v263
    %v315 = vmul.f32 %v263, %v314
    %vm316 = vcmp.eq.f32.partialorder %v263, inf
    %v317 = vsel %vm316, %v263, %v315
    %vm318 = vcmp.eq.f32.partialorder %v263, 0.0
    %v319 = vand.u32 %v263, 2147483648
    %v320 = vsel %vm318, %v319, %v317
    %v321 = vrsqrt.pop %v265
    %v322 = vmul.f32 %v265, %v321
    %vm323 = vcmp.eq.f32.partialorder %v265, inf
    %v324 = vsel %vm323, %v265, %v322
    %vm325 = vcmp.eq.f32.partialorder %v265, 0.0
    %v326 = vand.u32 %v265, 2147483648
    %v327 = vsel %vm325, %v326, %v324
    %v328 = vrsqrt.pop %v267
    %v329 = vmul.f32 %v267, %v328
    %vm330 = vcmp.eq.f32.partialorder %v267, inf
    %v331 = vsel %vm330, %v267, %v329
    %vm332 = vcmp.eq.f32.partialorder %v267, 0.0
    %v333 = vand.u32 %v267, 2147483648
    %v334 = vsel %vm332, %v333, %v331
    %v335 = vrsqrt.pop %v269
    %v336 = vmul.f32 %v269, %v335
    %vm337 = vcmp.eq.f32.partialorder %v269, inf
    %v338 = vsel %vm337, %v269, %v336
    %vm339 = vcmp.eq.f32.partialorder %v269, 0.0
    %v340 = vand.u32 %v269, 2147483648
    %v341 = vsel %vm339, %v340, %v338
    %v342 = vrsqrt.pop %v271
    %v343 = vmul.f32 %v271, %v342
    %vm344 = vcmp.eq.f32.partialorder %v271, inf
    %v345 = vsel %vm344, %v271, %v343
    %vm346 = vcmp.eq.f32.partialorder %v271, 0.0
    %v347 = vand.u32 %v271, 2147483648
    %v348 = vsel %vm346, %v347, %v345
    %v349 = vrsqrt.pop %v273
    %v350 = vmul.f32 %v273, %v349
    %vm351 = vcmp.eq.f32.partialorder %v273, inf
    %v352 = vsel %vm351, %v273, %v350
    %vm353 = vcmp.eq.f32.partialorder %v273, 0.0
    %v354 = vand.u32 %v273, 2147483648
    %v355 = vsel %vm353, %v354, %v352
    %v356 = vrsqrt.pop %v275
    %v357 = vmul.f32 %v275, %v356
    %vm358 = vcmp.eq.f32.partialorder %v275, inf
    %v359 = vsel %vm358, %v275, %v357
    %vm360 = vcmp.eq.f32.partialorder %v275, 0.0
    %v361 = vand.u32 %v275, 2147483648
    %v362 = vsel %vm360, %v361, %v359
    %v363 = vrsqrt.pop %v277
    %v364 = vmul.f32 %v277, %v363
    %vm365 = vcmp.eq.f32.partialorder %v277, inf
    %v366 = vsel %vm365, %v277, %v364
    %vm367 = vcmp.eq.f32.partialorder %v277, 0.0
    %v368 = vand.u32 %v277, 2147483648
    %v369 = vsel %vm367, %v368, %v366
    %v370 = vrsqrt.pop %v279
    %v371 = vmul.f32 %v279, %v370
    %vm372 = vcmp.eq.f32.partialorder %v279, inf
    %v373 = vsel %vm372, %v279, %v371
    %vm374 = vcmp.eq.f32.partialorder %v279, 0.0
    %v375 = vand.u32 %v279, 2147483648
    %v376 = vsel %vm374, %v375, %v373
    %v377 = vrsqrt.pop %v281
    %v378 = vmul.f32 %v281, %v377
    %vm379 = vcmp.eq.f32.partialorder %v281, inf
    %v380 = vsel %vm379, %v281, %v378
    %vm381 = vcmp.eq.f32.partialorder %v281, 0.0
    %v382 = vand.u32 %v281, 2147483648
    %v383 = vsel %vm381, %v382, %v380
    %v384 = vrsqrt.pop %v283
    %v385 = vmul.f32 %v283, %v384
    %vm386 = vcmp.eq.f32.partialorder %v283, inf
    %v387 = vsel %vm386, %v283, %v385
    %vm388 = vcmp.eq.f32.partialorder %v283, 0.0
    %v389 = vand.u32 %v283, 2147483648
    %v390 = vsel %vm388, %v389, %v387
    %v391 = vrsqrt.pop %v285
    %v392 = vmul.f32 %v285, %v391
    %vm393 = vcmp.eq.f32.partialorder %v285, inf
    %v394 = vsel %vm393, %v285, %v392
    %vm395 = vcmp.eq.f32.partialorder %v285, 0.0
    %v396 = vand.u32 %v285, 2147483648
    %v397 = vsel %vm395, %v396, %v394
    %v398 = vmax.f32 %v292, 1e-15
    %v399 = vmax.f32 %v299, 1e-15
    %v400 = vmax.f32 %v306, 1e-15
    %v401 = vmax.f32 %v313, 1e-15
    %v402 = vmax.f32 %v320, 1e-15
    %v403 = vmax.f32 %v327, 1e-15
    %v404 = vmax.f32 %v334, 1e-15
    %v405 = vmax.f32 %v341, 1e-15
    %v406 = vmax.f32 %v348, 1e-15
    %v407 = vmax.f32 %v355, 1e-15
    %v408 = vmax.f32 %v362, 1e-15
    %v409 = vmax.f32 %v369, 1e-15
    %v410 = vmax.f32 %v376, 1e-15
    %v411 = vmax.f32 %v383, 1e-15
    %v412 = vmax.f32 %v390, 1e-15
    %v413 = vmax.f32 %v397, 1e-15
    %v414 = vtanh.pop %v398
    %v415 = vtanh.pop %v399
    %v416 = vtanh.pop %v400
    %v417 = vtanh.pop %v401
    %v418 = vtanh.pop %v402
    %v419 = vtanh.pop %v403
    %v420 = vtanh.pop %v404
    %v421 = vtanh.pop %v405
    %v422 = vtanh.pop %v406
    %v423 = vtanh.pop %v407
    %v424 = vtanh.pop %v408
    %v425 = vtanh.pop %v409
    %v426 = vtanh.pop %v410
    %v427 = vtanh.pop %v411
    %v428 = vtanh.pop %v412
    %v429 = vtanh.pop %v413
    %v430 = vmul.f32 %v414, %v160
    %v431 = vmul.f32 %v415, %v165
    %v432 = vmul.f32 %v416, %v170
    %v433 = vmul.f32 %v417, %v175
    %v434 = vmul.f32 %v418, %v180
    %v435 = vmul.f32 %v419, %v185
    %v436 = vmul.f32 %v420, %v190
    %v437 = vmul.f32 %v421, %v195
    %v438 = vmul.f32 %v422, %v200
    %v439 = vmul.f32 %v423, %v205
    %v440 = vmul.f32 %v424, %v210
    %v441 = vmul.f32 %v425, %v215
    %v442 = vmul.f32 %v426, %v220
    %v443 = vmul.f32 %v427, %v225
    %v444 = vmul.f32 %v428, %v230
    %v445 = vmul.f32 %v429, %v235
    %v446 = vrcp.pop %v398
    %v447 = vmul.f32 %v430, %v446
    %v448 = vrcp.pop %v399
    %v449 = vmul.f32 %v431, %v448
    %v450 = vrcp.pop %v400
    %v451 = vmul.f32 %v432, %v450
    %v452 = vrcp.pop %v401
    %v453 = vmul.f32 %v433, %v452
    %v454 = vrcp.pop %v402
    %v455 = vmul.f32 %v434, %v454
    %v456 = vrcp.pop %v403
    %v457 = vmul.f32 %v435, %v456
    %v458 = vrcp.pop %v404
    %v459 = vmul.f32 %v436, %v458
    %v460 = vrcp.pop %v405
    %v461 = vmul.f32 %v437, %v460
    %v462 = vrcp.pop %v406
    %v463 = vmul.f32 %v438, %v462
    %v464 = vrcp.pop %v407
    %v465 = vmul.f32 %v439, %v464
    %v466 = vrcp.pop %v408
    %v467 = vmul.f32 %v440, %v466
    %v468 = vrcp.pop %v409
    %v469 = vmul.f32 %v441, %v468
    %v470 = vrcp.pop %v410
    %v471 = vmul.f32 %v442, %v470
    %v472 = vrcp.pop %v411
    %v473 = vmul.f32 %v443, %v472
    %v474 = vrcp.pop %v412
    %v475 = vmul.f32 %v444, %v474
    %v476 = vrcp.pop %v413
    %v477 = vmul.f32 %v445, %v476
    %v478 = vmul.f32 %v447, %v447
    %v479 = vmul.f32 %v449, %v449
    %v480 = vmul.f32 %v451, %v451
    %v481 = vmul.f32 %v453, %v453
    %v482 = vmul.f32 %v455, %v455
    %v483 = vmul.f32 %v457, %v457
    %v484 = vmul.f32 %v459, %v459
    %v485 = vmul.f32 %v461, %v461
    %v486 = vmul.f32 %v463, %v463
    %v487 = vmul.f32 %v465, %v465
    %v488 = vmul.f32 %v467, %v467
    %v489 = vmul.f32 %v469, %v469
    %v490 = vmul.f32 %v471, %v471
    %v491 = vmul.f32 %v473, %v473
    %v492 = vmul.f32 %v475, %v475
    %v493 = vmul.f32 %v477, %v477
    %494 = vadd.xlane.f32.xlu0 %v478
    %v495 = vpop.xlane.xlu0 %494
    %496 = vadd.xlane.f32.xlu0 %v479
    %v497 = vpop.xlane.xlu0 %496
    %498 = vadd.xlane.f32.xlu0 %v480
    %v499 = vpop.xlane.xlu0 %498
    %500 = vadd.xlane.f32.xlu0 %v481
    %v501 = vpop.xlane.xlu0 %500
    %502 = vadd.xlane.f32.xlu0 %v482
    %v503 = vpop.xlane.xlu0 %502
    %504 = vadd.xlane.f32.xlu0 %v483
    %v505 = vpop.xlane.xlu0 %504
    %506 = vadd.xlane.f32.xlu0 %v484
    %v507 = vpop.xlane.xlu0 %506
    %508 = vadd.xlane.f32.xlu0 %v485
    %v509 = vpop.xlane.xlu0 %508
    %510 = vadd.xlane.f32.xlu0 %v486
    %v511 = vpop.xlane.xlu0 %510
    %512 = vadd.xlane.f32.xlu0 %v487
    %v513 = vpop.xlane.xlu0 %512
    %514 = vadd.xlane.f32.xlu0 %v488
    %v515 = vpop.xlane.xlu0 %514
    %516 = vadd.xlane.f32.xlu0 %v489
    %v517 = vpop.xlane.xlu0 %516
    %518 = vadd.xlane.f32.xlu0 %v490
    %v519 = vpop.xlane.xlu0 %518
    %520 = vadd.xlane.f32.xlu0 %v491
    %v521 = vpop.xlane.xlu0 %520
    %522 = vadd.xlane.f32.xlu0 %v492
    %v523 = vpop.xlane.xlu0 %522
    %524 = vadd.xlane.f32.xlu0 %v493
    %v525 = vpop.xlane.xlu0 %524
    %v526 = vrsqrt.pop %v495
    %v527 = vmul.f32 %v495, %v526
    %vm528 = vcmp.eq.f32.partialorder %v495, inf
    %v529 = vsel %vm528, %v495, %v527
    %vm530 = vcmp.eq.f32.partialorder %v495, 0.0
    %v531 = vand.u32 %v495, 2147483648
    %v532 = vsel %vm530, %v531, %v529
    %v533 = vrsqrt.pop %v497
    %v534 = vmul.f32 %v497, %v533
    %vm535 = vcmp.eq.f32.partialorder %v497, inf
    %v536 = vsel %vm535, %v497, %v534
    %vm537 = vcmp.eq.f32.partialorder %v497, 0.0
    %v538 = vand.u32 %v497, 2147483648
    %v539 = vsel %vm537, %v538, %v536
    %v540 = vrsqrt.pop %v499
    %v541 = vmul.f32 %v499, %v540
    %vm542 = vcmp.eq.f32.partialorder %v499, inf
    %v543 = vsel %vm542, %v499, %v541
    %vm544 = vcmp.eq.f32.partialorder %v499, 0.0
    %v545 = vand.u32 %v499, 2147483648
    %v546 = vsel %vm544, %v545, %v543
    %v547 = vrsqrt.pop %v501
    %v548 = vmul.f32 %v501, %v547
    %vm549 = vcmp.eq.f32.partialorder %v501, inf
    %v550 = vsel %vm549, %v501, %v548
    %vm551 = vcmp.eq.f32.partialorder %v501, 0.0
    %v552 = vand.u32 %v501, 2147483648
    %v553 = vsel %vm551, %v552, %v550
    %v554 = vrsqrt.pop %v503
    %v555 = vmul.f32 %v503, %v554
    %vm556 = vcmp.eq.f32.partialorder %v503, inf
    %v557 = vsel %vm556, %v503, %v555
    %vm558 = vcmp.eq.f32.partialorder %v503, 0.0
    %v559 = vand.u32 %v503, 2147483648
    %v560 = vsel %vm558, %v559, %v557
    %v561 = vrsqrt.pop %v505
    %v562 = vmul.f32 %v505, %v561
    %vm563 = vcmp.eq.f32.partialorder %v505, inf
    %v564 = vsel %vm563, %v505, %v562
    %vm565 = vcmp.eq.f32.partialorder %v505, 0.0
    %v566 = vand.u32 %v505, 2147483648
    %v567 = vsel %vm565, %v566, %v564
    %v568 = vrsqrt.pop %v507
    %v569 = vmul.f32 %v507, %v568
    %vm570 = vcmp.eq.f32.partialorder %v507, inf
    %v571 = vsel %vm570, %v507, %v569
    %vm572 = vcmp.eq.f32.partialorder %v507, 0.0
    %v573 = vand.u32 %v507, 2147483648
    %v574 = vsel %vm572, %v573, %v571
    %v575 = vrsqrt.pop %v509
    %v576 = vmul.f32 %v509, %v575
    %vm577 = vcmp.eq.f32.partialorder %v509, inf
    %v578 = vsel %vm577, %v509, %v576
    %vm579 = vcmp.eq.f32.partialorder %v509, 0.0
    %v580 = vand.u32 %v509, 2147483648
    %v581 = vsel %vm579, %v580, %v578
    %v582 = vrsqrt.pop %v511
    %v583 = vmul.f32 %v511, %v582
    %vm584 = vcmp.eq.f32.partialorder %v511, inf
    %v585 = vsel %vm584, %v511, %v583
    %vm586 = vcmp.eq.f32.partialorder %v511, 0.0
    %v587 = vand.u32 %v511, 2147483648
    %v588 = vsel %vm586, %v587, %v585
    %v589 = vrsqrt.pop %v513
    %v590 = vmul.f32 %v513, %v589
    %vm591 = vcmp.eq.f32.partialorder %v513, inf
    %v592 = vsel %vm591, %v513, %v590
    %vm593 = vcmp.eq.f32.partialorder %v513, 0.0
    %v594 = vand.u32 %v513, 2147483648
    %v595 = vsel %vm593, %v594, %v592
    %v596 = vrsqrt.pop %v515
    %v597 = vmul.f32 %v515, %v596
    %vm598 = vcmp.eq.f32.partialorder %v515, inf
    %v599 = vsel %vm598, %v515, %v597
    %vm600 = vcmp.eq.f32.partialorder %v515, 0.0
    %v601 = vand.u32 %v515, 2147483648
    %v602 = vsel %vm600, %v601, %v599
    %v603 = vrsqrt.pop %v517
    %v604 = vmul.f32 %v517, %v603
    %vm605 = vcmp.eq.f32.partialorder %v517, inf
    %v606 = vsel %vm605, %v517, %v604
    %vm607 = vcmp.eq.f32.partialorder %v517, 0.0
    %v608 = vand.u32 %v517, 2147483648
    %v609 = vsel %vm607, %v608, %v606
    %v610 = vrsqrt.pop %v519
    %v611 = vmul.f32 %v519, %v610
    %vm612 = vcmp.eq.f32.partialorder %v519, inf
    %v613 = vsel %vm612, %v519, %v611
    %vm614 = vcmp.eq.f32.partialorder %v519, 0.0
    %v615 = vand.u32 %v519, 2147483648
    %v616 = vsel %vm614, %v615, %v613
    %v617 = vrsqrt.pop %v521
    %v618 = vmul.f32 %v521, %v617
    %vm619 = vcmp.eq.f32.partialorder %v521, inf
    %v620 = vsel %vm619, %v521, %v618
    %vm621 = vcmp.eq.f32.partialorder %v521, 0.0
    %v622 = vand.u32 %v521, 2147483648
    %v623 = vsel %vm621, %v622, %v620
    %v624 = vrsqrt.pop %v523
    %v625 = vmul.f32 %v523, %v624
    %vm626 = vcmp.eq.f32.partialorder %v523, inf
    %v627 = vsel %vm626, %v523, %v625
    %vm628 = vcmp.eq.f32.partialorder %v523, 0.0
    %v629 = vand.u32 %v523, 2147483648
    %v630 = vsel %vm628, %v629, %v627
    %v631 = vrsqrt.pop %v525
    %v632 = vmul.f32 %v525, %v631
    %vm633 = vcmp.eq.f32.partialorder %v525, inf
    %v634 = vsel %vm633, %v525, %v632
    %vm635 = vcmp.eq.f32.partialorder %v525, 0.0
    %v636 = vand.u32 %v525, 2147483648
    %v637 = vsel %vm635, %v636, %v634
    %v638 = vmax.f32 %v532, 1e-15
    %v639 = vmax.f32 %v539, 1e-15
    %v640 = vmax.f32 %v546, 1e-15
    %v641 = vmax.f32 %v553, 1e-15
    %v642 = vmax.f32 %v560, 1e-15
    %v643 = vmax.f32 %v567, 1e-15
    %v644 = vmax.f32 %v574, 1e-15
    %v645 = vmax.f32 %v581, 1e-15
    %v646 = vmax.f32 %v588, 1e-15
    %v647 = vmax.f32 %v595, 1e-15
    %v648 = vmax.f32 %v602, 1e-15
    %v649 = vmax.f32 %v609, 1e-15
    %v650 = vmax.f32 %v616, 1e-15
    %v651 = vmax.f32 %v623, 1e-15
    %v652 = vmax.f32 %v630, 1e-15
    %v653 = vmax.f32 %v637, 1e-15
    %vm654 = vcmp.gt.f32.partialorder %v638, 0.996
    %vm655 = vcmp.gt.f32.partialorder %v639, 0.996
    %vm656 = vcmp.gt.f32.partialorder %v640, 0.996
    %vm657 = vcmp.gt.f32.partialorder %v641, 0.996
    %vm658 = vcmp.gt.f32.partialorder %v642, 0.996
    %vm659 = vcmp.gt.f32.partialorder %v643, 0.996
    %vm660 = vcmp.gt.f32.partialorder %v644, 0.996
    %vm661 = vcmp.gt.f32.partialorder %v645, 0.996
    %vm662 = vcmp.gt.f32.partialorder %v646, 0.996
    %vm663 = vcmp.gt.f32.partialorder %v647, 0.996
    %vm664 = vcmp.gt.f32.partialorder %v648, 0.996
    %vm665 = vcmp.gt.f32.partialorder %v649, 0.996
    %vm666 = vcmp.gt.f32.partialorder %v650, 0.996
    %vm667 = vcmp.gt.f32.partialorder %v651, 0.996
    %vm668 = vcmp.gt.f32.partialorder %v652, 0.996
    %vm669 = vcmp.gt.f32.partialorder %v653, 0.996
    %v670 = vrcp.pop %v638
    %v671 = vmul.f32 %v447, %v670
    %v672 = vrcp.pop %v639
    %v673 = vmul.f32 %v449, %v672
    %v674 = vrcp.pop %v640
    %v675 = vmul.f32 %v451, %v674
    %v676 = vrcp.pop %v641
    %v677 = vmul.f32 %v453, %v676
    %v678 = vrcp.pop %v642
    %v679 = vmul.f32 %v455, %v678
    %v680 = vrcp.pop %v643
    %v681 = vmul.f32 %v457, %v680
    %v682 = vrcp.pop %v644
    %v683 = vmul.f32 %v459, %v682
    %v684 = vrcp.pop %v645
    %v685 = vmul.f32 %v461, %v684
    %v686 = vrcp.pop %v646
    %v687 = vmul.f32 %v463, %v686
    %v688 = vrcp.pop %v647
    %v689 = vmul.f32 %v465, %v688
    %v690 = vrcp.pop %v648
    %v691 = vmul.f32 %v467, %v690
    %v692 = vrcp.pop %v649
    %v693 = vmul.f32 %v469, %v692
    %v694 = vrcp.pop %v650
    %v695 = vmul.f32 %v471, %v694
    %v696 = vrcp.pop %v651
    %v697 = vmul.f32 %v473, %v696
    %v698 = vrcp.pop %v652
    %v699 = vmul.f32 %v475, %v698
    %v700 = vrcp.pop %v653
    %v701 = vmul.f32 %v477, %v700
    %v702 = vmul.f32 %v671, 0.996
    %v703 = vmul.f32 %v673, 0.996
    %v704 = vmul.f32 %v675, 0.996
    %v705 = vmul.f32 %v677, 0.996
    %v706 = vmul.f32 %v679, 0.996
    %v707 = vmul.f32 %v681, 0.996
    %v708 = vmul.f32 %v683, 0.996
    %v709 = vmul.f32 %v685, 0.996
    %v710 = vmul.f32 %v687, 0.996
    %v711 = vmul.f32 %v689, 0.996
    %v712 = vmul.f32 %v691, 0.996
    %v713 = vmul.f32 %v693, 0.996
    %v714 = vmul.f32 %v695, 0.996
    %v715 = vmul.f32 %v697, 0.996
    %v716 = vmul.f32 %v699, 0.996
    %v717 = vmul.f32 %v701, 0.996
    %v718 = vsel %vm654, 1, 0
    %v719 = vsel %vm655, 1, 0
    %v720 = vsel %vm656, 1, 0
    %v721 = vsel %vm657, 1, 0
    %v722 = vsel %vm658, 1, 0
    %v723 = vsel %vm659, 1, 0
    %v724 = vsel %vm660, 1, 0
    %v725 = vsel %vm661, 1, 0
    %v726 = vsel %vm662, 1, 0
    %v727 = vsel %vm663, 1, 0
    %v728 = vsel %vm664, 1, 0
    %v729 = vsel %vm665, 1, 0
    %v730 = vsel %vm666, 1, 0
    %v731 = vsel %vm667, 1, 0
    %v732 = vsel %vm668, 1, 0
    %v733 = vsel %vm669, 1, 0
    %vm734 = vcmp.eq.s32.totalorder %v718, 1
    %vm735 = vcmp.eq.s32.totalorder %v719, 1
    %vm736 = vcmp.eq.s32.totalorder %v720, 1
    %vm737 = vcmp.eq.s32.totalorder %v721, 1
    %vm738 = vcmp.eq.s32.totalorder %v722, 1
    %vm739 = vcmp.eq.s32.totalorder %v723, 1
    %vm740 = vcmp.eq.s32.totalorder %v724, 1
    %vm741 = vcmp.eq.s32.totalorder %v725, 1
    %vm742 = vcmp.eq.s32.totalorder %v726, 1
    %vm743 = vcmp.eq.s32.totalorder %v727, 1
    %vm744 = vcmp.eq.s32.totalorder %v728, 1
    %vm745 = vcmp.eq.s32.totalorder %v729, 1
    %vm746 = vcmp.eq.s32.totalorder %v730, 1
    %vm747 = vcmp.eq.s32.totalorder %v731, 1
    %vm748 = vcmp.eq.s32.totalorder %v732, 1
    %vm749 = vcmp.eq.s32.totalorder %v733, 1
    %v750 = vsel %vm734, %v702, %v447
    %v751 = vsel %vm735, %v703, %v449
    %v752 = vsel %vm736, %v704, %v451
    %v753 = vsel %vm737, %v705, %v453
    %v754 = vsel %vm738, %v706, %v455
    %v755 = vsel %vm739, %v707, %v457
    %v756 = vsel %vm740, %v708, %v459
    %v757 = vsel %vm741, %v709, %v461
    %v758 = vsel %vm742, %v710, %v463
    %v759 = vsel %vm743, %v711, %v465
    %v760 = vsel %vm744, %v712, %v467
    %v761 = vsel %vm745, %v713, %v469
    %v762 = vsel %vm746, %v714, %v471
    %v763 = vsel %vm747, %v715, %v473
    %v764 = vsel %vm748, %v716, %v475
    %v765 = vsel %vm749, %v717, %v477
    %v766 = vld [vmem:[#allocation5] sm:$0xff]
    %v767 = vld [vmem:[#allocation5 + $0x8] sm:$0xff]
    %v768 = vld [vmem:[#allocation5 + $0x10] sm:$0xff]
    %v769 = vld [vmem:[#allocation5 + $0x18] sm:$0xff]
    %v770 = vld [vmem:[#allocation5 + $0x20] sm:$0xff]
    %v771 = vld [vmem:[#allocation5 + $0x28] sm:$0xff]
    %v772 = vld [vmem:[#allocation5 + $0x30] sm:$0xff]
    %v773 = vld [vmem:[#allocation5 + $0x38] sm:$0xff]
    %v774 = vld [vmem:[#allocation5 + $0x40] sm:$0xff]
    %v775 = vld [vmem:[#allocation5 + $0x48] sm:$0xff]
    %v776 = vld [vmem:[#allocation5 + $0x50] sm:$0xff]
    %v777 = vld [vmem:[#allocation5 + $0x58] sm:$0xff]
    %v778 = vld [vmem:[#allocation5 + $0x60] sm:$0xff]
    %v779 = vld [vmem:[#allocation5 + $0x68] sm:$0xff]
    %v780 = vld [vmem:[#allocation5 + $0x70] sm:$0xff]
    %v781 = vld [vmem:[#allocation5 + $0x78] sm:$0xff]
    %v782 = vmul.f32 %v750, %v750
    %v783 = vmul.f32 %v751, %v751
    %v784 = vmul.f32 %v752, %v752
    %v785 = vmul.f32 %v753, %v753
    %v786 = vmul.f32 %v754, %v754
    %v787 = vmul.f32 %v755, %v755
    %v788 = vmul.f32 %v756, %v756
    %v789 = vmul.f32 %v757, %v757
    %v790 = vmul.f32 %v758, %v758
    %v791 = vmul.f32 %v759, %v759
    %v792 = vmul.f32 %v760, %v760
    %v793 = vmul.f32 %v761, %v761
    %v794 = vmul.f32 %v762, %v762
    %v795 = vmul.f32 %v763, %v763
    %v796 = vmul.f32 %v764, %v764
    %v797 = vmul.f32 %v765, %v765
    %798 = vadd.xlane.f32.xlu0 %v782
    %v799 = vpop.xlane.xlu0 %798
    %800 = vadd.xlane.f32.xlu0 %v783
    %v801 = vpop.xlane.xlu0 %800
    %802 = vadd.xlane.f32.xlu0 %v784
    %v803 = vpop.xlane.xlu0 %802
    %804 = vadd.xlane.f32.xlu0 %v785
    %v805 = vpop.xlane.xlu0 %804
    %806 = vadd.xlane.f32.xlu0 %v786
    %v807 = vpop.xlane.xlu0 %806
    %808 = vadd.xlane.f32.xlu0 %v787
    %v809 = vpop.xlane.xlu0 %808
    %810 = vadd.xlane.f32.xlu0 %v788
    %v811 = vpop.xlane.xlu0 %810
    %812 = vadd.xlane.f32.xlu0 %v789
    %v813 = vpop.xlane.xlu0 %812
    %814 = vadd.xlane.f32.xlu0 %v790
    %v815 = vpop.xlane.xlu0 %814
    %816 = vadd.xlane.f32.xlu0 %v791
    %v817 = vpop.xlane.xlu0 %816
    %818 = vadd.xlane.f32.xlu0 %v792
    %v819 = vpop.xlane.xlu0 %818
    %820 = vadd.xlane.f32.xlu0 %v793
    %v821 = vpop.xlane.xlu0 %820
    %822 = vadd.xlane.f32.xlu0 %v794
    %v823 = vpop.xlane.xlu0 %822
    %824 = vadd.xlane.f32.xlu0 %v795
    %v825 = vpop.xlane.xlu0 %824
    %826 = vadd.xlane.f32.xlu0 %v796
    %v827 = vpop.xlane.xlu0 %826
    %828 = vadd.xlane.f32.xlu0 %v797
    %v829 = vpop.xlane.xlu0 %828
    %v830 = vrsqrt.pop %v799
    %v831 = vmul.f32 %v799, %v830
    %vm832 = vcmp.eq.f32.partialorder %v799, inf
    %v833 = vsel %vm832, %v799, %v831
    %vm834 = vcmp.eq.f32.partialorder %v799, 0.0
    %v835 = vand.u32 %v799, 2147483648
    %v836 = vsel %vm834, %v835, %v833
    %v837 = vrsqrt.pop %v801
    %v838 = vmul.f32 %v801, %v837
    %vm839 = vcmp.eq.f32.partialorder %v801, inf
    %v840 = vsel %vm839, %v801, %v838
    %vm841 = vcmp.eq.f32.partialorder %v801, 0.0
    %v842 = vand.u32 %v801, 2147483648
    %v843 = vsel %vm841, %v842, %v840
    %v844 = vrsqrt.pop %v803
    %v845 = vmul.f32 %v803, %v844
    %vm846 = vcmp.eq.f32.partialorder %v803, inf
    %v847 = vsel %vm846, %v803, %v845
    %vm848 = vcmp.eq.f32.partialorder %v803, 0.0
    %v849 = vand.u32 %v803, 2147483648
    %v850 = vsel %vm848, %v849, %v847
    %v851 = vrsqrt.pop %v805
    %v852 = vmul.f32 %v805, %v851
    %vm853 = vcmp.eq.f32.partialorder %v805, inf
    %v854 = vsel %vm853, %v805, %v852
    %vm855 = vcmp.eq.f32.partialorder %v805, 0.0
    %v856 = vand.u32 %v805, 2147483648
    %v857 = vsel %vm855, %v856, %v854
    %v858 = vrsqrt.pop %v807
    %v859 = vmul.f32 %v807, %v858
    %vm860 = vcmp.eq.f32.partialorder %v807, inf
    %v861 = vsel %vm860, %v807, %v859
    %vm862 = vcmp.eq.f32.partialorder %v807, 0.0
    %v863 = vand.u32 %v807, 2147483648
    %v864 = vsel %vm862, %v863, %v861
    %v865 = vrsqrt.pop %v809
    %v866 = vmul.f32 %v809, %v865
    %vm867 = vcmp.eq.f32.partialorder %v809, inf
    %v868 = vsel %vm867, %v809, %v866
    %vm869 = vcmp.eq.f32.partialorder %v809, 0.0
    %v870 = vand.u32 %v809, 2147483648
    %v871 = vsel %vm869, %v870, %v868
    %v872 = vrsqrt.pop %v811
    %v873 = vmul.f32 %v811, %v872
    %vm874 = vcmp.eq.f32.partialorder %v811, inf
    %v875 = vsel %vm874, %v811, %v873
    %vm876 = vcmp.eq.f32.partialorder %v811, 0.0
    %v877 = vand.u32 %v811, 2147483648
    %v878 = vsel %vm876, %v877, %v875
    %v879 = vrsqrt.pop %v813
    %v880 = vmul.f32 %v813, %v879
    %vm881 = vcmp.eq.f32.partialorder %v813, inf
    %v882 = vsel %vm881, %v813, %v880
    %vm883 = vcmp.eq.f32.partialorder %v813, 0.0
    %v884 = vand.u32 %v813, 2147483648
    %v885 = vsel %vm883, %v884, %v882
    %v886 = vrsqrt.pop %v815
    %v887 = vmul.f32 %v815, %v886
    %vm888 = vcmp.eq.f32.partialorder %v815, inf
    %v889 = vsel %vm888, %v815, %v887
    %vm890 = vcmp.eq.f32.partialorder %v815, 0.0
    %v891 = vand.u32 %v815, 2147483648
    %v892 = vsel %vm890, %v891, %v889
    %v893 = vrsqrt.pop %v817
    %v894 = vmul.f32 %v817, %v893
    %vm895 = vcmp.eq.f32.partialorder %v817, inf
    %v896 = vsel %vm895, %v817, %v894
    %vm897 = vcmp.eq.f32.partialorder %v817, 0.0
    %v898 = vand.u32 %v817, 2147483648
    %v899 = vsel %vm897, %v898, %v896
    %v900 = vrsqrt.pop %v819
    %v901 = vmul.f32 %v819, %v900
    %vm902 = vcmp.eq.f32.partialorder %v819, inf
    %v903 = vsel %vm902, %v819, %v901
    %vm904 = vcmp.eq.f32.partialorder %v819, 0.0
    %v905 = vand.u32 %v819, 2147483648
    %v906 = vsel %vm904, %v905, %v903
    %v907 = vrsqrt.pop %v821
    %v908 = vmul.f32 %v821, %v907
    %vm909 = vcmp.eq.f32.partialorder %v821, inf
    %v910 = vsel %vm909, %v821, %v908
    %vm911 = vcmp.eq.f32.partialorder %v821, 0.0
    %v912 = vand.u32 %v821, 2147483648
    %v913 = vsel %vm911, %v912, %v910
    %v914 = vrsqrt.pop %v823
    %v915 = vmul.f32 %v823, %v914
    %vm916 = vcmp.eq.f32.partialorder %v823, inf
    %v917 = vsel %vm916, %v823, %v915
    %vm918 = vcmp.eq.f32.partialorder %v823, 0.0
    %v919 = vand.u32 %v823, 2147483648
    %v920 = vsel %vm918, %v919, %v917
    %v921 = vrsqrt.pop %v825
    %v922 = vmul.f32 %v825, %v921
    %vm923 = vcmp.eq.f32.partialorder %v825, inf
    %v924 = vsel %vm923, %v825, %v922
    %vm925 = vcmp.eq.f32.partialorder %v825, 0.0
    %v926 = vand.u32 %v825, 2147483648
    %v927 = vsel %vm925, %v926, %v924
    %v928 = vrsqrt.pop %v827
    %v929 = vmul.f32 %v827, %v928
    %vm930 = vcmp.eq.f32.partialorder %v827, inf
    %v931 = vsel %vm930, %v827, %v929
    %vm932 = vcmp.eq.f32.partialorder %v827, 0.0
    %v933 = vand.u32 %v827, 2147483648
    %v934 = vsel %vm932, %v933, %v931
    %v935 = vrsqrt.pop %v829
    %v936 = vmul.f32 %v829, %v935
    %vm937 = vcmp.eq.f32.partialorder %v829, inf
    %v938 = vsel %vm937, %v829, %v936
    %vm939 = vcmp.eq.f32.partialorder %v829, 0.0
    %v940 = vand.u32 %v829, 2147483648
    %v941 = vsel %vm939, %v940, %v938
    %v942 = vmax.f32 %v836, 1e-15
    %v943 = vmax.f32 %v843, 1e-15
    %v944 = vmax.f32 %v850, 1e-15
    %v945 = vmax.f32 %v857, 1e-15
    %v946 = vmax.f32 %v864, 1e-15
    %v947 = vmax.f32 %v871, 1e-15
    %v948 = vmax.f32 %v878, 1e-15
    %v949 = vmax.f32 %v885, 1e-15
    %v950 = vmax.f32 %v892, 1e-15
    %v951 = vmax.f32 %v899, 1e-15
    %v952 = vmax.f32 %v906, 1e-15
    %v953 = vmax.f32 %v913, 1e-15
    %v954 = vmax.f32 %v920, 1e-15
    %v955 = vmax.f32 %v927, 1e-15
    %v956 = vmax.f32 %v934, 1e-15
    %v957 = vmax.f32 %v941, 1e-15
    %958 = vmatprep.subr.mxu0 0.0
    %959 = vmatpush1.msra.mxu0 %v766
    %960 = vmatprep.subr.mxu0 0.0
    %961 = vmatpush1.msra.mxu0 %v767
    %962 = vmatprep.subr.mxu0 0.0
    %963 = vmatpush1.msra.mxu0 %v768
    %964 = vmatprep.subr.mxu0 0.0
    %965 = vmatpush1.msra.mxu0 %v769
    %966 = vmatprep.subr.mxu0 0.0
    %967 = vmatpush1.msra.mxu0 %v770
    %968 = vmatprep.subr.mxu0 0.0
    %969 = vmatpush1.msra.mxu0 %v771
    %970 = vmatprep.subr.mxu0 0.0
    %971 = vmatpush1.msra.mxu0 %v772
    %972 = vmatprep.subr.mxu0 0.0
    %973 = vmatpush1.msra.mxu0 %v773
    %974 = vmatprep.subr.mxu0 0.0
    %975 = vmatpush1.msra.mxu0 %v774
    %976 = vmatprep.subr.mxu0 0.0
    %977 = vmatpush1.msra.mxu0 %v775
    %978 = vmatprep.subr.mxu0 0.0
    %979 = vmatpush1.msra.mxu0 %v776
    %980 = vmatprep.subr.mxu0 0.0
    %981 = vmatpush1.msra.mxu0 %v777
    %982 = vmatprep.subr.mxu0 0.0
    %983 = vmatpush1.msra.mxu0 %v778
    %984 = vmatprep.subr.mxu0 0.0
    %985 = vmatpush1.msra.mxu0 %v779
    %986 = vmatprep.subr.mxu0 0.0
    %987 = vmatpush1.msra.mxu0 %v780
    %988 = vmatprep.subr.mxu0 0.0
    %989 = vmatpush1.msra.mxu0 %v781
    %990 = vmatprep.subr.mxu0 0.0
    %991 = vmatpush1.msra.mxu0 0.0
    %992 = vmatprep.subr.mxu0 0.0
    %993 = vmatpush1.msra.mxu0 0.0
    %994 = vmatprep.subr.mxu0 0.0
    %995 = vmatpush1.msra.mxu0 0.0
    %996 = vmatprep.subr.mxu0 0.0
    %997 = vmatpush1.msra.mxu0 0.0
    %998 = vmatprep.subr.mxu0 0.0
    %999 = vmatpush1.msra.mxu0 0.0
    %1000 = vmatprep.subr.mxu0 0.0
    %1001 = vmatpush1.msra.mxu0 0.0
    %1002 = vmatprep.subr.mxu0 0.0
    %1003 = vmatpush1.msra.mxu0 0.0
    %1004 = vmatprep.subr.mxu0 0.0
    %1005 = vmatpush1.msra.mxu0 0.0
    %1006 = vmatprep.subr.mxu0 0.0
    %1007 = vmatpush1.msra.mxu0 0.0
    %1008 = vmatprep.subr.mxu0 0.0
    %1009 = vmatpush1.msra.mxu0 0.0
    %1010 = vmatprep.subr.mxu0 0.0
    %1011 = vmatpush1.msra.mxu0 0.0
    %1012 = vmatprep.subr.mxu0 0.0
    %1013 = vmatpush1.msra.mxu0 0.0
    %1014 = vmatprep.subr.mxu0 0.0
    %1015 = vmatpush1.msra.mxu0 0.0
    %1016 = vmatprep.subr.mxu0 0.0
    %1017 = vmatpush1.msra.mxu0 0.0
    %1018 = vmatprep.subr.mxu0 0.0
    %1019 = vmatpush1.msra.mxu0 0.0
    %1020 = vmatprep.subr.mxu0 0.0
    %1021 = vmatpush1.msra.mxu0 0.0
    %1022 = vmatprep.mubr.f32.mxu0 0.0
    %1023 = vmatmul.mubr.f32.gmra.mrb[0].mxu0 %v750
    %v1024 = vpop.f32.mrb[0].mxu0
    %v1025 = vadd.f32 0.0, %v1024
    %v1026 = vpop.f32.mrb[0].mxu0
    %1027 = vmatprep.mubr.f32.mxu0 0.0
    %1028 = vmatmul.mubr.f32.gmra.mrb[0].mxu0 %v751
    %v1029 = vpop.f32.mrb[0].mxu0
    %v1030 = vadd.f32 0.0, %v1029
    %v1031 = vpop.f32.mrb[0].mxu0
    %1032 = vmatprep.mubr.f32.mxu0 0.0
    %1033 = vmatmul.mubr.f32.gmra.mrb[0].mxu0 %v752
    %v1034 = vpop.f32.mrb[0].mxu0
    %v1035 = vadd.f32 0.0, %v1034
    %v1036 = vpop.f32.mrb[0].mxu0
    %1037 = vmatprep.mubr.f32.mxu0 0.0
    %1038 = vmatmul.mubr.f32.gmra.mrb[0].mxu0 %v753
    %v1039 = vpop.f32.mrb[0].mxu0
    %v1040 = vadd.f32 0.0, %v1039
    %v1041 = vpop.f32.mrb[0].mxu0
    %1042 = vmatprep.mubr.f32.mxu0 0.0
    %1043 = vmatmul.mubr.f32.gmra.mrb[0].mxu0 %v754
    %v1044 = vpop.f32.mrb[0].mxu0
    %v1045 = vadd.f32 0.0, %v1044
    %v1046 = vpop.f32.mrb[0].mxu0
    %1047 = vmatprep.mubr.f32.mxu0 0.0
    %1048 = vmatmul.mubr.f32.gmra.mrb[0].mxu0 %v755
    %v1049 = vpop.f32.mrb[0].mxu0
    %v1050 = vadd.f32 0.0, %v1049
    %v1051 = vpop.f32.mrb[0].mxu0
    %1052 = vmatprep.mubr.f32.mxu0 0.0
    %1053 = vmatmul.mubr.f32.gmra.mrb[0].mxu0 %v756
    %v1054 = vpop.f32.mrb[0].mxu0
    %v1055 = vadd.f32 0.0, %v1054
    %v1056 = vpop.f32.mrb[0].mxu0
    %1057 = vmatprep.mubr.f32.mxu0 0.0
    %1058 = vmatmul.mubr.f32.gmra.mrb[0].mxu0 %v757
    %v1059 = vpop.f32.mrb[0].mxu0
    %v1060 = vadd.f32 0.0, %v1059
    %v1061 = vpop.f32.mrb[0].mxu0
    %1062 = vmatprep.mubr.f32.mxu0 0.0
    %1063 = vmatmul.mubr.f32.gmra.mrb[0].mxu0 %v758
    %v1064 = vpop.f32.mrb[0].mxu0
    %v1065 = vadd.f32 0.0, %v1064
    %v1066 = vpop.f32.mrb[0].mxu0
    %1067 = vmatprep.mubr.f32.mxu0 0.0
    %1068 = vmatmul.mubr.f32.gmra.mrb[0].mxu0 %v759
    %v1069 = vpop.f32.mrb[0].mxu0
    %v1070 = vadd.f32 0.0, %v1069
    %v1071 = vpop.f32.mrb[0].mxu0
    %1072 = vmatprep.mubr.f32.mxu0 0.0
    %1073 = vmatmul.mubr.f32.gmra.mrb[0].mxu0 %v760
    %v1074 = vpop.f32.mrb[0].mxu0
    %v1075 = vadd.f32 0.0, %v1074
    %v1076 = vpop.f32.mrb[0].mxu0
    %1077 = vmatprep.mubr.f32.mxu0 0.0
    %1078 = vmatmul.mubr.f32.gmra.mrb[0].mxu0 %v761
    %v1079 = vpop.f32.mrb[0].mxu0
    %v1080 = vadd.f32 0.0, %v1079
    %v1081 = vpop.f32.mrb[0].mxu0
    %1082 = vmatprep.mubr.f32.mxu0 0.0
    %1083 = vmatmul.mubr.f32.gmra.mrb[0].mxu0 %v762
    %v1084 = vpop.f32.mrb[0].mxu0
    %v1085 = vadd.f32 0.0, %v1084
    %v1086 = vpop.f32.mrb[0].mxu0
    %1087 = vmatprep.mubr.f32.mxu0 0.0
    %1088 = vmatmul.mubr.f32.gmra.mrb[0].mxu0 %v763
    %v1089 = vpop.f32.mrb[0].mxu0
    %v1090 = vadd.f32 0.0, %v1089
    %v1091 = vpop.f32.mrb[0].mxu0
    %1092 = vmatprep.mubr.f32.mxu0 0.0
    %1093 = vmatmul.mubr.f32.gmra.mrb[0].mxu0 %v764
    %v1094 = vpop.f32.mrb[0].mxu0
    %v1095 = vadd.f32 0.0, %v1094
    %v1096 = vpop.f32.mrb[0].mxu0
    %1097 = vmatprep.mubr.f32.mxu0 0.0
    %1098 = vmatmul.mubr.f32.gmra.mrb[0].mxu0 %v765
    %v1099 = vpop.f32.mrb[0].mxu0
    %v1100 = vadd.f32 0.0, %v1099
    %v1101 = vpop.f32.mrb[0].mxu0
    %1102 = vdwg.mxu0
    %v1103 = vmul.f32 %v1025, %v1025
    %v1104 = vmul.f32 %v1030, %v1030
    %v1105 = vmul.f32 %v1035, %v1035
    %v1106 = vmul.f32 %v1040, %v1040
    %v1107 = vmul.f32 %v1045, %v1045
    %v1108 = vmul.f32 %v1050, %v1050
    %v1109 = vmul.f32 %v1055, %v1055
    %v1110 = vmul.f32 %v1060, %v1060
    %v1111 = vmul.f32 %v1065, %v1065
    %v1112 = vmul.f32 %v1070, %v1070
    %v1113 = vmul.f32 %v1075, %v1075
    %v1114 = vmul.f32 %v1080, %v1080
    %v1115 = vmul.f32 %v1085, %v1085
    %v1116 = vmul.f32 %v1090, %v1090
    %v1117 = vmul.f32 %v1095, %v1095
    %v1118 = vmul.f32 %v1100, %v1100
    %1119 = vadd.xlane.f32.xlu0 %v1103
    %v1120 = vpop.xlane.xlu0 %1119
    %1121 = vadd.xlane.f32.xlu0 %v1104
    %v1122 = vpop.xlane.xlu0 %1121
    %1123 = vadd.xlane.f32.xlu0 %v1105
    %v1124 = vpop.xlane.xlu0 %1123
    %1125 = vadd.xlane.f32.xlu0 %v1106
    %v1126 = vpop.xlane.xlu0 %1125
    %1127 = vadd.xlane.f32.xlu0 %v1107
    %v1128 = vpop.xlane.xlu0 %1127
    %1129 = vadd.xlane.f32.xlu0 %v1108
    %v1130 = vpop.xlane.xlu0 %1129
    %1131 = vadd.xlane.f32.xlu0 %v1109
    %v1132 = vpop.xlane.xlu0 %1131
    %1133 = vadd.xlane.f32.xlu0 %v1110
    %v1134 = vpop.xlane.xlu0 %1133
    %1135 = vadd.xlane.f32.xlu0 %v1111
    %v1136 = vpop.xlane.xlu0 %1135
    %1137 = vadd.xlane.f32.xlu0 %v1112
    %v1138 = vpop.xlane.xlu0 %1137
    %1139 = vadd.xlane.f32.xlu0 %v1113
    %v1140 = vpop.xlane.xlu0 %1139
    %1141 = vadd.xlane.f32.xlu0 %v1114
    %v1142 = vpop.xlane.xlu0 %1141
    %1143 = vadd.xlane.f32.xlu0 %v1115
    %v1144 = vpop.xlane.xlu0 %1143
    %1145 = vadd.xlane.f32.xlu0 %v1116
    %v1146 = vpop.xlane.xlu0 %1145
    %1147 = vadd.xlane.f32.xlu0 %v1117
    %v1148 = vpop.xlane.xlu0 %1147
    %1149 = vadd.xlane.f32.xlu0 %v1118
    %v1150 = vpop.xlane.xlu0 %1149
    %v1151 = vrsqrt.pop %v1120
    %v1152 = vmul.f32 %v1120, %v1151
    %vm1153 = vcmp.eq.f32.partialorder %v1120, inf
    %v1154 = vsel %vm1153, %v1120, %v1152
    %vm1155 = vcmp.eq.f32.partialorder %v1120, 0.0
    %v1156 = vand.u32 %v1120, 2147483648
    %v1157 = vsel %vm1155, %v1156, %v1154
    %v1158 = vrsqrt.pop %v1122
    %v1159 = vmul.f32 %v1122, %v1158
    %vm1160 = vcmp.eq.f32.partialorder %v1122, inf
    %v1161 = vsel %vm1160, %v1122, %v1159
    %vm1162 = vcmp.eq.f32.partialorder %v1122, 0.0
    %v1163 = vand.u32 %v1122, 2147483648
    %v1164 = vsel %vm1162, %v1163, %v1161
    %v1165 = vrsqrt.pop %v1124
    %v1166 = vmul.f32 %v1124, %v1165
    %vm1167 = vcmp.eq.f32.partialorder %v1124, inf
    %v1168 = vsel %vm1167, %v1124, %v1166
    %vm1169 = vcmp.eq.f32.partialorder %v1124, 0.0
    %v1170 = vand.u32 %v1124, 2147483648
    %v1171 = vsel %vm1169, %v1170, %v1168
    %v1172 = vrsqrt.pop %v1126
    %v1173 = vmul.f32 %v1126, %v1172
    %vm1174 = vcmp.eq.f32.partialorder %v1126, inf
    %v1175 = vsel %vm1174, %v1126, %v1173
    %vm1176 = vcmp.eq.f32.partialorder %v1126, 0.0
    %v1177 = vand.u32 %v1126, 2147483648
    %v1178 = vsel %vm1176, %v1177, %v1175
    %v1179 = vrsqrt.pop %v1128
    %v1180 = vmul.f32 %v1128, %v1179
    %vm1181 = vcmp.eq.f32.partialorder %v1128, inf
    %v1182 = vsel %vm1181, %v1128, %v1180
    %vm1183 = vcmp.eq.f32.partialorder %v1128, 0.0
    %v1184 = vand.u32 %v1128, 2147483648
    %v1185 = vsel %vm1183, %v1184, %v1182
    %v1186 = vrsqrt.pop %v1130
    %v1187 = vmul.f32 %v1130, %v1186
    %vm1188 = vcmp.eq.f32.partialorder %v1130, inf
    %v1189 = vsel %vm1188, %v1130, %v1187
    %vm1190 = vcmp.eq.f32.partialorder %v1130, 0.0
    %v1191 = vand.u32 %v1130, 2147483648
    %v1192 = vsel %vm1190, %v1191, %v1189
    %v1193 = vrsqrt.pop %v1132
    %v1194 = vmul.f32 %v1132, %v1193
    %vm1195 = vcmp.eq.f32.partialorder %v1132, inf
    %v1196 = vsel %vm1195, %v1132, %v1194
    %vm1197 = vcmp.eq.f32.partialorder %v1132, 0.0
    %v1198 = vand.u32 %v1132, 2147483648
    %v1199 = vsel %vm1197, %v1198, %v1196
    %v1200 = vrsqrt.pop %v1134
    %v1201 = vmul.f32 %v1134, %v1200
    %vm1202 = vcmp.eq.f32.partialorder %v1134, inf
    %v1203 = vsel %vm1202, %v1134, %v1201
    %vm1204 = vcmp.eq.f32.partialorder %v1134, 0.0
    %v1205 = vand.u32 %v1134, 2147483648
    %v1206 = vsel %vm1204, %v1205, %v1203
    %v1207 = vrsqrt.pop %v1136
    %v1208 = vmul.f32 %v1136, %v1207
    %vm1209 = vcmp.eq.f32.partialorder %v1136, inf
    %v1210 = vsel %vm1209, %v1136, %v1208
    %vm1211 = vcmp.eq.f32.partialorder %v1136, 0.0
    %v1212 = vand.u32 %v1136, 2147483648
    %v1213 = vsel %vm1211, %v1212, %v1210
    %v1214 = vrsqrt.pop %v1138
    %v1215 = vmul.f32 %v1138, %v1214
    %vm1216 = vcmp.eq.f32.partialorder %v1138, inf
    %v1217 = vsel %vm1216, %v1138, %v1215
    %vm1218 = vcmp.eq.f32.partialorder %v1138, 0.0
    %v1219 = vand.u32 %v1138, 2147483648
    %v1220 = vsel %vm1218, %v1219, %v1217
    %v1221 = vrsqrt.pop %v1140
    %v1222 = vmul.f32 %v1140, %v1221
    %vm1223 = vcmp.eq.f32.partialorder %v1140, inf
    %v1224 = vsel %vm1223, %v1140, %v1222
    %vm1225 = vcmp.eq.f32.partialorder %v1140, 0.0
    %v1226 = vand.u32 %v1140, 2147483648
    %v1227 = vsel %vm1225, %v1226, %v1224
    %v1228 = vrsqrt.pop %v1142
    %v1229 = vmul.f32 %v1142, %v1228
    %vm1230 = vcmp.eq.f32.partialorder %v1142, inf
    %v1231 = vsel %vm1230, %v1142, %v1229
    %vm1232 = vcmp.eq.f32.partialorder %v1142, 0.0
    %v1233 = vand.u32 %v1142, 2147483648
    %v1234 = vsel %vm1232, %v1233, %v1231
    %v1235 = vrsqrt.pop %v1144
    %v1236 = vmul.f32 %v1144, %v1235
    %vm1237 = vcmp.eq.f32.partialorder %v1144, inf
    %v1238 = vsel %vm1237, %v1144, %v1236
    %vm1239 = vcmp.eq.f32.partialorder %v1144, 0.0
    %v1240 = vand.u32 %v1144, 2147483648
    %v1241 = vsel %vm1239, %v1240, %v1238
    %v1242 = vrsqrt.pop %v1146
    %v1243 = vmul.f32 %v1146, %v1242
    %vm1244 = vcmp.eq.f32.partialorder %v1146, inf
    %v1245 = vsel %vm1244, %v1146, %v1243
    %vm1246 = vcmp.eq.f32.partialorder %v1146, 0.0
    %v1247 = vand.u32 %v1146, 2147483648
    %v1248 = vsel %vm1246, %v1247, %v1245
    %v1249 = vrsqrt.pop %v1148
    %v1250 = vmul.f32 %v1148, %v1249
    %vm1251 = vcmp.eq.f32.partialorder %v1148, inf
    %v1252 = vsel %vm1251, %v1148, %v1250
    %vm1253 = vcmp.eq.f32.partialorder %v1148, 0.0
    %v1254 = vand.u32 %v1148, 2147483648
    %v1255 = vsel %vm1253, %v1254, %v1252
    %v1256 = vrsqrt.pop %v1150
    %v1257 = vmul.f32 %v1150, %v1256
    %vm1258 = vcmp.eq.f32.partialorder %v1150, inf
    %v1259 = vsel %vm1258, %v1150, %v1257
    %vm1260 = vcmp.eq.f32.partialorder %v1150, 0.0
    %v1261 = vand.u32 %v1150, 2147483648
    %v1262 = vsel %vm1260, %v1261, %v1259
    %v1263 = vmax.f32 %v1157, 1e-15
    %v1264 = vmax.f32 %v1164, 1e-15
    %v1265 = vmax.f32 %v1171, 1e-15
    %v1266 = vmax.f32 %v1178, 1e-15
    %v1267 = vmax.f32 %v1185, 1e-15
    %v1268 = vmax.f32 %v1192, 1e-15
    %v1269 = vmax.f32 %v1199, 1e-15
    %v1270 = vmax.f32 %v1206, 1e-15
    %v1271 = vmax.f32 %v1213, 1e-15
    %v1272 = vmax.f32 %v1220, 1e-15
    %v1273 = vmax.f32 %v1227, 1e-15
    %v1274 = vmax.f32 %v1234, 1e-15
    %v1275 = vmax.f32 %v1241, 1e-15
    %v1276 = vmax.f32 %v1248, 1e-15
    %v1277 = vmax.f32 %v1255, 1e-15
    %v1278 = vmax.f32 %v1262, 1e-15
    %v1279 = vrcp.pop %v942
    %v1280 = vmul.f32 %v1263, %v1279
    %v1281 = vrcp.pop %v943
    %v1282 = vmul.f32 %v1264, %v1281
    %v1283 = vrcp.pop %v944
    %v1284 = vmul.f32 %v1265, %v1283
    %v1285 = vrcp.pop %v945
    %v1286 = vmul.f32 %v1266, %v1285
    %v1287 = vrcp.pop %v946
    %v1288 = vmul.f32 %v1267, %v1287
    %v1289 = vrcp.pop %v947
    %v1290 = vmul.f32 %v1268, %v1289
    %v1291 = vrcp.pop %v948
    %v1292 = vmul.f32 %v1269, %v1291
    %v1293 = vrcp.pop %v949
    %v1294 = vmul.f32 %v1270, %v1293
    %v1295 = vrcp.pop %v950
    %v1296 = vmul.f32 %v1271, %v1295
    %v1297 = vrcp.pop %v951
    %v1298 = vmul.f32 %v1272, %v1297
    %v1299 = vrcp.pop %v952
    %v1300 = vmul.f32 %v1273, %v1299
    %v1301 = vrcp.pop %v953
    %v1302 = vmul.f32 %v1274, %v1301
    %v1303 = vrcp.pop %v954
    %v1304 = vmul.f32 %v1275, %v1303
    %v1305 = vrcp.pop %v955
    %v1306 = vmul.f32 %v1276, %v1305
    %v1307 = vrcp.pop %v956
    %v1308 = vmul.f32 %v1277, %v1307
    %v1309 = vrcp.pop %v957
    %v1310 = vmul.f32 %v1278, %v1309
    %v1311 = vmax.f32 %v942, -0.9999999
    %v1312 = vmax.f32 %v943, -0.9999999
    %v1313 = vmax.f32 %v944, -0.9999999
    %v1314 = vmax.f32 %v945, -0.9999999
    %v1315 = vmax.f32 %v946, -0.9999999
    %v1316 = vmax.f32 %v947, -0.9999999
    %v1317 = vmax.f32 %v948, -0.9999999
    %v1318 = vmax.f32 %v949, -0.9999999
    %v1319 = vmax.f32 %v950, -0.9999999
    %v1320 = vmax.f32 %v951, -0.9999999
    %v1321 = vmax.f32 %v952, -0.9999999
    %v1322 = vmax.f32 %v953, -0.9999999
    %v1323 = vmax.f32 %v954, -0.9999999
    %v1324 = vmax.f32 %v955, -0.9999999
    %v1325 = vmax.f32 %v956, -0.9999999
    %v1326 = vmax.f32 %v957, -0.9999999
    %v1327 = vmin.f32 %v1311, 0.9999999
    %v1328 = vmin.f32 %v1312, 0.9999999
    %v1329 = vmin.f32 %v1313, 0.9999999
    %v1330 = vmin.f32 %v1314, 0.9999999
    %v1331 = vmin.f32 %v1315, 0.9999999
    %v1332 = vmin.f32 %v1316, 0.9999999
    %v1333 = vmin.f32 %v1317, 0.9999999
    %v1334 = vmin.f32 %v1318, 0.9999999
    %v1335 = vmin.f32 %v1319, 0.9999999
    %v1336 = vmin.f32 %v1320, 0.9999999
    %v1337 = vmin.f32 %v1321, 0.9999999
    %v1338 = vmin.f32 %v1322, 0.9999999
    %v1339 = vmin.f32 %v1323, 0.9999999
    %v1340 = vmin.f32 %v1324, 0.9999999
    %v1341 = vmin.f32 %v1325, 0.9999999
    %v1342 = vmin.f32 %v1326, 0.9999999
    %v1343 = vadd.f32 %v1327, 1.0
    %v1344 = vlog2.pop %v1343
    %v1345 = vmul.f32 %v1344, 0.6931472
    %v1346 = vmul.f32 -0.5, %v1327
    %v1347 = vadd.f32 %v1346, 1.0
    %v1348 = vmul.f32 %v1347, %v1327
    %v1349 = vand.u32 2147483647, %v1327
    %vm1350 = vcmp.lt.f32.partialorder %v1349, 0.0004427343
    %v1351 = vsel %vm1350, %v1348, %v1345
    %v1352 = vadd.f32 %v1328, 1.0
    %v1353 = vlog2.pop %v1352
    %v1354 = vmul.f32 %v1353, 0.6931472
    %v1355 = vmul.f32 -0.5, %v1328
    %v1356 = vadd.f32 %v1355, 1.0
    %v1357 = vmul.f32 %v1356, %v1328
    %v1358 = vand.u32 2147483647, %v1328
    %vm1359 = vcmp.lt.f32.partialorder %v1358, 0.0004427343
    %v1360 = vsel %vm1359, %v1357, %v1354
    %v1361 = vadd.f32 %v1329, 1.0
    %v1362 = vlog2.pop %v1361
    %v1363 = vmul.f32 %v1362, 0.6931472
    %v1364 = vmul.f32 -0.5, %v1329
    %v1365 = vadd.f32 %v1364, 1.0
    %v1366 = vmul.f32 %v1365, %v1329
    %v1367 = vand.u32 2147483647, %v1329
    %vm1368 = vcmp.lt.f32.partialorder %v1367, 0.0004427343
    %v1369 = vsel %vm1368, %v1366, %v1363
    %v1370 = vadd.f32 %v1330, 1.0
    %v1371 = vlog2.pop %v1370
    %v1372 = vmul.f32 %v1371, 0.6931472
    %v1373 = vmul.f32 -0.5, %v1330
    %v1374 = vadd.f32 %v1373, 1.0
    %v1375 = vmul.f32 %v1374, %v1330
    %v1376 = vand.u32 2147483647, %v1330
    %vm1377 = vcmp.lt.f32.partialorder %v1376, 0.0004427343
    %v1378 = vsel %vm1377, %v1375, %v1372
    %v1379 = vadd.f32 %v1331, 1.0
    %v1380 = vlog2.pop %v1379
    %v1381 = vmul.f32 %v1380, 0.6931472
    %v1382 = vmul.f32 -0.5, %v1331
    %v1383 = vadd.f32 %v1382, 1.0
    %v1384 = vmul.f32 %v1383, %v1331
    %v1385 = vand.u32 2147483647, %v1331
    %vm1386 = vcmp.lt.f32.partialorder %v1385, 0.0004427343
    %v1387 = vsel %vm1386, %v1384, %v1381
    %v1388 = vadd.f32 %v1332, 1.0
    %v1389 = vlog2.pop %v1388
    %v1390 = vmul.f32 %v1389, 0.6931472
    %v1391 = vmul.f32 -0.5, %v1332
    %v1392 = vadd.f32 %v1391, 1.0
    %v1393 = vmul.f32 %v1392, %v1332
    %v1394 = vand.u32 2147483647, %v1332
    %vm1395 = vcmp.lt.f32.partialorder %v1394, 0.0004427343
    %v1396 = vsel %vm1395, %v1393, %v1390
    %v1397 = vadd.f32 %v1333, 1.0
    %v1398 = vlog2.pop %v1397
    %v1399 = vmul.f32 %v1398, 0.6931472
    %v1400 = vmul.f32 -0.5, %v1333
    %v1401 = vadd.f32 %v1400, 1.0
    %v1402 = vmul.f32 %v1401, %v1333
    %v1403 = vand.u32 2147483647, %v1333
    %vm1404 = vcmp.lt.f32.partialorder %v1403, 0.0004427343
    %v1405 = vsel %vm1404, %v1402, %v1399
    %v1406 = vadd.f32 %v1334, 1.0
    %v1407 = vlog2.pop %v1406
    %v1408 = vmul.f32 %v1407, 0.6931472
    %v1409 = vmul.f32 -0.5, %v1334
    %v1410 = vadd.f32 %v1409, 1.0
    %v1411 = vmul.f32 %v1410, %v1334
    %v1412 = vand.u32 2147483647, %v1334
    %vm1413 = vcmp.lt.f32.partialorder %v1412, 0.0004427343
    %v1414 = vsel %vm1413, %v1411, %v1408
    %v1415 = vadd.f32 %v1335, 1.0
    %v1416 = vlog2.pop %v1415
    %v1417 = vmul.f32 %v1416, 0.6931472
    %v1418 = vmul.f32 -0.5, %v1335
    %v1419 = vadd.f32 %v1418, 1.0
    %v1420 = vmul.f32 %v1419, %v1335
    %v1421 = vand.u32 2147483647, %v1335
    %vm1422 = vcmp.lt.f32.partialorder %v1421, 0.0004427343
    %v1423 = vsel %vm1422, %v1420, %v1417
    %v1424 = vadd.f32 %v1336, 1.0
    %v1425 = vlog2.pop %v1424
    %v1426 = vmul.f32 %v1425, 0.6931472
    %v1427 = vmul.f32 -0.5, %v1336
    %v1428 = vadd.f32 %v1427, 1.0
    %v1429 = vmul.f32 %v1428, %v1336
    %v1430 = vand.u32 2147483647, %v1336
    %vm1431 = vcmp.lt.f32.partialorder %v1430, 0.0004427343
    %v1432 = vsel %vm1431, %v1429, %v1426
    %v1433 = vadd.f32 %v1337, 1.0
    %v1434 = vlog2.pop %v1433
    %v1435 = vmul.f32 %v1434, 0.6931472
    %v1436 = vmul.f32 -0.5, %v1337
    %v1437 = vadd.f32 %v1436, 1.0
    %v1438 = vmul.f32 %v1437, %v1337
    %v1439 = vand.u32 2147483647, %v1337
    %vm1440 = vcmp.lt.f32.partialorder %v1439, 0.0004427343
    %v1441 = vsel %vm1440, %v1438, %v1435
    %v1442 = vadd.f32 %v1338, 1.0
    %v1443 = vlog2.pop %v1442
    %v1444 = vmul.f32 %v1443, 0.6931472
    %v1445 = vmul.f32 -0.5, %v1338
    %v1446 = vadd.f32 %v1445, 1.0
    %v1447 = vmul.f32 %v1446, %v1338
    %v1448 = vand.u32 2147483647, %v1338
    %vm1449 = vcmp.lt.f32.partialorder %v1448, 0.0004427343
    %v1450 = vsel %vm1449, %v1447, %v1444
    %v1451 = vadd.f32 %v1339, 1.0
    %v1452 = vlog2.pop %v1451
    %v1453 = vmul.f32 %v1452, 0.6931472
    %v1454 = vmul.f32 -0.5, %v1339
    %v1455 = vadd.f32 %v1454, 1.0
    %v1456 = vmul.f32 %v1455, %v1339
    %v1457 = vand.u32 2147483647, %v1339
    %vm1458 = vcmp.lt.f32.partialorder %v1457, 0.0004427343
    %v1459 = vsel %vm1458, %v1456, %v1453
    %v1460 = vadd.f32 %v1340, 1.0
    %v1461 = vlog2.pop %v1460
    %v1462 = vmul.f32 %v1461, 0.6931472
    %v1463 = vmul.f32 -0.5, %v1340
    %v1464 = vadd.f32 %v1463, 1.0
    %v1465 = vmul.f32 %v1464, %v1340
    %v1466 = vand.u32 2147483647, %v1340
    %vm1467 = vcmp.lt.f32.partialorder %v1466, 0.0004427343
    %v1468 = vsel %vm1467, %v1465, %v1462
    %v1469 = vadd.f32 %v1341, 1.0
    %v1470 = vlog2.pop %v1469
    %v1471 = vmul.f32 %v1470, 0.6931472
    %v1472 = vmul.f32 -0.5, %v1341
    %v1473 = vadd.f32 %v1472, 1.0
    %v1474 = vmul.f32 %v1473, %v1341
    %v1475 = vand.u32 2147483647, %v1341
    %vm1476 = vcmp.lt.f32.partialorder %v1475, 0.0004427343
    %v1477 = vsel %vm1476, %v1474, %v1471
    %v1478 = vadd.f32 %v1342, 1.0
    %v1479 = vlog2.pop %v1478
    %v1480 = vmul.f32 %v1479, 0.6931472
    %v1481 = vmul.f32 -0.5, %v1342
    %v1482 = vadd.f32 %v1481, 1.0
    %v1483 = vmul.f32 %v1482, %v1342
    %v1484 = vand.u32 2147483647, %v1342
    %vm1485 = vcmp.lt.f32.partialorder %v1484, 0.0004427343
    %v1486 = vsel %vm1485, %v1483, %v1480
    %v1487 = vsub.f32 1.0, %v1327
    %v1488 = vsub.f32 1.0, %v1328
    %v1489 = vsub.f32 1.0, %v1329
    %v1490 = vsub.f32 1.0, %v1330
    %v1491 = vsub.f32 1.0, %v1331
    %v1492 = vsub.f32 1.0, %v1332
    %v1493 = vsub.f32 1.0, %v1333
    %v1494 = vsub.f32 1.0, %v1334
    %v1495 = vsub.f32 1.0, %v1335
    %v1496 = vsub.f32 1.0, %v1336
    %v1497 = vsub.f32 1.0, %v1337
    %v1498 = vsub.f32 1.0, %v1338
    %v1499 = vsub.f32 1.0, %v1339
    %v1500 = vsub.f32 1.0, %v1340
    %v1501 = vsub.f32 1.0, %v1341
    %v1502 = vsub.f32 1.0, %v1342
    %v1503 = vlog2.pop %v1487
    %v1504 = vmul.f32 %v1503, 0.6931472
    %v1505 = vlog2.pop %v1488
    %v1506 = vmul.f32 %v1505, 0.6931472
    %v1507 = vlog2.pop %v1489
    %v1508 = vmul.f32 %v1507, 0.6931472
    %v1509 = vlog2.pop %v1490
    %v1510 = vmul.f32 %v1509, 0.6931472
    %v1511 = vlog2.pop %v1491
    %v1512 = vmul.f32 %v1511, 0.6931472
    %v1513 = vlog2.pop %v1492
    %v1514 = vmul.f32 %v1513, 0.6931472
    %v1515 = vlog2.pop %v1493
    %v1516 = vmul.f32 %v1515, 0.6931472
    %v1517 = vlog2.pop %v1494
    %v1518 = vmul.f32 %v1517, 0.6931472
    %v1519 = vlog2.pop %v1495
    %v1520 = vmul.f32 %v1519, 0.6931472
    %v1521 = vlog2.pop %v1496
    %v1522 = vmul.f32 %v1521, 0.6931472
    %v1523 = vlog2.pop %v1497
    %v1524 = vmul.f32 %v1523, 0.6931472
    %v1525 = vlog2.pop %v1498
    %v1526 = vmul.f32 %v1525, 0.6931472
    %v1527 = vlog2.pop %v1499
    %v1528 = vmul.f32 %v1527, 0.6931472
    %v1529 = vlog2.pop %v1500
    %v1530 = vmul.f32 %v1529, 0.6931472
    %v1531 = vlog2.pop %v1501
    %v1532 = vmul.f32 %v1531, 0.6931472
    %v1533 = vlog2.pop %v1502
    %v1534 = vmul.f32 %v1533, 0.6931472
    %v1535 = vsub.f32 %v1351, %v1504
    %v1536 = vsub.f32 %v1360, %v1506
    %v1537 = vsub.f32 %v1369, %v1508
    %v1538 = vsub.f32 %v1378, %v1510
    %v1539 = vsub.f32 %v1387, %v1512
    %v1540 = vsub.f32 %v1396, %v1514
    %v1541 = vsub.f32 %v1405, %v1516
    %v1542 = vsub.f32 %v1414, %v1518
    %v1543 = vsub.f32 %v1423, %v1520
    %v1544 = vsub.f32 %v1432, %v1522
    %v1545 = vsub.f32 %v1441, %v1524
    %v1546 = vsub.f32 %v1450, %v1526
    %v1547 = vsub.f32 %v1459, %v1528
    %v1548 = vsub.f32 %v1468, %v1530
    %v1549 = vsub.f32 %v1477, %v1532
    %v1550 = vsub.f32 %v1486, %v1534
    %v1551 = vmul.f32 %v1535, 0.5
    %v1552 = vmul.f32 %v1536, 0.5
    %v1553 = vmul.f32 %v1537, 0.5
    %v1554 = vmul.f32 %v1538, 0.5
    %v1555 = vmul.f32 %v1539, 0.5
    %v1556 = vmul.f32 %v1540, 0.5
    %v1557 = vmul.f32 %v1541, 0.5
    %v1558 = vmul.f32 %v1542, 0.5
    %v1559 = vmul.f32 %v1543, 0.5
    %v1560 = vmul.f32 %v1544, 0.5
    %v1561 = vmul.f32 %v1545, 0.5
    %v1562 = vmul.f32 %v1546, 0.5
    %v1563 = vmul.f32 %v1547, 0.5
    %v1564 = vmul.f32 %v1548, 0.5
    %v1565 = vmul.f32 %v1549, 0.5
    %v1566 = vmul.f32 %v1550, 0.5
    %v1567 = vmul.f32 %v1280, %v1551
    %v1568 = vmul.f32 %v1282, %v1552
    %v1569 = vmul.f32 %v1284, %v1553
    %v1570 = vmul.f32 %v1286, %v1554
    %v1571 = vmul.f32 %v1288, %v1555
    %v1572 = vmul.f32 %v1290, %v1556
    %v1573 = vmul.f32 %v1292, %v1557
    %v1574 = vmul.f32 %v1294, %v1558
    %v1575 = vmul.f32 %v1296, %v1559
    %v1576 = vmul.f32 %v1298, %v1560
    %v1577 = vmul.f32 %v1300, %v1561
    %v1578 = vmul.f32 %v1302, %v1562
    %v1579 = vmul.f32 %v1304, %v1563
    %v1580 = vmul.f32 %v1306, %v1564
    %v1581 = vmul.f32 %v1308, %v1565
    %v1582 = vmul.f32 %v1310, %v1566
    %v1583 = vtanh.pop %v1567
    %v1584 = vtanh.pop %v1568
    %v1585 = vtanh.pop %v1569
    %v1586 = vtanh.pop %v1570
    %v1587 = vtanh.pop %v1571
    %v1588 = vtanh.pop %v1572
    %v1589 = vtanh.pop %v1573
    %v1590 = vtanh.pop %v1574
    %v1591 = vtanh.pop %v1575
    %v1592 = vtanh.pop %v1576
    %v1593 = vtanh.pop %v1577
    %v1594 = vtanh.pop %v1578
    %v1595 = vtanh.pop %v1579
    %v1596 = vtanh.pop %v1580
    %v1597 = vtanh.pop %v1581
    %v1598 = vtanh.pop %v1582
    %v1599 = vmul.f32 %v1583, %v1025
    %v1600 = vmul.f32 %v1584, %v1030
    %v1601 = vmul.f32 %v1585, %v1035
    %v1602 = vmul.f32 %v1586, %v1040
    %v1603 = vmul.f32 %v1587, %v1045
    %v1604 = vmul.f32 %v1588, %v1050
    %v1605 = vmul.f32 %v1589, %v1055
    %v1606 = vmul.f32 %v1590, %v1060
    %v1607 = vmul.f32 %v1591, %v1065
    %v1608 = vmul.f32 %v1592, %v1070
    %v1609 = vmul.f32 %v1593, %v1075
    %v1610 = vmul.f32 %v1594, %v1080
    %v1611 = vmul.f32 %v1595, %v1085
    %v1612 = vmul.f32 %v1596, %v1090
    %v1613 = vmul.f32 %v1597, %v1095
    %v1614 = vmul.f32 %v1598, %v1100
    %v1615 = vrcp.pop %v1263
    %v1616 = vmul.f32 %v1599, %v1615
    %v1617 = vrcp.pop %v1264
    %v1618 = vmul.f32 %v1600, %v1617
    %v1619 = vrcp.pop %v1265
    %v1620 = vmul.f32 %v1601, %v1619
    %v1621 = vrcp.pop %v1266
    %v1622 = vmul.f32 %v1602, %v1621
    %v1623 = vrcp.pop %v1267
    %v1624 = vmul.f32 %v1603, %v1623
    %v1625 = vrcp.pop %v1268
    %v1626 = vmul.f32 %v1604, %v1625
    %v1627 = vrcp.pop %v1269
    %v1628 = vmul.f32 %v1605, %v1627
    %v1629 = vrcp.pop %v1270
    %v1630 = vmul.f32 %v1606, %v1629
    %v1631 = vrcp.pop %v1271
    %v1632 = vmul.f32 %v1607, %v1631
    %v1633 = vrcp.pop %v1272
    %v1634 = vmul.f32 %v1608, %v1633
    %v1635 = vrcp.pop %v1273
    %v1636 = vmul.f32 %v1609, %v1635
    %v1637 = vrcp.pop %v1274
    %v1638 = vmul.f32 %v1610, %v1637
    %v1639 = vrcp.pop %v1275
    %v1640 = vmul.f32 %v1611, %v1639
    %v1641 = vrcp.pop %v1276
    %v1642 = vmul.f32 %v1612, %v1641
    %v1643 = vrcp.pop %v1277
    %v1644 = vmul.f32 %v1613, %v1643
    %v1645 = vrcp.pop %v1278
    %v1646 = vmul.f32 %v1614, %v1645
    %v1647 = vand.u32 2147483647, %v1025
    %v1648 = vand.u32 2147483647, %v1030
    %v1649 = vand.u32 2147483647, %v1035
    %v1650 = vand.u32 2147483647, %v1040
    %v1651 = vand.u32 2147483647, %v1045
    %v1652 = vand.u32 2147483647, %v1050
    %v1653 = vand.u32 2147483647, %v1055
    %v1654 = vand.u32 2147483647, %v1060
    %v1655 = vand.u32 2147483647, %v1065
    %v1656 = vand.u32 2147483647, %v1070
    %v1657 = vand.u32 2147483647, %v1075
    %v1658 = vand.u32 2147483647, %v1080
    %v1659 = vand.u32 2147483647, %v1085
    %v1660 = vand.u32 2147483647, %v1090
    %v1661 = vand.u32 2147483647, %v1095
    %v1662 = vand.u32 2147483647, %v1100
    %1663 = vadd.xlane.f32.xlu0 %v1647
    %v1664 = vpop.xlane.xlu0 %1663
    %1665 = vadd.xlane.f32.xlu0 %v1648
    %v1666 = vpop.xlane.xlu0 %1665
    %1667 = vadd.xlane.f32.xlu0 %v1649
    %v1668 = vpop.xlane.xlu0 %1667
    %1669 = vadd.xlane.f32.xlu0 %v1650
    %v1670 = vpop.xlane.xlu0 %1669
    %1671 = vadd.xlane.f32.xlu0 %v1651
    %v1672 = vpop.xlane.xlu0 %1671
    %1673 = vadd.xlane.f32.xlu0 %v1652
    %v1674 = vpop.xlane.xlu0 %1673
    %1675 = vadd.xlane.f32.xlu0 %v1653
    %v1676 = vpop.xlane.xlu0 %1675
    %1677 = vadd.xlane.f32.xlu0 %v1654
    %v1678 = vpop.xlane.xlu0 %1677
    %1679 = vadd.xlane.f32.xlu0 %v1655
    %v1680 = vpop.xlane.xlu0 %1679
    %1681 = vadd.xlane.f32.xlu0 %v1656
    %v1682 = vpop.xlane.xlu0 %1681
    %1683 = vadd.xlane.f32.xlu0 %v1657
    %v1684 = vpop.xlane.xlu0 %1683
    %1685 = vadd.xlane.f32.xlu0 %v1658
    %v1686 = vpop.xlane.xlu0 %1685
    %1687 = vadd.xlane.f32.xlu0 %v1659
    %v1688 = vpop.xlane.xlu0 %1687
    %1689 = vadd.xlane.f32.xlu0 %v1660
    %v1690 = vpop.xlane.xlu0 %1689
    %1691 = vadd.xlane.f32.xlu0 %v1661
    %v1692 = vpop.xlane.xlu0 %1691
    %1693 = vadd.xlane.f32.xlu0 %v1662
    %v1694 = vpop.xlane.xlu0 %1693
    %vm1695 = vcmp.eq.f32.partialorder %v1664, 0.0
    %vm1696 = vcmp.eq.f32.partialorder %v1666, 0.0
    %vm1697 = vcmp.eq.f32.partialorder %v1668, 0.0
    %vm1698 = vcmp.eq.f32.partialorder %v1670, 0.0
    %vm1699 = vcmp.eq.f32.partialorder %v1672, 0.0
    %vm1700 = vcmp.eq.f32.partialorder %v1674, 0.0
    %vm1701 = vcmp.eq.f32.partialorder %v1676, 0.0
    %vm1702 = vcmp.eq.f32.partialorder %v1678, 0.0
    %vm1703 = vcmp.eq.f32.partialorder %v1680, 0.0
    %vm1704 = vcmp.eq.f32.partialorder %v1682, 0.0
    %vm1705 = vcmp.eq.f32.partialorder %v1684, 0.0
    %vm1706 = vcmp.eq.f32.partialorder %v1686, 0.0
    %vm1707 = vcmp.eq.f32.partialorder %v1688, 0.0
    %vm1708 = vcmp.eq.f32.partialorder %v1690, 0.0
    %vm1709 = vcmp.eq.f32.partialorder %v1692, 0.0
    %vm1710 = vcmp.eq.f32.partialorder %v1694, 0.0
    %v1711 = vsel %vm1695, 1, 0
    %v1712 = vsel %vm1696, 1, 0
    %v1713 = vsel %vm1697, 1, 0
    %v1714 = vsel %vm1698, 1, 0
    %v1715 = vsel %vm1699, 1, 0
    %v1716 = vsel %vm1700, 1, 0
    %v1717 = vsel %vm1701, 1, 0
    %v1718 = vsel %vm1702, 1, 0
    %v1719 = vsel %vm1703, 1, 0
    %v1720 = vsel %vm1704, 1, 0
    %v1721 = vsel %vm1705, 1, 0
    %v1722 = vsel %vm1706, 1, 0
    %v1723 = vsel %vm1707, 1, 0
    %v1724 = vsel %vm1708, 1, 0
    %v1725 = vsel %vm1709, 1, 0
    %v1726 = vsel %vm1710, 1, 0
    %vm1727 = vcmp.eq.s32.totalorder %v1711, 1
    %vm1728 = vcmp.eq.s32.totalorder %v1712, 1
    %vm1729 = vcmp.eq.s32.totalorder %v1713, 1
    %vm1730 = vcmp.eq.s32.totalorder %v1714, 1
    %vm1731 = vcmp.eq.s32.totalorder %v1715, 1
    %vm1732 = vcmp.eq.s32.totalorder %v1716, 1
    %vm1733 = vcmp.eq.s32.totalorder %v1717, 1
    %vm1734 = vcmp.eq.s32.totalorder %v1718, 1
    %vm1735 = vcmp.eq.s32.totalorder %v1719, 1
    %vm1736 = vcmp.eq.s32.totalorder %v1720, 1
    %vm1737 = vcmp.eq.s32.totalorder %v1721, 1
    %vm1738 = vcmp.eq.s32.totalorder %v1722, 1
    %vm1739 = vcmp.eq.s32.totalorder %v1723, 1
    %vm1740 = vcmp.eq.s32.totalorder %v1724, 1
    %vm1741 = vcmp.eq.s32.totalorder %v1725, 1
    %vm1742 = vcmp.eq.s32.totalorder %v1726, 1
    %v1743 = vsel %vm1727, 0.0, %v1616
    %v1744 = vsel %vm1728, 0.0, %v1618
    %v1745 = vsel %vm1729, 0.0, %v1620
    %v1746 = vsel %vm1730, 0.0, %v1622
    %v1747 = vsel %vm1731, 0.0, %v1624
    %v1748 = vsel %vm1732, 0.0, %v1626
    %v1749 = vsel %vm1733, 0.0, %v1628
    %v1750 = vsel %vm1734, 0.0, %v1630
    %v1751 = vsel %vm1735, 0.0, %v1632
    %v1752 = vsel %vm1736, 0.0, %v1634
    %v1753 = vsel %vm1737, 0.0, %v1636
    %v1754 = vsel %vm1738, 0.0, %v1638
    %v1755 = vsel %vm1739, 0.0, %v1640
    %v1756 = vsel %vm1740, 0.0, %v1642
    %v1757 = vsel %vm1741, 0.0, %v1644
    %v1758 = vsel %vm1742, 0.0, %v1646
    %v1759 = vmul.f32 %v1743, %v1743
    %v1760 = vmul.f32 %v1744, %v1744
    %v1761 = vmul.f32 %v1745, %v1745
    %v1762 = vmul.f32 %v1746, %v1746
    %v1763 = vmul.f32 %v1747, %v1747
    %v1764 = vmul.f32 %v1748, %v1748
    %v1765 = vmul.f32 %v1749, %v1749
    %v1766 = vmul.f32 %v1750, %v1750
    %v1767 = vmul.f32 %v1751, %v1751
    %v1768 = vmul.f32 %v1752, %v1752
    %v1769 = vmul.f32 %v1753, %v1753
    %v1770 = vmul.f32 %v1754, %v1754
    %v1771 = vmul.f32 %v1755, %v1755
    %v1772 = vmul.f32 %v1756, %v1756
    %v1773 = vmul.f32 %v1757, %v1757
    %v1774 = vmul.f32 %v1758, %v1758
    %1775 = vadd.xlane.f32.xlu0 %v1759
    %v1776 = vpop.xlane.xlu0 %1775
    %1777 = vadd.xlane.f32.xlu0 %v1760
    %v1778 = vpop.xlane.xlu0 %1777
    %1779 = vadd.xlane.f32.xlu0 %v1761
    %v1780 = vpop.xlane.xlu0 %1779
    %1781 = vadd.xlane.f32.xlu0 %v1762
    %v1782 = vpop.xlane.xlu0 %1781
    %1783 = vadd.xlane.f32.xlu0 %v1763
    %v1784 = vpop.xlane.xlu0 %1783
    %1785 = vadd.xlane.f32.xlu0 %v1764
    %v1786 = vpop.xlane.xlu0 %1785
    %1787 = vadd.xlane.f32.xlu0 %v1765
    %v1788 = vpop.xlane.xlu0 %1787
    %1789 = vadd.xlane.f32.xlu0 %v1766
    %v1790 = vpop.xlane.xlu0 %1789
    %1791 = vadd.xlane.f32.xlu0 %v1767
    %v1792 = vpop.xlane.xlu0 %1791
    %1793 = vadd.xlane.f32.xlu0 %v1768
    %v1794 = vpop.xlane.xlu0 %1793
    %1795 = vadd.xlane.f32.xlu0 %v1769
    %v1796 = vpop.xlane.xlu0 %1795
    %1797 = vadd.xlane.f32.xlu0 %v1770
    %v1798 = vpop.xlane.xlu0 %1797
    %1799 = vadd.xlane.f32.xlu0 %v1771
    %v1800 = vpop.xlane.xlu0 %1799
    %1801 = vadd.xlane.f32.xlu0 %v1772
    %v1802 = vpop.xlane.xlu0 %1801
    %1803 = vadd.xlane.f32.xlu0 %v1773
    %v1804 = vpop.xlane.xlu0 %1803
    %1805 = vadd.xlane.f32.xlu0 %v1774
    %v1806 = vpop.xlane.xlu0 %1805
    %v1807 = vrsqrt.pop %v1776
    %v1808 = vmul.f32 %v1776, %v1807
    %vm1809 = vcmp.eq.f32.partialorder %v1776, inf
    %v1810 = vsel %vm1809, %v1776, %v1808
    %vm1811 = vcmp.eq.f32.partialorder %v1776, 0.0
    %v1812 = vand.u32 %v1776, 2147483648
    %v1813 = vsel %vm1811, %v1812, %v1810
    %v1814 = vrsqrt.pop %v1778
    %v1815 = vmul.f32 %v1778, %v1814
    %vm1816 = vcmp.eq.f32.partialorder %v1778, inf
    %v1817 = vsel %vm1816, %v1778, %v1815
    %vm1818 = vcmp.eq.f32.partialorder %v1778, 0.0
    %v1819 = vand.u32 %v1778, 2147483648
    %v1820 = vsel %vm1818, %v1819, %v1817
    %v1821 = vrsqrt.pop %v1780
    %v1822 = vmul.f32 %v1780, %v1821
    %vm1823 = vcmp.eq.f32.partialorder %v1780, inf
    %v1824 = vsel %vm1823, %v1780, %v1822
    %vm1825 = vcmp.eq.f32.partialorder %v1780, 0.0
    %v1826 = vand.u32 %v1780, 2147483648
    %v1827 = vsel %vm1825, %v1826, %v1824
    %v1828 = vrsqrt.pop %v1782
    %v1829 = vmul.f32 %v1782, %v1828
    %vm1830 = vcmp.eq.f32.partialorder %v1782, inf
    %v1831 = vsel %vm1830, %v1782, %v1829
    %vm1832 = vcmp.eq.f32.partialorder %v1782, 0.0
    %v1833 = vand.u32 %v1782, 2147483648
    %v1834 = vsel %vm1832, %v1833, %v1831
    %v1835 = vrsqrt.pop %v1784
    %v1836 = vmul.f32 %v1784, %v1835
    %vm1837 = vcmp.eq.f32.partialorder %v1784, inf
    %v1838 = vsel %vm1837, %v1784, %v1836
    %vm1839 = vcmp.eq.f32.partialorder %v1784, 0.0
    %v1840 = vand.u32 %v1784, 2147483648
    %v1841 = vsel %vm1839, %v1840, %v1838
    %v1842 = vrsqrt.pop %v1786
    %v1843 = vmul.f32 %v1786, %v1842
    %vm1844 = vcmp.eq.f32.partialorder %v1786, inf
    %v1845 = vsel %vm1844, %v1786, %v1843
    %vm1846 = vcmp.eq.f32.partialorder %v1786, 0.0
    %v1847 = vand.u32 %v1786, 2147483648
    %v1848 = vsel %vm1846, %v1847, %v1845
    %v1849 = vrsqrt.pop %v1788
    %v1850 = vmul.f32 %v1788, %v1849
    %vm1851 = vcmp.eq.f32.partialorder %v1788, inf
    %v1852 = vsel %vm1851, %v1788, %v1850
    %vm1853 = vcmp.eq.f32.partialorder %v1788, 0.0
    %v1854 = vand.u32 %v1788, 2147483648
    %v1855 = vsel %vm1853, %v1854, %v1852
    %v1856 = vrsqrt.pop %v1790
    %v1857 = vmul.f32 %v1790, %v1856
    %vm1858 = vcmp.eq.f32.partialorder %v1790, inf
    %v1859 = vsel %vm1858, %v1790, %v1857
    %vm1860 = vcmp.eq.f32.partialorder %v1790, 0.0
    %v1861 = vand.u32 %v1790, 2147483648
    %v1862 = vsel %vm1860, %v1861, %v1859
    %v1863 = vrsqrt.pop %v1792
    %v1864 = vmul.f32 %v1792, %v1863
    %vm1865 = vcmp.eq.f32.partialorder %v1792, inf
    %v1866 = vsel %vm1865, %v1792, %v1864
    %vm1867 = vcmp.eq.f32.partialorder %v1792, 0.0
    %v1868 = vand.u32 %v1792, 2147483648
    %v1869 = vsel %vm1867, %v1868, %v1866
    %v1870 = vrsqrt.pop %v1794
    %v1871 = vmul.f32 %v1794, %v1870
    %vm1872 = vcmp.eq.f32.partialorder %v1794, inf
    %v1873 = vsel %vm1872, %v1794, %v1871
    %vm1874 = vcmp.eq.f32.partialorder %v1794, 0.0
    %v1875 = vand.u32 %v1794, 2147483648
    %v1876 = vsel %vm1874, %v1875, %v1873
    %v1877 = vrsqrt.pop %v1796
    %v1878 = vmul.f32 %v1796, %v1877
    %vm1879 = vcmp.eq.f32.partialorder %v1796, inf
    %v1880 = vsel %vm1879, %v1796, %v1878
    %vm1881 = vcmp.eq.f32.partialorder %v1796, 0.0
    %v1882 = vand.u32 %v1796, 2147483648
    %v1883 = vsel %vm1881, %v1882, %v1880
    %v1884 = vrsqrt.pop %v1798
    %v1885 = vmul.f32 %v1798, %v1884
    %vm1886 = vcmp.eq.f32.partialorder %v1798, inf
    %v1887 = vsel %vm1886, %v1798, %v1885
    %vm1888 = vcmp.eq.f32.partialorder %v1798, 0.0
    %v1889 = vand.u32 %v1798, 2147483648
    %v1890 = vsel %vm1888, %v1889, %v1887
    %v1891 = vrsqrt.pop %v1800
    %v1892 = vmul.f32 %v1800, %v1891
    %vm1893 = vcmp.eq.f32.partialorder %v1800, inf
    %v1894 = vsel %vm1893, %v1800, %v1892
    %vm1895 = vcmp.eq.f32.partialorder %v1800, 0.0
    %v1896 = vand.u32 %v1800, 2147483648
    %v1897 = vsel %vm1895, %v1896, %v1894
    %v1898 = vrsqrt.pop %v1802
    %v1899 = vmul.f32 %v1802, %v1898
    %vm1900 = vcmp.eq.f32.partialorder %v1802, inf
    %v1901 = vsel %vm1900, %v1802, %v1899
    %vm1902 = vcmp.eq.f32.partialorder %v1802, 0.0
    %v1903 = vand.u32 %v1802, 2147483648
    %v1904 = vsel %vm1902, %v1903, %v1901
    %v1905 = vrsqrt.pop %v1804
    %v1906 = vmul.f32 %v1804, %v1905
    %vm1907 = vcmp.eq.f32.partialorder %v1804, inf
    %v1908 = vsel %vm1907, %v1804, %v1906
    %vm1909 = vcmp.eq.f32.partialorder %v1804, 0.0
    %v1910 = vand.u32 %v1804, 2147483648
    %v1911 = vsel %vm1909, %v1910, %v1908
    %v1912 = vrsqrt.pop %v1806
    %v1913 = vmul.f32 %v1806, %v1912
    %vm1914 = vcmp.eq.f32.partialorder %v1806, inf
    %v1915 = vsel %vm1914, %v1806, %v1913
    %vm1916 = vcmp.eq.f32.partialorder %v1806, 0.0
    %v1917 = vand.u32 %v1806, 2147483648
    %v1918 = vsel %vm1916, %v1917, %v1915
    %v1919 = vmax.f32 %v1813, 1e-15
    %v1920 = vmax.f32 %v1820, 1e-15
    %v1921 = vmax.f32 %v1827, 1e-15
    %v1922 = vmax.f32 %v1834, 1e-15
    %v1923 = vmax.f32 %v1841, 1e-15
    %v1924 = vmax.f32 %v1848, 1e-15
    %v1925 = vmax.f32 %v1855, 1e-15
    %v1926 = vmax.f32 %v1862, 1e-15
    %v1927 = vmax.f32 %v1869, 1e-15
    %v1928 = vmax.f32 %v1876, 1e-15
    %v1929 = vmax.f32 %v1883, 1e-15
    %v1930 = vmax.f32 %v1890, 1e-15
    %v1931 = vmax.f32 %v1897, 1e-15
    %v1932 = vmax.f32 %v1904, 1e-15
    %v1933 = vmax.f32 %v1911, 1e-15
    %v1934 = vmax.f32 %v1918, 1e-15
    %vm1935 = vcmp.gt.f32.partialorder %v1919, 0.996
    %vm1936 = vcmp.gt.f32.partialorder %v1920, 0.996
    %vm1937 = vcmp.gt.f32.partialorder %v1921, 0.996
    %vm1938 = vcmp.gt.f32.partialorder %v1922, 0.996
    %vm1939 = vcmp.gt.f32.partialorder %v1923, 0.996
    %vm1940 = vcmp.gt.f32.partialorder %v1924, 0.996
    %vm1941 = vcmp.gt.f32.partialorder %v1925, 0.996
    %vm1942 = vcmp.gt.f32.partialorder %v1926, 0.996
    %vm1943 = vcmp.gt.f32.partialorder %v1927, 0.996
    %vm1944 = vcmp.gt.f32.partialorder %v1928, 0.996
    %vm1945 = vcmp.gt.f32.partialorder %v1929, 0.996
    %vm1946 = vcmp.gt.f32.partialorder %v1930, 0.996
    %vm1947 = vcmp.gt.f32.partialorder %v1931, 0.996
    %vm1948 = vcmp.gt.f32.partialorder %v1932, 0.996
    %vm1949 = vcmp.gt.f32.partialorder %v1933, 0.996
    %vm1950 = vcmp.gt.f32.partialorder %v1934, 0.996
    %v1951 = vrcp.pop %v1919
    %v1952 = vmul.f32 %v1743, %v1951
    %v1953 = vrcp.pop %v1920
    %v1954 = vmul.f32 %v1744, %v1953
    %v1955 = vrcp.pop %v1921
    %v1956 = vmul.f32 %v1745, %v1955
    %v1957 = vrcp.pop %v1922
    %v1958 = vmul.f32 %v1746, %v1957
    %v1959 = vrcp.pop %v1923
    %v1960 = vmul.f32 %v1747, %v1959
    %v1961 = vrcp.pop %v1924
    %v1962 = vmul.f32 %v1748, %v1961
    %v1963 = vrcp.pop %v1925
    %v1964 = vmul.f32 %v1749, %v1963
    %v1965 = vrcp.pop %v1926
    %v1966 = vmul.f32 %v1750, %v1965
    %v1967 = vrcp.pop %v1927
    %v1968 = vmul.f32 %v1751, %v1967
    %v1969 = vrcp.pop %v1928
    %v1970 = vmul.f32 %v1752, %v1969
    %v1971 = vrcp.pop %v1929
    %v1972 = vmul.f32 %v1753, %v1971
    %v1973 = vrcp.pop %v1930
    %v1974 = vmul.f32 %v1754, %v1973
    %v1975 = vrcp.pop %v1931
    %v1976 = vmul.f32 %v1755, %v1975
    %v1977 = vrcp.pop %v1932
    %v1978 = vmul.f32 %v1756, %v1977
    %v1979 = vrcp.pop %v1933
    %v1980 = vmul.f32 %v1757, %v1979
    %v1981 = vrcp.pop %v1934
    %v1982 = vmul.f32 %v1758, %v1981
    %v1983 = vmul.f32 %v1952, 0.996
    %v1984 = vmul.f32 %v1954, 0.996
    %v1985 = vmul.f32 %v1956, 0.996
    %v1986 = vmul.f32 %v1958, 0.996
    %v1987 = vmul.f32 %v1960, 0.996
    %v1988 = vmul.f32 %v1962, 0.996
    %v1989 = vmul.f32 %v1964, 0.996
    %v1990 = vmul.f32 %v1966, 0.996
    %v1991 = vmul.f32 %v1968, 0.996
    %v1992 = vmul.f32 %v1970, 0.996
    %v1993 = vmul.f32 %v1972, 0.996
    %v1994 = vmul.f32 %v1974, 0.996
    %v1995 = vmul.f32 %v1976, 0.996
    %v1996 = vmul.f32 %v1978, 0.996
    %v1997 = vmul.f32 %v1980, 0.996
    %v1998 = vmul.f32 %v1982, 0.996
    %v1999 = vsel %vm1935, 1, 0
    %v2000 = vsel %vm1936, 1, 0
    %v2001 = vsel %vm1937, 1, 0
    %v2002 = vsel %vm1938, 1, 0
    %v2003 = vsel %vm1939, 1, 0
    %v2004 = vsel %vm1940, 1, 0
    %v2005 = vsel %vm1941, 1, 0
    %v2006 = vsel %vm1942, 1, 0
    %v2007 = vsel %vm1943, 1, 0
    %v2008 = vsel %vm1944, 1, 0
    %v2009 = vsel %vm1945, 1, 0
    %v2010 = vsel %vm1946, 1, 0
    %v2011 = vsel %vm1947, 1, 0
    %v2012 = vsel %vm1948, 1, 0
    %v2013 = vsel %vm1949, 1, 0
    %v2014 = vsel %vm1950, 1, 0
    %vm2015 = vcmp.eq.s32.totalorder %v1999, 1
    %vm2016 = vcmp.eq.s32.totalorder %v2000, 1
    %vm2017 = vcmp.eq.s32.totalorder %v2001, 1
    %vm2018 = vcmp.eq.s32.totalorder %v2002, 1
    %vm2019 = vcmp.eq.s32.totalorder %v2003, 1
    %vm2020 = vcmp.eq.s32.totalorder %v2004, 1
    %vm2021 = vcmp.eq.s32.totalorder %v2005, 1
    %vm2022 = vcmp.eq.s32.totalorder %v2006, 1
    %vm2023 = vcmp.eq.s32.totalorder %v2007, 1
    %vm2024 = vcmp.eq.s32.totalorder %v2008, 1
    %vm2025 = vcmp.eq.s32.totalorder %v2009, 1
    %vm2026 = vcmp.eq.s32.totalorder %v2010, 1
    %vm2027 = vcmp.eq.s32.totalorder %v2011, 1
    %vm2028 = vcmp.eq.s32.totalorder %v2012, 1
    %vm2029 = vcmp.eq.s32.totalorder %v2013, 1
    %vm2030 = vcmp.eq.s32.totalorder %v2014, 1
    %v2031 = vsel %vm2015, %v1983, %v1743
    %v2032 = vsel %vm2016, %v1984, %v1744
    %v2033 = vsel %vm2017, %v1985, %v1745
    %v2034 = vsel %vm2018, %v1986, %v1746
    %v2035 = vsel %vm2019, %v1987, %v1747
    %v2036 = vsel %vm2020, %v1988, %v1748
    %v2037 = vsel %vm2021, %v1989, %v1749
    %v2038 = vsel %vm2022, %v1990, %v1750
    %v2039 = vsel %vm2023, %v1991, %v1751
    %v2040 = vsel %vm2024, %v1992, %v1752
    %v2041 = vsel %vm2025, %v1993, %v1753
    %v2042 = vsel %vm2026, %v1994, %v1754
    %v2043 = vsel %vm2027, %v1995, %v1755
    %v2044 = vsel %vm2028, %v1996, %v1756
    %v2045 = vsel %vm2029, %v1997, %v1757
    %v2046 = vsel %vm2030, %v1998, %v1758
    %v2047 = vld [vmem:[%s4] sm:$0x1]
    %v2048 = vmul.f32 %v2047, %v2047
    %vm2049 = vcmask 1040384
    %v2050 = vsel %vm2049, %v2048, 0.0
    %2051 = vadd.xlane.f32.xlu0 %v2050
    %v2052 = vpop.xlane.xlu0 %2051
    %v2053 = vrsqrt.pop %v2052
    %v2054 = vmul.f32 %v2052, %v2053
    %vm2055 = vcmp.eq.f32.partialorder %v2052, inf
    %v2056 = vsel %vm2055, %v2052, %v2054
    %vm2057 = vcmp.eq.f32.partialorder %v2052, 0.0
    %v2058 = vand.u32 %v2052, 2147483648
    %v2059 = vsel %vm2057, %v2058, %v2056
    %v2060 = vmax.f32 %v2059, 1e-15
    %v2061 = vtanh.pop %v2060
    %v2062 = vmul.f32 %v2061, %v2047
    %v2063 = vrcp.pop %v2060
    %v2064 = vmul.f32 %v2062, %v2063
    %v2065 = vmul.f32 %v2064, %v2064
    %v2066 = vsel %vm2049, %v2065, 0.0
    %2067 = vadd.xlane.f32.xlu0 %v2066
    %v2068 = vpop.xlane.xlu0 %2067
    %v2069 = vrsqrt.pop %v2068
    %v2070 = vmul.f32 %v2068, %v2069
    %vm2071 = vcmp.eq.f32.partialorder %v2068, inf
    %v2072 = vsel %vm2071, %v2068, %v2070
    %vm2073 = vcmp.eq.f32.partialorder %v2068, 0.0
    %v2074 = vand.u32 %v2068, 2147483648
    %v2075 = vsel %vm2073, %v2074, %v2072
    %v2076 = vmax.f32 %v2075, 1e-15
    %vm2077 = vcmp.gt.f32.partialorder %v2076, 0.996
    %v2078 = vrcp.pop %v2076
    %v2079 = vmul.f32 %v2064, %v2078
    %v2080 = vmul.f32 %v2079, 0.996
    %v2081 = vsel %vm2077, 1, 0
    %vm2082 = vcmp.eq.s32.totalorder %v2081, 1
    %v2083 = vsel %vm2082, %v2080, %v2064
    %v2084 = vmul.f32 %v2031, %v2031
    %v2085 = vmul.f32 %v2032, %v2032
    %v2086 = vmul.f32 %v2033, %v2033
    %v2087 = vmul.f32 %v2034, %v2034
    %v2088 = vmul.f32 %v2035, %v2035
    %v2089 = vmul.f32 %v2036, %v2036
    %v2090 = vmul.f32 %v2037, %v2037
    %v2091 = vmul.f32 %v2038, %v2038
    %v2092 = vmul.f32 %v2039, %v2039
    %v2093 = vmul.f32 %v2040, %v2040
    %v2094 = vmul.f32 %v2041, %v2041
    %v2095 = vmul.f32 %v2042, %v2042
    %v2096 = vmul.f32 %v2043, %v2043
    %v2097 = vmul.f32 %v2044, %v2044
    %v2098 = vmul.f32 %v2045, %v2045
    %v2099 = vmul.f32 %v2046, %v2046
    %2100 = vadd.xlane.f32.xlu0 %v2084
    %v2101 = vpop.xlane.xlu0 %2100
    %2102 = vadd.xlane.f32.xlu0 %v2085
    %v2103 = vpop.xlane.xlu0 %2102
    %2104 = vadd.xlane.f32.xlu0 %v2086
    %v2105 = vpop.xlane.xlu0 %2104
    %2106 = vadd.xlane.f32.xlu0 %v2087
    %v2107 = vpop.xlane.xlu0 %2106
    %2108 = vadd.xlane.f32.xlu0 %v2088
    %v2109 = vpop.xlane.xlu0 %2108
    %2110 = vadd.xlane.f32.xlu0 %v2089
    %v2111 = vpop.xlane.xlu0 %2110
    %2112 = vadd.xlane.f32.xlu0 %v2090
    %v2113 = vpop.xlane.xlu0 %2112
    %2114 = vadd.xlane.f32.xlu0 %v2091
    %v2115 = vpop.xlane.xlu0 %2114
    %2116 = vadd.xlane.f32.xlu0 %v2092
    %v2117 = vpop.xlane.xlu0 %2116
    %2118 = vadd.xlane.f32.xlu0 %v2093
    %v2119 = vpop.xlane.xlu0 %2118
    %2120 = vadd.xlane.f32.xlu0 %v2094
    %v2121 = vpop.xlane.xlu0 %2120
    %2122 = vadd.xlane.f32.xlu0 %v2095
    %v2123 = vpop.xlane.xlu0 %2122
    %2124 = vadd.xlane.f32.xlu0 %v2096
    %v2125 = vpop.xlane.xlu0 %2124
    %2126 = vadd.xlane.f32.xlu0 %v2097
    %v2127 = vpop.xlane.xlu0 %2126
    %2128 = vadd.xlane.f32.xlu0 %v2098
    %v2129 = vpop.xlane.xlu0 %2128
    %2130 = vadd.xlane.f32.xlu0 %v2099
    %v2131 = vpop.xlane.xlu0 %2130
    %v2132 = vmul.f32 %v2083, %v2083
    %v2133 = vsel %vm2049, %v2132, 0.0
    %2134 = vadd.xlane.f32.xlu0 %v2133
    %v2135 = vpop.xlane.xlu0 %2134
    %v2136 = vlaneseq
    %v2137 = vshrl.u32 %v2136, 7
    %v2138 = vsub.s32 0, %v2137
    %v2139 = vrot.slane %v2083, %v2138
    %v2140 = vmul.f32 %v2031, %v2139
    %v2141 = vmul.f32 %v2032, %v2139
    %v2142 = vmul.f32 %v2033, %v2139
    %v2143 = vmul.f32 %v2034, %v2139
    %v2144 = vmul.f32 %v2035, %v2139
    %v2145 = vmul.f32 %v2036, %v2139
    %v2146 = vmul.f32 %v2037, %v2139
    %v2147 = vmul.f32 %v2038, %v2139
    %v2148 = vmul.f32 %v2039, %v2139
    %v2149 = vmul.f32 %v2040, %v2139
    %v2150 = vmul.f32 %v2041, %v2139
    %v2151 = vmul.f32 %v2042, %v2139
    %v2152 = vmul.f32 %v2043, %v2139
    %v2153 = vmul.f32 %v2044, %v2139
    %v2154 = vmul.f32 %v2045, %v2139
    %v2155 = vmul.f32 %v2046, %v2139
    %2156 = vadd.xlane.f32.xlu0 %v2140
    %v2157 = vpop.xlane.xlu0 %2156
    %2158 = vadd.xlane.f32.xlu0 %v2141
    %v2159 = vpop.xlane.xlu0 %2158
    %2160 = vadd.xlane.f32.xlu0 %v2142
    %v2161 = vpop.xlane.xlu0 %2160
    %2162 = vadd.xlane.f32.xlu0 %v2143
    %v2163 = vpop.xlane.xlu0 %2162
    %2164 = vadd.xlane.f32.xlu0 %v2144
    %v2165 = vpop.xlane.xlu0 %2164
    %2166 = vadd.xlane.f32.xlu0 %v2145
    %v2167 = vpop.xlane.xlu0 %2166
    %2168 = vadd.xlane.f32.xlu0 %v2146
    %v2169 = vpop.xlane.xlu0 %2168
    %2170 = vadd.xlane.f32.xlu0 %v2147
    %v2171 = vpop.xlane.xlu0 %2170
    %2172 = vadd.xlane.f32.xlu0 %v2148
    %v2173 = vpop.xlane.xlu0 %2172
    %2174 = vadd.xlane.f32.xlu0 %v2149
    %v2175 = vpop.xlane.xlu0 %2174
    %2176 = vadd.xlane.f32.xlu0 %v2150
    %v2177 = vpop.xlane.xlu0 %2176
    %2178 = vadd.xlane.f32.xlu0 %v2151
    %v2179 = vpop.xlane.xlu0 %2178
    %2180 = vadd.xlane.f32.xlu0 %v2152
    %v2181 = vpop.xlane.xlu0 %2180
    %2182 = vadd.xlane.f32.xlu0 %v2153
    %v2183 = vpop.xlane.xlu0 %2182
    %2184 = vadd.xlane.f32.xlu0 %v2154
    %v2185 = vpop.xlane.xlu0 %2184
    %2186 = vadd.xlane.f32.xlu0 %v2155
    %v2187 = vpop.xlane.xlu0 %2186
    %v2188 = vmul.f32 %v2157, 2.0
    %v2189 = vmul.f32 %v2159, 2.0
    %v2190 = vmul.f32 %v2161, 2.0
    %v2191 = vmul.f32 %v2163, 2.0
    %v2192 = vmul.f32 %v2165, 2.0
    %v2193 = vmul.f32 %v2167, 2.0
    %v2194 = vmul.f32 %v2169, 2.0
    %v2195 = vmul.f32 %v2171, 2.0
    %v2196 = vmul.f32 %v2173, 2.0
    %v2197 = vmul.f32 %v2175, 2.0
    %v2198 = vmul.f32 %v2177, 2.0
    %v2199 = vmul.f32 %v2179, 2.0
    %v2200 = vmul.f32 %v2181, 2.0
    %v2201 = vmul.f32 %v2183, 2.0
    %v2202 = vmul.f32 %v2185, 2.0
    %v2203 = vmul.f32 %v2187, 2.0
    %v2204 = vadd.f32 %v2188, 1.0
    %v2205 = vadd.f32 %v2189, 1.0
    %v2206 = vadd.f32 %v2190, 1.0
    %v2207 = vadd.f32 %v2191, 1.0
    %v2208 = vadd.f32 %v2192, 1.0
    %v2209 = vadd.f32 %v2193, 1.0
    %v2210 = vadd.f32 %v2194, 1.0
    %v2211 = vadd.f32 %v2195, 1.0
    %v2212 = vadd.f32 %v2196, 1.0
    %v2213 = vadd.f32 %v2197, 1.0
    %v2214 = vadd.f32 %v2198, 1.0
    %v2215 = vadd.f32 %v2199, 1.0
    %v2216 = vadd.f32 %v2200, 1.0
    %v2217 = vadd.f32 %v2201, 1.0
    %v2218 = vadd.f32 %v2202, 1.0
    %v2219 = vadd.f32 %v2203, 1.0
    %v2220 = vlaneseq
    %v2221 = vshrl.u32 %v2220, 7
    %v2222 = vsub.s32 0, %v2221
    %v2223 = vrot.slane %v2135, %v2222
    %v2224 = vadd.f32 %v2204, %v2223
    %v2225 = vadd.f32 %v2205, %v2223
    %v2226 = vadd.f32 %v2206, %v2223
    %v2227 = vadd.f32 %v2207, %v2223
    %v2228 = vadd.f32 %v2208, %v2223
    %v2229 = vadd.f32 %v2209, %v2223
    %v2230 = vadd.f32 %v2210, %v2223
    %v2231 = vadd.f32 %v2211, %v2223
    %v2232 = vadd.f32 %v2212, %v2223
    %v2233 = vadd.f32 %v2213, %v2223
    %v2234 = vadd.f32 %v2214, %v2223
    %v2235 = vadd.f32 %v2215, %v2223
    %v2236 = vadd.f32 %v2216, %v2223
    %v2237 = vadd.f32 %v2217, %v2223
    %v2238 = vadd.f32 %v2218, %v2223
    %v2239 = vadd.f32 %v2219, %v2223
    %v2240 = vmul.f32 %v2224, %v2031
    %v2241 = vmul.f32 %v2225, %v2032
    %v2242 = vmul.f32 %v2226, %v2033
    %v2243 = vmul.f32 %v2227, %v2034
    %v2244 = vmul.f32 %v2228, %v2035
    %v2245 = vmul.f32 %v2229, %v2036
    %v2246 = vmul.f32 %v2230, %v2037
    %v2247 = vmul.f32 %v2231, %v2038
    %v2248 = vmul.f32 %v2232, %v2039
    %v2249 = vmul.f32 %v2233, %v2040
    %v2250 = vmul.f32 %v2234, %v2041
    %v2251 = vmul.f32 %v2235, %v2042
    %v2252 = vmul.f32 %v2236, %v2043
    %v2253 = vmul.f32 %v2237, %v2044
    %v2254 = vmul.f32 %v2238, %v2045
    %v2255 = vmul.f32 %v2239, %v2046
    %v2256 = vsub.f32 1.0, %v2101
    %v2257 = vsub.f32 1.0, %v2103
    %v2258 = vsub.f32 1.0, %v2105
    %v2259 = vsub.f32 1.0, %v2107
    %v2260 = vsub.f32 1.0, %v2109
    %v2261 = vsub.f32 1.0, %v2111
    %v2262 = vsub.f32 1.0, %v2113
    %v2263 = vsub.f32 1.0, %v2115
    %v2264 = vsub.f32 1.0, %v2117
    %v2265 = vsub.f32 1.0, %v2119
    %v2266 = vsub.f32 1.0, %v2121
    %v2267 = vsub.f32 1.0, %v2123
    %v2268 = vsub.f32 1.0, %v2125
    %v2269 = vsub.f32 1.0, %v2127
    %v2270 = vsub.f32 1.0, %v2129
    %v2271 = vsub.f32 1.0, %v2131
    %v2272 = vmul.f32 %v2256, %v2139
    %v2273 = vmul.f32 %v2257, %v2139
    %v2274 = vmul.f32 %v2258, %v2139
    %v2275 = vmul.f32 %v2259, %v2139
    %v2276 = vmul.f32 %v2260, %v2139
    %v2277 = vmul.f32 %v2261, %v2139
    %v2278 = vmul.f32 %v2262, %v2139
    %v2279 = vmul.f32 %v2263, %v2139
    %v2280 = vmul.f32 %v2264, %v2139
    %v2281 = vmul.f32 %v2265, %v2139
    %v2282 = vmul.f32 %v2266, %v2139
    %v2283 = vmul.f32 %v2267, %v2139
    %v2284 = vmul.f32 %v2268, %v2139
    %v2285 = vmul.f32 %v2269, %v2139
    %v2286 = vmul.f32 %v2270, %v2139
    %v2287 = vmul.f32 %v2271, %v2139
    %v2288 = vadd.f32 %v2240, %v2272
    %v2289 = vadd.f32 %v2241, %v2273
    %v2290 = vadd.f32 %v2242, %v2274
    %v2291 = vadd.f32 %v2243, %v2275
    %v2292 = vadd.f32 %v2244, %v2276
    %v2293 = vadd.f32 %v2245, %v2277
    %v2294 = vadd.f32 %v2246, %v2278
    %v2295 = vadd.f32 %v2247, %v2279
    %v2296 = vadd.f32 %v2248, %v2280
    %v2297 = vadd.f32 %v2249, %v2281
    %v2298 = vadd.f32 %v2250, %v2282
    %v2299 = vadd.f32 %v2251, %v2283
    %v2300 = vadd.f32 %v2252, %v2284
    %v2301 = vadd.f32 %v2253, %v2285
    %v2302 = vadd.f32 %v2254, %v2286
    %v2303 = vadd.f32 %v2255, %v2287
    %v2304 = vmul.f32 %v2101, %v2223
    %v2305 = vmul.f32 %v2103, %v2223
    %v2306 = vmul.f32 %v2105, %v2223
    %v2307 = vmul.f32 %v2107, %v2223
    %v2308 = vmul.f32 %v2109, %v2223
    %v2309 = vmul.f32 %v2111, %v2223
    %v2310 = vmul.f32 %v2113, %v2223
    %v2311 = vmul.f32 %v2115, %v2223
    %v2312 = vmul.f32 %v2117, %v2223
    %v2313 = vmul.f32 %v2119, %v2223
    %v2314 = vmul.f32 %v2121, %v2223
    %v2315 = vmul.f32 %v2123, %v2223
    %v2316 = vmul.f32 %v2125, %v2223
    %v2317 = vmul.f32 %v2127, %v2223
    %v2318 = vmul.f32 %v2129, %v2223
    %v2319 = vmul.f32 %v2131, %v2223
    %v2320 = vadd.f32 %v2204, %v2304
    %v2321 = vadd.f32 %v2205, %v2305
    %v2322 = vadd.f32 %v2206, %v2306
    %v2323 = vadd.f32 %v2207, %v2307
    %v2324 = vadd.f32 %v2208, %v2308
    %v2325 = vadd.f32 %v2209, %v2309
    %v2326 = vadd.f32 %v2210, %v2310
    %v2327 = vadd.f32 %v2211, %v2311
    %v2328 = vadd.f32 %v2212, %v2312
    %v2329 = vadd.f32 %v2213, %v2313
    %v2330 = vadd.f32 %v2214, %v2314
    %v2331 = vadd.f32 %v2215, %v2315
    %v2332 = vadd.f32 %v2216, %v2316
    %v2333 = vadd.f32 %v2217, %v2317
    %v2334 = vadd.f32 %v2218, %v2318
    %v2335 = vadd.f32 %v2219, %v2319
    %v2336 = vmax.f32 %v2320, 1e-15
    %v2337 = vmax.f32 %v2321, 1e-15
    %v2338 = vmax.f32 %v2322, 1e-15
    %v2339 = vmax.f32 %v2323, 1e-15
    %v2340 = vmax.f32 %v2324, 1e-15
    %v2341 = vmax.f32 %v2325, 1e-15
    %v2342 = vmax.f32 %v2326, 1e-15
    %v2343 = vmax.f32 %v2327, 1e-15
    %v2344 = vmax.f32 %v2328, 1e-15
    %v2345 = vmax.f32 %v2329, 1e-15
    %v2346 = vmax.f32 %v2330, 1e-15
    %v2347 = vmax.f32 %v2331, 1e-15
    %v2348 = vmax.f32 %v2332, 1e-15
    %v2349 = vmax.f32 %v2333, 1e-15
    %v2350 = vmax.f32 %v2334, 1e-15
    %v2351 = vmax.f32 %v2335, 1e-15
    %v2352 = vrcp.pop %v2336
    %v2353 = vmul.f32 %v2288, %v2352
    %v2354 = vrcp.pop %v2337
    %v2355 = vmul.f32 %v2289, %v2354
    %v2356 = vrcp.pop %v2338
    %v2357 = vmul.f32 %v2290, %v2356
    %v2358 = vrcp.pop %v2339
    %v2359 = vmul.f32 %v2291, %v2358
    %v2360 = vrcp.pop %v2340
    %v2361 = vmul.f32 %v2292, %v2360
    %v2362 = vrcp.pop %v2341
    %v2363 = vmul.f32 %v2293, %v2362
    %v2364 = vrcp.pop %v2342
    %v2365 = vmul.f32 %v2294, %v2364
    %v2366 = vrcp.pop %v2343
    %v2367 = vmul.f32 %v2295, %v2366
    %v2368 = vrcp.pop %v2344
    %v2369 = vmul.f32 %v2296, %v2368
    %v2370 = vrcp.pop %v2345
    %v2371 = vmul.f32 %v2297, %v2370
    %v2372 = vrcp.pop %v2346
    %v2373 = vmul.f32 %v2298, %v2372
    %v2374 = vrcp.pop %v2347
    %v2375 = vmul.f32 %v2299, %v2374
    %v2376 = vrcp.pop %v2348
    %v2377 = vmul.f32 %v2300, %v2376
    %v2378 = vrcp.pop %v2349
    %v2379 = vmul.f32 %v2301, %v2378
    %v2380 = vrcp.pop %v2350
    %v2381 = vmul.f32 %v2302, %v2380
    %v2382 = vrcp.pop %v2351
    %v2383 = vmul.f32 %v2303, %v2382
    %v2384 = vmul.f32 %v2353, %v2353
    %v2385 = vmul.f32 %v2355, %v2355
    %v2386 = vmul.f32 %v2357, %v2357
    %v2387 = vmul.f32 %v2359, %v2359
    %v2388 = vmul.f32 %v2361, %v2361
    %v2389 = vmul.f32 %v2363, %v2363
    %v2390 = vmul.f32 %v2365, %v2365
    %v2391 = vmul.f32 %v2367, %v2367
    %v2392 = vmul.f32 %v2369, %v2369
    %v2393 = vmul.f32 %v2371, %v2371
    %v2394 = vmul.f32 %v2373, %v2373
    %v2395 = vmul.f32 %v2375, %v2375
    %v2396 = vmul.f32 %v2377, %v2377
    %v2397 = vmul.f32 %v2379, %v2379
    %v2398 = vmul.f32 %v2381, %v2381
    %v2399 = vmul.f32 %v2383, %v2383
    %2400 = vadd.xlane.f32.xlu0 %v2384
    %v2401 = vpop.xlane.xlu0 %2400
    %2402 = vadd.xlane.f32.xlu0 %v2385
    %v2403 = vpop.xlane.xlu0 %2402
    %2404 = vadd.xlane.f32.xlu0 %v2386
    %v2405 = vpop.xlane.xlu0 %2404
    %2406 = vadd.xlane.f32.xlu0 %v2387
    %v2407 = vpop.xlane.xlu0 %2406
    %2408 = vadd.xlane.f32.xlu0 %v2388
    %v2409 = vpop.xlane.xlu0 %2408
    %2410 = vadd.xlane.f32.xlu0 %v2389
    %v2411 = vpop.xlane.xlu0 %2410
    %2412 = vadd.xlane.f32.xlu0 %v2390
    %v2413 = vpop.xlane.xlu0 %2412
    %2414 = vadd.xlane.f32.xlu0 %v2391
    %v2415 = vpop.xlane.xlu0 %2414
    %2416 = vadd.xlane.f32.xlu0 %v2392
    %v2417 = vpop.xlane.xlu0 %2416
    %2418 = vadd.xlane.f32.xlu0 %v2393
    %v2419 = vpop.xlane.xlu0 %2418
    %2420 = vadd.xlane.f32.xlu0 %v2394
    %v2421 = vpop.xlane.xlu0 %2420
    %2422 = vadd.xlane.f32.xlu0 %v2395
    %v2423 = vpop.xlane.xlu0 %2422
    %2424 = vadd.xlane.f32.xlu0 %v2396
    %v2425 = vpop.xlane.xlu0 %2424
    %2426 = vadd.xlane.f32.xlu0 %v2397
    %v2427 = vpop.xlane.xlu0 %2426
    %2428 = vadd.xlane.f32.xlu0 %v2398
    %v2429 = vpop.xlane.xlu0 %2428
    %2430 = vadd.xlane.f32.xlu0 %v2399
    %v2431 = vpop.xlane.xlu0 %2430
    %v2432 = vrsqrt.pop %v2401
    %v2433 = vmul.f32 %v2401, %v2432
    %vm2434 = vcmp.eq.f32.partialorder %v2401, inf
    %v2435 = vsel %vm2434, %v2401, %v2433
    %vm2436 = vcmp.eq.f32.partialorder %v2401, 0.0
    %v2437 = vand.u32 %v2401, 2147483648
    %v2438 = vsel %vm2436, %v2437, %v2435
    %v2439 = vrsqrt.pop %v2403
    %v2440 = vmul.f32 %v2403, %v2439
    %vm2441 = vcmp.eq.f32.partialorder %v2403, inf
    %v2442 = vsel %vm2441, %v2403, %v2440
    %vm2443 = vcmp.eq.f32.partialorder %v2403, 0.0
    %v2444 = vand.u32 %v2403, 2147483648
    %v2445 = vsel %vm2443, %v2444, %v2442
    %v2446 = vrsqrt.pop %v2405
    %v2447 = vmul.f32 %v2405, %v2446
    %vm2448 = vcmp.eq.f32.partialorder %v2405, inf
    %v2449 = vsel %vm2448, %v2405, %v2447
    %vm2450 = vcmp.eq.f32.partialorder %v2405, 0.0
    %v2451 = vand.u32 %v2405, 2147483648
    %v2452 = vsel %vm2450, %v2451, %v2449
    %v2453 = vrsqrt.pop %v2407
    %v2454 = vmul.f32 %v2407, %v2453
    %vm2455 = vcmp.eq.f32.partialorder %v2407, inf
    %v2456 = vsel %vm2455, %v2407, %v2454
    %vm2457 = vcmp.eq.f32.partialorder %v2407, 0.0
    %v2458 = vand.u32 %v2407, 2147483648
    %v2459 = vsel %vm2457, %v2458, %v2456
    %v2460 = vrsqrt.pop %v2409
    %v2461 = vmul.f32 %v2409, %v2460
    %vm2462 = vcmp.eq.f32.partialorder %v2409, inf
    %v2463 = vsel %vm2462, %v2409, %v2461
    %vm2464 = vcmp.eq.f32.partialorder %v2409, 0.0
    %v2465 = vand.u32 %v2409, 2147483648
    %v2466 = vsel %vm2464, %v2465, %v2463
    %v2467 = vrsqrt.pop %v2411
    %v2468 = vmul.f32 %v2411, %v2467
    %vm2469 = vcmp.eq.f32.partialorder %v2411, inf
    %v2470 = vsel %vm2469, %v2411, %v2468
    %vm2471 = vcmp.eq.f32.partialorder %v2411, 0.0
    %v2472 = vand.u32 %v2411, 2147483648
    %v2473 = vsel %vm2471, %v2472, %v2470
    %v2474 = vrsqrt.pop %v2413
    %v2475 = vmul.f32 %v2413, %v2474
    %vm2476 = vcmp.eq.f32.partialorder %v2413, inf
    %v2477 = vsel %vm2476, %v2413, %v2475
    %vm2478 = vcmp.eq.f32.partialorder %v2413, 0.0
    %v2479 = vand.u32 %v2413, 2147483648
    %v2480 = vsel %vm2478, %v2479, %v2477
    %v2481 = vrsqrt.pop %v2415
    %v2482 = vmul.f32 %v2415, %v2481
    %vm2483 = vcmp.eq.f32.partialorder %v2415, inf
    %v2484 = vsel %vm2483, %v2415, %v2482
    %vm2485 = vcmp.eq.f32.partialorder %v2415, 0.0
    %v2486 = vand.u32 %v2415, 2147483648
    %v2487 = vsel %vm2485, %v2486, %v2484
    %v2488 = vrsqrt.pop %v2417
    %v2489 = vmul.f32 %v2417, %v2488
    %vm2490 = vcmp.eq.f32.partialorder %v2417, inf
    %v2491 = vsel %vm2490, %v2417, %v2489
    %vm2492 = vcmp.eq.f32.partialorder %v2417, 0.0
    %v2493 = vand.u32 %v2417, 2147483648
    %v2494 = vsel %vm2492, %v2493, %v2491
    %v2495 = vrsqrt.pop %v2419
    %v2496 = vmul.f32 %v2419, %v2495
    %vm2497 = vcmp.eq.f32.partialorder %v2419, inf
    %v2498 = vsel %vm2497, %v2419, %v2496
    %vm2499 = vcmp.eq.f32.partialorder %v2419, 0.0
    %v2500 = vand.u32 %v2419, 2147483648
    %v2501 = vsel %vm2499, %v2500, %v2498
    %v2502 = vrsqrt.pop %v2421
    %v2503 = vmul.f32 %v2421, %v2502
    %vm2504 = vcmp.eq.f32.partialorder %v2421, inf
    %v2505 = vsel %vm2504, %v2421, %v2503
    %vm2506 = vcmp.eq.f32.partialorder %v2421, 0.0
    %v2507 = vand.u32 %v2421, 2147483648
    %v2508 = vsel %vm2506, %v2507, %v2505
    %v2509 = vrsqrt.pop %v2423
    %v2510 = vmul.f32 %v2423, %v2509
    %vm2511 = vcmp.eq.f32.partialorder %v2423, inf
    %v2512 = vsel %vm2511, %v2423, %v2510
    %vm2513 = vcmp.eq.f32.partialorder %v2423, 0.0
    %v2514 = vand.u32 %v2423, 2147483648
    %v2515 = vsel %vm2513, %v2514, %v2512
    %v2516 = vrsqrt.pop %v2425
    %v2517 = vmul.f32 %v2425, %v2516
    %vm2518 = vcmp.eq.f32.partialorder %v2425, inf
    %v2519 = vsel %vm2518, %v2425, %v2517
    %vm2520 = vcmp.eq.f32.partialorder %v2425, 0.0
    %v2521 = vand.u32 %v2425, 2147483648
    %v2522 = vsel %vm2520, %v2521, %v2519
    %v2523 = vrsqrt.pop %v2427
    %v2524 = vmul.f32 %v2427, %v2523
    %vm2525 = vcmp.eq.f32.partialorder %v2427, inf
    %v2526 = vsel %vm2525, %v2427, %v2524
    %vm2527 = vcmp.eq.f32.partialorder %v2427, 0.0
    %v2528 = vand.u32 %v2427, 2147483648
    %v2529 = vsel %vm2527, %v2528, %v2526
    %v2530 = vrsqrt.pop %v2429
    %v2531 = vmul.f32 %v2429, %v2530
    %vm2532 = vcmp.eq.f32.partialorder %v2429, inf
    %v2533 = vsel %vm2532, %v2429, %v2531
    %vm2534 = vcmp.eq.f32.partialorder %v2429, 0.0
    %v2535 = vand.u32 %v2429, 2147483648
    %v2536 = vsel %vm2534, %v2535, %v2533
    %v2537 = vrsqrt.pop %v2431
    %v2538 = vmul.f32 %v2431, %v2537
    %vm2539 = vcmp.eq.f32.partialorder %v2431, inf
    %v2540 = vsel %vm2539, %v2431, %v2538
    %vm2541 = vcmp.eq.f32.partialorder %v2431, 0.0
    %v2542 = vand.u32 %v2431, 2147483648
    %v2543 = vsel %vm2541, %v2542, %v2540
    %v2544 = vmax.f32 %v2438, 1e-15
    %v2545 = vmax.f32 %v2445, 1e-15
    %v2546 = vmax.f32 %v2452, 1e-15
    %v2547 = vmax.f32 %v2459, 1e-15
    %v2548 = vmax.f32 %v2466, 1e-15
    %v2549 = vmax.f32 %v2473, 1e-15
    %v2550 = vmax.f32 %v2480, 1e-15
    %v2551 = vmax.f32 %v2487, 1e-15
    %v2552 = vmax.f32 %v2494, 1e-15
    %v2553 = vmax.f32 %v2501, 1e-15
    %v2554 = vmax.f32 %v2508, 1e-15
    %v2555 = vmax.f32 %v2515, 1e-15
    %v2556 = vmax.f32 %v2522, 1e-15
    %v2557 = vmax.f32 %v2529, 1e-15
    %v2558 = vmax.f32 %v2536, 1e-15
    %v2559 = vmax.f32 %v2543, 1e-15
    %vm2560 = vcmp.gt.f32.partialorder %v2544, 0.996
    %vm2561 = vcmp.gt.f32.partialorder %v2545, 0.996
    %vm2562 = vcmp.gt.f32.partialorder %v2546, 0.996
    %vm2563 = vcmp.gt.f32.partialorder %v2547, 0.996
    %vm2564 = vcmp.gt.f32.partialorder %v2548, 0.996
    %vm2565 = vcmp.gt.f32.partialorder %v2549, 0.996
    %vm2566 = vcmp.gt.f32.partialorder %v2550, 0.996
    %vm2567 = vcmp.gt.f32.partialorder %v2551, 0.996
    %vm2568 = vcmp.gt.f32.partialorder %v2552, 0.996
    %vm2569 = vcmp.gt.f32.partialorder %v2553, 0.996
    %vm2570 = vcmp.gt.f32.partialorder %v2554, 0.996
    %vm2571 = vcmp.gt.f32.partialorder %v2555, 0.996
    %vm2572 = vcmp.gt.f32.partialorder %v2556, 0.996
    %vm2573 = vcmp.gt.f32.partialorder %v2557, 0.996
    %vm2574 = vcmp.gt.f32.partialorder %v2558, 0.996
    %vm2575 = vcmp.gt.f32.partialorder %v2559, 0.996
    %v2576 = vrcp.pop %v2544
    %v2577 = vmul.f32 %v2353, %v2576
    %v2578 = vrcp.pop %v2545
    %v2579 = vmul.f32 %v2355, %v2578
    %v2580 = vrcp.pop %v2546
    %v2581 = vmul.f32 %v2357, %v2580
    %v2582 = vrcp.pop %v2547
    %v2583 = vmul.f32 %v2359, %v2582
    %v2584 = vrcp.pop %v2548
    %v2585 = vmul.f32 %v2361, %v2584
    %v2586 = vrcp.pop %v2549
    %v2587 = vmul.f32 %v2363, %v2586
    %v2588 = vrcp.pop %v2550
    %v2589 = vmul.f32 %v2365, %v2588
    %v2590 = vrcp.pop %v2551
    %v2591 = vmul.f32 %v2367, %v2590
    %v2592 = vrcp.pop %v2552
    %v2593 = vmul.f32 %v2369, %v2592
    %v2594 = vrcp.pop %v2553
    %v2595 = vmul.f32 %v2371, %v2594
    %v2596 = vrcp.pop %v2554
    %v2597 = vmul.f32 %v2373, %v2596
    %v2598 = vrcp.pop %v2555
    %v2599 = vmul.f32 %v2375, %v2598
    %v2600 = vrcp.pop %v2556
    %v2601 = vmul.f32 %v2377, %v2600
    %v2602 = vrcp.pop %v2557
    %v2603 = vmul.f32 %v2379, %v2602
    %v2604 = vrcp.pop %v2558
    %v2605 = vmul.f32 %v2381, %v2604
    %v2606 = vrcp.pop %v2559
    %v2607 = vmul.f32 %v2383, %v2606
    %v2608 = vmul.f32 %v2577, 0.996
    %v2609 = vmul.f32 %v2579, 0.996
    %v2610 = vmul.f32 %v2581, 0.996
    %v2611 = vmul.f32 %v2583, 0.996
    %v2612 = vmul.f32 %v2585, 0.996
    %v2613 = vmul.f32 %v2587, 0.996
    %v2614 = vmul.f32 %v2589, 0.996
    %v2615 = vmul.f32 %v2591, 0.996
    %v2616 = vmul.f32 %v2593, 0.996
    %v2617 = vmul.f32 %v2595, 0.996
    %v2618 = vmul.f32 %v2597, 0.996
    %v2619 = vmul.f32 %v2599, 0.996
    %v2620 = vmul.f32 %v2601, 0.996
    %v2621 = vmul.f32 %v2603, 0.996
    %v2622 = vmul.f32 %v2605, 0.996
    %v2623 = vmul.f32 %v2607, 0.996
    %v2624 = vsel %vm2560, 1, 0
    %v2625 = vsel %vm2561, 1, 0
    %v2626 = vsel %vm2562, 1, 0
    %v2627 = vsel %vm2563, 1, 0
    %v2628 = vsel %vm2564, 1, 0
    %v2629 = vsel %vm2565, 1, 0
    %v2630 = vsel %vm2566, 1, 0
    %v2631 = vsel %vm2567, 1, 0
    %v2632 = vsel %vm2568, 1, 0
    %v2633 = vsel %vm2569, 1, 0
    %v2634 = vsel %vm2570, 1, 0
    %v2635 = vsel %vm2571, 1, 0
    %v2636 = vsel %vm2572, 1, 0
    %v2637 = vsel %vm2573, 1, 0
    %v2638 = vsel %vm2574, 1, 0
    %v2639 = vsel %vm2575, 1, 0
    %vm2640 = vcmp.eq.s32.totalorder %v2624, 1
    %vm2641 = vcmp.eq.s32.totalorder %v2625, 1
    %vm2642 = vcmp.eq.s32.totalorder %v2626, 1
    %vm2643 = vcmp.eq.s32.totalorder %v2627, 1
    %vm2644 = vcmp.eq.s32.totalorder %v2628, 1
    %vm2645 = vcmp.eq.s32.totalorder %v2629, 1
    %vm2646 = vcmp.eq.s32.totalorder %v2630, 1
    %vm2647 = vcmp.eq.s32.totalorder %v2631, 1
    %vm2648 = vcmp.eq.s32.totalorder %v2632, 1
    %vm2649 = vcmp.eq.s32.totalorder %v2633, 1
    %vm2650 = vcmp.eq.s32.totalorder %v2634, 1
    %vm2651 = vcmp.eq.s32.totalorder %v2635, 1
    %vm2652 = vcmp.eq.s32.totalorder %v2636, 1
    %vm2653 = vcmp.eq.s32.totalorder %v2637, 1
    %vm2654 = vcmp.eq.s32.totalorder %v2638, 1
    %vm2655 = vcmp.eq.s32.totalorder %v2639, 1
    %v2656 = vsel %vm2640, %v2608, %v2353
    %v2657 = vsel %vm2641, %v2609, %v2355
    %v2658 = vsel %vm2642, %v2610, %v2357
    %v2659 = vsel %vm2643, %v2611, %v2359
    %v2660 = vsel %vm2644, %v2612, %v2361
    %v2661 = vsel %vm2645, %v2613, %v2363
    %v2662 = vsel %vm2646, %v2614, %v2365
    %v2663 = vsel %vm2647, %v2615, %v2367
    %v2664 = vsel %vm2648, %v2616, %v2369
    %v2665 = vsel %vm2649, %v2617, %v2371
    %v2666 = vsel %vm2650, %v2618, %v2373
    %v2667 = vsel %vm2651, %v2619, %v2375
    %v2668 = vsel %vm2652, %v2620, %v2377
    %v2669 = vsel %vm2653, %v2621, %v2379
    %v2670 = vsel %vm2654, %v2622, %v2381
    %v2671 = vsel %vm2655, %v2623, %v2383
    %v2672 = vmul.f32 %v2656, %v2656
    %v2673 = vmul.f32 %v2657, %v2657
    %v2674 = vmul.f32 %v2658, %v2658
    %v2675 = vmul.f32 %v2659, %v2659
    %v2676 = vmul.f32 %v2660, %v2660
    %v2677 = vmul.f32 %v2661, %v2661
    %v2678 = vmul.f32 %v2662, %v2662
    %v2679 = vmul.f32 %v2663, %v2663
    %v2680 = vmul.f32 %v2664, %v2664
    %v2681 = vmul.f32 %v2665, %v2665
    %v2682 = vmul.f32 %v2666, %v2666
    %v2683 = vmul.f32 %v2667, %v2667
    %v2684 = vmul.f32 %v2668, %v2668
    %v2685 = vmul.f32 %v2669, %v2669
    %v2686 = vmul.f32 %v2670, %v2670
    %v2687 = vmul.f32 %v2671, %v2671
    %2688 = vadd.xlane.f32.xlu0 %v2672
    %v2689 = vpop.xlane.xlu0 %2688
    %2690 = vadd.xlane.f32.xlu0 %v2673
    %v2691 = vpop.xlane.xlu0 %2690
    %2692 = vadd.xlane.f32.xlu0 %v2674
    %v2693 = vpop.xlane.xlu0 %2692
    %2694 = vadd.xlane.f32.xlu0 %v2675
    %v2695 = vpop.xlane.xlu0 %2694
    %2696 = vadd.xlane.f32.xlu0 %v2676
    %v2697 = vpop.xlane.xlu0 %2696
    %2698 = vadd.xlane.f32.xlu0 %v2677
    %v2699 = vpop.xlane.xlu0 %2698
    %2700 = vadd.xlane.f32.xlu0 %v2678
    %v2701 = vpop.xlane.xlu0 %2700
    %2702 = vadd.xlane.f32.xlu0 %v2679
    %v2703 = vpop.xlane.xlu0 %2702
    %2704 = vadd.xlane.f32.xlu0 %v2680
    %v2705 = vpop.xlane.xlu0 %2704
    %2706 = vadd.xlane.f32.xlu0 %v2681
    %v2707 = vpop.xlane.xlu0 %2706
    %2708 = vadd.xlane.f32.xlu0 %v2682
    %v2709 = vpop.xlane.xlu0 %2708
    %2710 = vadd.xlane.f32.xlu0 %v2683
    %v2711 = vpop.xlane.xlu0 %2710
    %2712 = vadd.xlane.f32.xlu0 %v2684
    %v2713 = vpop.xlane.xlu0 %2712
    %2714 = vadd.xlane.f32.xlu0 %v2685
    %v2715 = vpop.xlane.xlu0 %2714
    %2716 = vadd.xlane.f32.xlu0 %v2686
    %v2717 = vpop.xlane.xlu0 %2716
    %2718 = vadd.xlane.f32.xlu0 %v2687
    %v2719 = vpop.xlane.xlu0 %2718
    %v2720 = vrsqrt.pop %v2689
    %v2721 = vmul.f32 %v2689, %v2720
    %vm2722 = vcmp.eq.f32.partialorder %v2689, inf
    %v2723 = vsel %vm2722, %v2689, %v2721
    %vm2724 = vcmp.eq.f32.partialorder %v2689, 0.0
    %v2725 = vand.u32 %v2689, 2147483648
    %v2726 = vsel %vm2724, %v2725, %v2723
    %v2727 = vrsqrt.pop %v2691
    %v2728 = vmul.f32 %v2691, %v2727
    %vm2729 = vcmp.eq.f32.partialorder %v2691, inf
    %v2730 = vsel %vm2729, %v2691, %v2728
    %vm2731 = vcmp.eq.f32.partialorder %v2691, 0.0
    %v2732 = vand.u32 %v2691, 2147483648
    %v2733 = vsel %vm2731, %v2732, %v2730
    %v2734 = vrsqrt.pop %v2693
    %v2735 = vmul.f32 %v2693, %v2734
    %vm2736 = vcmp.eq.f32.partialorder %v2693, inf
    %v2737 = vsel %vm2736, %v2693, %v2735
    %vm2738 = vcmp.eq.f32.partialorder %v2693, 0.0
    %v2739 = vand.u32 %v2693, 2147483648
    %v2740 = vsel %vm2738, %v2739, %v2737
    %v2741 = vrsqrt.pop %v2695
    %v2742 = vmul.f32 %v2695, %v2741
    %vm2743 = vcmp.eq.f32.partialorder %v2695, inf
    %v2744 = vsel %vm2743, %v2695, %v2742
    %vm2745 = vcmp.eq.f32.partialorder %v2695, 0.0
    %v2746 = vand.u32 %v2695, 2147483648
    %v2747 = vsel %vm2745, %v2746, %v2744
    %v2748 = vrsqrt.pop %v2697
    %v2749 = vmul.f32 %v2697, %v2748
    %vm2750 = vcmp.eq.f32.partialorder %v2697, inf
    %v2751 = vsel %vm2750, %v2697, %v2749
    %vm2752 = vcmp.eq.f32.partialorder %v2697, 0.0
    %v2753 = vand.u32 %v2697, 2147483648
    %v2754 = vsel %vm2752, %v2753, %v2751
    %v2755 = vrsqrt.pop %v2699
    %v2756 = vmul.f32 %v2699, %v2755
    %vm2757 = vcmp.eq.f32.partialorder %v2699, inf
    %v2758 = vsel %vm2757, %v2699, %v2756
    %vm2759 = vcmp.eq.f32.partialorder %v2699, 0.0
    %v2760 = vand.u32 %v2699, 2147483648
    %v2761 = vsel %vm2759, %v2760, %v2758
    %v2762 = vrsqrt.pop %v2701
    %v2763 = vmul.f32 %v2701, %v2762
    %vm2764 = vcmp.eq.f32.partialorder %v2701, inf
    %v2765 = vsel %vm2764, %v2701, %v2763
    %vm2766 = vcmp.eq.f32.partialorder %v2701, 0.0
    %v2767 = vand.u32 %v2701, 2147483648
    %v2768 = vsel %vm2766, %v2767, %v2765
    %v2769 = vrsqrt.pop %v2703
    %v2770 = vmul.f32 %v2703, %v2769
    %vm2771 = vcmp.eq.f32.partialorder %v2703, inf
    %v2772 = vsel %vm2771, %v2703, %v2770
    %vm2773 = vcmp.eq.f32.partialorder %v2703, 0.0
    %v2774 = vand.u32 %v2703, 2147483648
    %v2775 = vsel %vm2773, %v2774, %v2772
    %v2776 = vrsqrt.pop %v2705
    %v2777 = vmul.f32 %v2705, %v2776
    %vm2778 = vcmp.eq.f32.partialorder %v2705, inf
    %v2779 = vsel %vm2778, %v2705, %v2777
    %vm2780 = vcmp.eq.f32.partialorder %v2705, 0.0
    %v2781 = vand.u32 %v2705, 2147483648
    %v2782 = vsel %vm2780, %v2781, %v2779
    %v2783 = vrsqrt.pop %v2707
    %v2784 = vmul.f32 %v2707, %v2783
    %vm2785 = vcmp.eq.f32.partialorder %v2707, inf
    %v2786 = vsel %vm2785, %v2707, %v2784
    %vm2787 = vcmp.eq.f32.partialorder %v2707, 0.0
    %v2788 = vand.u32 %v2707, 2147483648
    %v2789 = vsel %vm2787, %v2788, %v2786
    %v2790 = vrsqrt.pop %v2709
    %v2791 = vmul.f32 %v2709, %v2790
    %vm2792 = vcmp.eq.f32.partialorder %v2709, inf
    %v2793 = vsel %vm2792, %v2709, %v2791
    %vm2794 = vcmp.eq.f32.partialorder %v2709, 0.0
    %v2795 = vand.u32 %v2709, 2147483648
    %v2796 = vsel %vm2794, %v2795, %v2793
    %v2797 = vrsqrt.pop %v2711
    %v2798 = vmul.f32 %v2711, %v2797
    %vm2799 = vcmp.eq.f32.partialorder %v2711, inf
    %v2800 = vsel %vm2799, %v2711, %v2798
    %vm2801 = vcmp.eq.f32.partialorder %v2711, 0.0
    %v2802 = vand.u32 %v2711, 2147483648
    %v2803 = vsel %vm2801, %v2802, %v2800
    %v2804 = vrsqrt.pop %v2713
    %v2805 = vmul.f32 %v2713, %v2804
    %vm2806 = vcmp.eq.f32.partialorder %v2713, inf
    %v2807 = vsel %vm2806, %v2713, %v2805
    %vm2808 = vcmp.eq.f32.partialorder %v2713, 0.0
    %v2809 = vand.u32 %v2713, 2147483648
    %v2810 = vsel %vm2808, %v2809, %v2807
    %v2811 = vrsqrt.pop %v2715
    %v2812 = vmul.f32 %v2715, %v2811
    %vm2813 = vcmp.eq.f32.partialorder %v2715, inf
    %v2814 = vsel %vm2813, %v2715, %v2812
    %vm2815 = vcmp.eq.f32.partialorder %v2715, 0.0
    %v2816 = vand.u32 %v2715, 2147483648
    %v2817 = vsel %vm2815, %v2816, %v2814
    %v2818 = vrsqrt.pop %v2717
    %v2819 = vmul.f32 %v2717, %v2818
    %vm2820 = vcmp.eq.f32.partialorder %v2717, inf
    %v2821 = vsel %vm2820, %v2717, %v2819
    %vm2822 = vcmp.eq.f32.partialorder %v2717, 0.0
    %v2823 = vand.u32 %v2717, 2147483648
    %v2824 = vsel %vm2822, %v2823, %v2821
    %v2825 = vrsqrt.pop %v2719
    %v2826 = vmul.f32 %v2719, %v2825
    %vm2827 = vcmp.eq.f32.partialorder %v2719, inf
    %v2828 = vsel %vm2827, %v2719, %v2826
    %vm2829 = vcmp.eq.f32.partialorder %v2719, 0.0
    %v2830 = vand.u32 %v2719, 2147483648
    %v2831 = vsel %vm2829, %v2830, %v2828
    %v2832 = vmax.f32 %v2726, 1e-15
    %v2833 = vmax.f32 %v2733, 1e-15
    %v2834 = vmax.f32 %v2740, 1e-15
    %v2835 = vmax.f32 %v2747, 1e-15
    %v2836 = vmax.f32 %v2754, 1e-15
    %v2837 = vmax.f32 %v2761, 1e-15
    %v2838 = vmax.f32 %v2768, 1e-15
    %v2839 = vmax.f32 %v2775, 1e-15
    %v2840 = vmax.f32 %v2782, 1e-15
    %v2841 = vmax.f32 %v2789, 1e-15
    %v2842 = vmax.f32 %v2796, 1e-15
    %v2843 = vmax.f32 %v2803, 1e-15
    %v2844 = vmax.f32 %v2810, 1e-15
    %v2845 = vmax.f32 %v2817, 1e-15
    %v2846 = vmax.f32 %v2824, 1e-15
    %v2847 = vmax.f32 %v2831, 1e-15
    %v2848 = vmax.f32 %v2832, -0.9999999
    %v2849 = vmax.f32 %v2833, -0.9999999
    %v2850 = vmax.f32 %v2834, -0.9999999
    %v2851 = vmax.f32 %v2835, -0.9999999
    %v2852 = vmax.f32 %v2836, -0.9999999
    %v2853 = vmax.f32 %v2837, -0.9999999
    %v2854 = vmax.f32 %v2838, -0.9999999
    %v2855 = vmax.f32 %v2839, -0.9999999
    %v2856 = vmax.f32 %v2840, -0.9999999
    %v2857 = vmax.f32 %v2841, -0.9999999
    %v2858 = vmax.f32 %v2842, -0.9999999
    %v2859 = vmax.f32 %v2843, -0.9999999
    %v2860 = vmax.f32 %v2844, -0.9999999
    %v2861 = vmax.f32 %v2845, -0.9999999
    %v2862 = vmax.f32 %v2846, -0.9999999
    %v2863 = vmax.f32 %v2847, -0.9999999
    %v2864 = vmin.f32 %v2848, 0.9999999
    %v2865 = vmin.f32 %v2849, 0.9999999
    %v2866 = vmin.f32 %v2850, 0.9999999
    %v2867 = vmin.f32 %v2851, 0.9999999
    %v2868 = vmin.f32 %v2852, 0.9999999
    %v2869 = vmin.f32 %v2853, 0.9999999
    %v2870 = vmin.f32 %v2854, 0.9999999
    %v2871 = vmin.f32 %v2855, 0.9999999
    %v2872 = vmin.f32 %v2856, 0.9999999
    %v2873 = vmin.f32 %v2857, 0.9999999
    %v2874 = vmin.f32 %v2858, 0.9999999
    %v2875 = vmin.f32 %v2859, 0.9999999
    %v2876 = vmin.f32 %v2860, 0.9999999
    %v2877 = vmin.f32 %v2861, 0.9999999
    %v2878 = vmin.f32 %v2862, 0.9999999
    %v2879 = vmin.f32 %v2863, 0.9999999
    %v2880 = vadd.f32 %v2864, 1.0
    %v2881 = vlog2.pop %v2880
    %v2882 = vmul.f32 %v2881, 0.6931472
    %v2883 = vmul.f32 -0.5, %v2864
    %v2884 = vadd.f32 %v2883, 1.0
    %v2885 = vmul.f32 %v2884, %v2864
    %v2886 = vand.u32 2147483647, %v2864
    %vm2887 = vcmp.lt.f32.partialorder %v2886, 0.0004427343
    %v2888 = vsel %vm2887, %v2885, %v2882
    %v2889 = vadd.f32 %v2865, 1.0
    %v2890 = vlog2.pop %v2889
    %v2891 = vmul.f32 %v2890, 0.6931472
    %v2892 = vmul.f32 -0.5, %v2865
    %v2893 = vadd.f32 %v2892, 1.0
    %v2894 = vmul.f32 %v2893, %v2865
    %v2895 = vand.u32 2147483647, %v2865
    %vm2896 = vcmp.lt.f32.partialorder %v2895, 0.0004427343
    %v2897 = vsel %vm2896, %v2894, %v2891
    %v2898 = vadd.f32 %v2866, 1.0
    %v2899 = vlog2.pop %v2898
    %v2900 = vmul.f32 %v2899, 0.6931472
    %v2901 = vmul.f32 -0.5, %v2866
    %v2902 = vadd.f32 %v2901, 1.0
    %v2903 = vmul.f32 %v2902, %v2866
    %v2904 = vand.u32 2147483647, %v2866
    %vm2905 = vcmp.lt.f32.partialorder %v2904, 0.0004427343
    %v2906 = vsel %vm2905, %v2903, %v2900
    %v2907 = vadd.f32 %v2867, 1.0
    %v2908 = vlog2.pop %v2907
    %v2909 = vmul.f32 %v2908, 0.6931472
    %v2910 = vmul.f32 -0.5, %v2867
    %v2911 = vadd.f32 %v2910, 1.0
    %v2912 = vmul.f32 %v2911, %v2867
    %v2913 = vand.u32 2147483647, %v2867
    %vm2914 = vcmp.lt.f32.partialorder %v2913, 0.0004427343
    %v2915 = vsel %vm2914, %v2912, %v2909
    %v2916 = vadd.f32 %v2868, 1.0
    %v2917 = vlog2.pop %v2916
    %v2918 = vmul.f32 %v2917, 0.6931472
    %v2919 = vmul.f32 -0.5, %v2868
    %v2920 = vadd.f32 %v2919, 1.0
    %v2921 = vmul.f32 %v2920, %v2868
    %v2922 = vand.u32 2147483647, %v2868
    %vm2923 = vcmp.lt.f32.partialorder %v2922, 0.0004427343
    %v2924 = vsel %vm2923, %v2921, %v2918
    %v2925 = vadd.f32 %v2869, 1.0
    %v2926 = vlog2.pop %v2925
    %v2927 = vmul.f32 %v2926, 0.6931472
    %v2928 = vmul.f32 -0.5, %v2869
    %v2929 = vadd.f32 %v2928, 1.0
    %v2930 = vmul.f32 %v2929, %v2869
    %v2931 = vand.u32 2147483647, %v2869
    %vm2932 = vcmp.lt.f32.partialorder %v2931, 0.0004427343
    %v2933 = vsel %vm2932, %v2930, %v2927
    %v2934 = vadd.f32 %v2870, 1.0
    %v2935 = vlog2.pop %v2934
    %v2936 = vmul.f32 %v2935, 0.6931472
    %v2937 = vmul.f32 -0.5, %v2870
    %v2938 = vadd.f32 %v2937, 1.0
    %v2939 = vmul.f32 %v2938, %v2870
    %v2940 = vand.u32 2147483647, %v2870
    %vm2941 = vcmp.lt.f32.partialorder %v2940, 0.0004427343
    %v2942 = vsel %vm2941, %v2939, %v2936
    %v2943 = vadd.f32 %v2871, 1.0
    %v2944 = vlog2.pop %v2943
    %v2945 = vmul.f32 %v2944, 0.6931472
    %v2946 = vmul.f32 -0.5, %v2871
    %v2947 = vadd.f32 %v2946, 1.0
    %v2948 = vmul.f32 %v2947, %v2871
    %v2949 = vand.u32 2147483647, %v2871
    %vm2950 = vcmp.lt.f32.partialorder %v2949, 0.0004427343
    %v2951 = vsel %vm2950, %v2948, %v2945
    %v2952 = vadd.f32 %v2872, 1.0
    %v2953 = vlog2.pop %v2952
    %v2954 = vmul.f32 %v2953, 0.6931472
    %v2955 = vmul.f32 -0.5, %v2872
    %v2956 = vadd.f32 %v2955, 1.0
    %v2957 = vmul.f32 %v2956, %v2872
    %v2958 = vand.u32 2147483647, %v2872
    %vm2959 = vcmp.lt.f32.partialorder %v2958, 0.0004427343
    %v2960 = vsel %vm2959, %v2957, %v2954
    %v2961 = vadd.f32 %v2873, 1.0
    %v2962 = vlog2.pop %v2961
    %v2963 = vmul.f32 %v2962, 0.6931472
    %v2964 = vmul.f32 -0.5, %v2873
    %v2965 = vadd.f32 %v2964, 1.0
    %v2966 = vmul.f32 %v2965, %v2873
    %v2967 = vand.u32 2147483647, %v2873
    %vm2968 = vcmp.lt.f32.partialorder %v2967, 0.0004427343
    %v2969 = vsel %vm2968, %v2966, %v2963
    %v2970 = vadd.f32 %v2874, 1.0
    %v2971 = vlog2.pop %v2970
    %v2972 = vmul.f32 %v2971, 0.6931472
    %v2973 = vmul.f32 -0.5, %v2874
    %v2974 = vadd.f32 %v2973, 1.0
    %v2975 = vmul.f32 %v2974, %v2874
    %v2976 = vand.u32 2147483647, %v2874
    %vm2977 = vcmp.lt.f32.partialorder %v2976, 0.0004427343
    %v2978 = vsel %vm2977, %v2975, %v2972
    %v2979 = vadd.f32 %v2875, 1.0
    %v2980 = vlog2.pop %v2979
    %v2981 = vmul.f32 %v2980, 0.6931472
    %v2982 = vmul.f32 -0.5, %v2875
    %v2983 = vadd.f32 %v2982, 1.0
    %v2984 = vmul.f32 %v2983, %v2875
    %v2985 = vand.u32 2147483647, %v2875
    %vm2986 = vcmp.lt.f32.partialorder %v2985, 0.0004427343
    %v2987 = vsel %vm2986, %v2984, %v2981
    %v2988 = vadd.f32 %v2876, 1.0
    %v2989 = vlog2.pop %v2988
    %v2990 = vmul.f32 %v2989, 0.6931472
    %v2991 = vmul.f32 -0.5, %v2876
    %v2992 = vadd.f32 %v2991, 1.0
    %v2993 = vmul.f32 %v2992, %v2876
    %v2994 = vand.u32 2147483647, %v2876
    %vm2995 = vcmp.lt.f32.partialorder %v2994, 0.0004427343
    %v2996 = vsel %vm2995, %v2993, %v2990
    %v2997 = vadd.f32 %v2877, 1.0
    %v2998 = vlog2.pop %v2997
    %v2999 = vmul.f32 %v2998, 0.6931472
    %v3000 = vmul.f32 -0.5, %v2877
    %v3001 = vadd.f32 %v3000, 1.0
    %v3002 = vmul.f32 %v3001, %v2877
    %v3003 = vand.u32 2147483647, %v2877
    %vm3004 = vcmp.lt.f32.partialorder %v3003, 0.0004427343
    %v3005 = vsel %vm3004, %v3002, %v2999
    %v3006 = vadd.f32 %v2878, 1.0
    %v3007 = vlog2.pop %v3006
    %v3008 = vmul.f32 %v3007, 0.6931472
    %v3009 = vmul.f32 -0.5, %v2878
    %v3010 = vadd.f32 %v3009, 1.0
    %v3011 = vmul.f32 %v3010, %v2878
    %v3012 = vand.u32 2147483647, %v2878
    %vm3013 = vcmp.lt.f32.partialorder %v3012, 0.0004427343
    %v3014 = vsel %vm3013, %v3011, %v3008
    %v3015 = vadd.f32 %v2879, 1.0
    %v3016 = vlog2.pop %v3015
    %v3017 = vmul.f32 %v3016, 0.6931472
    %v3018 = vmul.f32 -0.5, %v2879
    %v3019 = vadd.f32 %v3018, 1.0
    %v3020 = vmul.f32 %v3019, %v2879
    %v3021 = vand.u32 2147483647, %v2879
    %vm3022 = vcmp.lt.f32.partialorder %v3021, 0.0004427343
    %v3023 = vsel %vm3022, %v3020, %v3017
    %v3024 = vsub.f32 1.0, %v2864
    %v3025 = vsub.f32 1.0, %v2865
    %v3026 = vsub.f32 1.0, %v2866
    %v3027 = vsub.f32 1.0, %v2867
    %v3028 = vsub.f32 1.0, %v2868
    %v3029 = vsub.f32 1.0, %v2869
    %v3030 = vsub.f32 1.0, %v2870
    %v3031 = vsub.f32 1.0, %v2871
    %v3032 = vsub.f32 1.0, %v2872
    %v3033 = vsub.f32 1.0, %v2873
    %v3034 = vsub.f32 1.0, %v2874
    %v3035 = vsub.f32 1.0, %v2875
    %v3036 = vsub.f32 1.0, %v2876
    %v3037 = vsub.f32 1.0, %v2877
    %v3038 = vsub.f32 1.0, %v2878
    %v3039 = vsub.f32 1.0, %v2879
    %v3040 = vlog2.pop %v3024
    %v3041 = vmul.f32 %v3040, 0.6931472
    %v3042 = vlog2.pop %v3025
    %v3043 = vmul.f32 %v3042, 0.6931472
    %v3044 = vlog2.pop %v3026
    %v3045 = vmul.f32 %v3044, 0.6931472
    %v3046 = vlog2.pop %v3027
    %v3047 = vmul.f32 %v3046, 0.6931472
    %v3048 = vlog2.pop %v3028
    %v3049 = vmul.f32 %v3048, 0.6931472
    %v3050 = vlog2.pop %v3029
    %v3051 = vmul.f32 %v3050, 0.6931472
    %v3052 = vlog2.pop %v3030
    %v3053 = vmul.f32 %v3052, 0.6931472
    %v3054 = vlog2.pop %v3031
    %v3055 = vmul.f32 %v3054, 0.6931472
    %v3056 = vlog2.pop %v3032
    %v3057 = vmul.f32 %v3056, 0.6931472
    %v3058 = vlog2.pop %v3033
    %v3059 = vmul.f32 %v3058, 0.6931472
    %v3060 = vlog2.pop %v3034
    %v3061 = vmul.f32 %v3060, 0.6931472
    %v3062 = vlog2.pop %v3035
    %v3063 = vmul.f32 %v3062, 0.6931472
    %v3064 = vlog2.pop %v3036
    %v3065 = vmul.f32 %v3064, 0.6931472
    %v3066 = vlog2.pop %v3037
    %v3067 = vmul.f32 %v3066, 0.6931472
    %v3068 = vlog2.pop %v3038
    %v3069 = vmul.f32 %v3068, 0.6931472
    %v3070 = vlog2.pop %v3039
    %v3071 = vmul.f32 %v3070, 0.6931472
    %v3072 = vsub.f32 %v2888, %v3041
    %v3073 = vsub.f32 %v2897, %v3043
    %v3074 = vsub.f32 %v2906, %v3045
    %v3075 = vsub.f32 %v2915, %v3047
    %v3076 = vsub.f32 %v2924, %v3049
    %v3077 = vsub.f32 %v2933, %v3051
    %v3078 = vsub.f32 %v2942, %v3053
    %v3079 = vsub.f32 %v2951, %v3055
    %v3080 = vsub.f32 %v2960, %v3057
    %v3081 = vsub.f32 %v2969, %v3059
    %v3082 = vsub.f32 %v2978, %v3061
    %v3083 = vsub.f32 %v2987, %v3063
    %v3084 = vsub.f32 %v2996, %v3065
    %v3085 = vsub.f32 %v3005, %v3067
    %v3086 = vsub.f32 %v3014, %v3069
    %v3087 = vsub.f32 %v3023, %v3071
    %v3088 = vmul.f32 %v3072, 0.5
    %v3089 = vmul.f32 %v3073, 0.5
    %v3090 = vmul.f32 %v3074, 0.5
    %v3091 = vmul.f32 %v3075, 0.5
    %v3092 = vmul.f32 %v3076, 0.5
    %v3093 = vmul.f32 %v3077, 0.5
    %v3094 = vmul.f32 %v3078, 0.5
    %v3095 = vmul.f32 %v3079, 0.5
    %v3096 = vmul.f32 %v3080, 0.5
    %v3097 = vmul.f32 %v3081, 0.5
    %v3098 = vmul.f32 %v3082, 0.5
    %v3099 = vmul.f32 %v3083, 0.5
    %v3100 = vmul.f32 %v3084, 0.5
    %v3101 = vmul.f32 %v3085, 0.5
    %v3102 = vmul.f32 %v3086, 0.5
    %v3103 = vmul.f32 %v3087, 0.5
    %v3104 = vmul.f32 %v3088, %v2656
    %v3105 = vmul.f32 %v3089, %v2657
    %v3106 = vmul.f32 %v3090, %v2658
    %v3107 = vmul.f32 %v3091, %v2659
    %v3108 = vmul.f32 %v3092, %v2660
    %v3109 = vmul.f32 %v3093, %v2661
    %v3110 = vmul.f32 %v3094, %v2662
    %v3111 = vmul.f32 %v3095, %v2663
    %v3112 = vmul.f32 %v3096, %v2664
    %v3113 = vmul.f32 %v3097, %v2665
    %v3114 = vmul.f32 %v3098, %v2666
    %v3115 = vmul.f32 %v3099, %v2667
    %v3116 = vmul.f32 %v3100, %v2668
    %v3117 = vmul.f32 %v3101, %v2669
    %v3118 = vmul.f32 %v3102, %v2670
    %v3119 = vmul.f32 %v3103, %v2671
    %v3120 = vrcp.pop %v2832
    %v3121 = vmul.f32 %v3104, %v3120
    %v3122 = vrcp.pop %v2833
    %v3123 = vmul.f32 %v3105, %v3122
    %v3124 = vrcp.pop %v2834
    %v3125 = vmul.f32 %v3106, %v3124
    %v3126 = vrcp.pop %v2835
    %v3127 = vmul.f32 %v3107, %v3126
    %v3128 = vrcp.pop %v2836
    %v3129 = vmul.f32 %v3108, %v3128
    %v3130 = vrcp.pop %v2837
    %v3131 = vmul.f32 %v3109, %v3130
    %v3132 = vrcp.pop %v2838
    %v3133 = vmul.f32 %v3110, %v3132
    %v3134 = vrcp.pop %v2839
    %v3135 = vmul.f32 %v3111, %v3134
    %v3136 = vrcp.pop %v2840
    %v3137 = vmul.f32 %v3112, %v3136
    %v3138 = vrcp.pop %v2841
    %v3139 = vmul.f32 %v3113, %v3138
    %v3140 = vrcp.pop %v2842
    %v3141 = vmul.f32 %v3114, %v3140
    %v3142 = vrcp.pop %v2843
    %v3143 = vmul.f32 %v3115, %v3142
    %v3144 = vrcp.pop %v2844
    %v3145 = vmul.f32 %v3116, %v3144
    %v3146 = vrcp.pop %v2845
    %v3147 = vmul.f32 %v3117, %v3146
    %v3148 = vrcp.pop %v2846
    %v3149 = vmul.f32 %v3118, %v3148
    %v3150 = vrcp.pop %v2847
    %v3151 = vmul.f32 %v3119, %v3150
    %3152 = vst [vmem:[#allocation7] sm:$0xff] %v3121
    %3153 = vst [vmem:[#allocation7 + $0x8] sm:$0xff] %v3123
    %3154 = vst [vmem:[#allocation7 + $0x10] sm:$0xff] %v3125
    %3155 = vst [vmem:[#allocation7 + $0x18] sm:$0xff] %v3127
    %3156 = vst [vmem:[#allocation7 + $0x20] sm:$0xff] %v3129
    %3157 = vst [vmem:[#allocation7 + $0x28] sm:$0xff] %v3131
    %3158 = vst [vmem:[#allocation7 + $0x30] sm:$0xff] %v3133
    %3159 = vst [vmem:[#allocation7 + $0x38] sm:$0xff] %v3135
    %3160 = vst [vmem:[#allocation7 + $0x40] sm:$0xff] %v3137
    %3161 = vst [vmem:[#allocation7 + $0x48] sm:$0xff] %v3139
    %3162 = vst [vmem:[#allocation7 + $0x50] sm:$0xff] %v3141
    %3163 = vst [vmem:[#allocation7 + $0x58] sm:$0xff] %v3143
    %3164 = vst [vmem:[#allocation7 + $0x60] sm:$0xff] %v3145
    %3165 = vst [vmem:[#allocation7 + $0x68] sm:$0xff] %v3147
    %3166 = vst [vmem:[#allocation7 + $0x70] sm:$0xff] %v3149
    %3167 = vst [vmem:[#allocation7 + $0x78] sm:$0xff] %v3151
    %v3168 = vld [vmem:[%s5] sm:$0xff]
    %v3169 = vld [vmem:[%s5 + $0x8] sm:$0xff]
    %v3170 = vld [vmem:[%s5 + $0x10] sm:$0xff]
    %v3171 = vld [vmem:[%s5 + $0x18] sm:$0xff]
    %v3172 = vld [vmem:[%s5 + $0x20] sm:$0xff]
    %v3173 = vld [vmem:[%s5 + $0x28] sm:$0xff]
    %v3174 = vld [vmem:[%s5 + $0x30] sm:$0xff]
    %v3175 = vld [vmem:[%s5 + $0x38] sm:$0xff]
    %v3176 = vld [vmem:[%s5 + $0x40] sm:$0xff]
    %v3177 = vld [vmem:[%s5 + $0x48] sm:$0xff]
    %v3178 = vld [vmem:[%s5 + $0x50] sm:$0xff]
    %v3179 = vld [vmem:[%s5 + $0x58] sm:$0xff]
    %v3180 = vld [vmem:[%s5 + $0x60] sm:$0xff]
    %v3181 = vld [vmem:[%s5 + $0x68] sm:$0xff]
    %v3182 = vld [vmem:[%s5 + $0x70] sm:$0xff]
    %v3183 = vld [vmem:[%s5 + $0x78] sm:$0xff]
    %3184 = vmatprep.subr.mxu0 0.0
    %3185 = vmatpush1.msra.mxu0 %v3168
    %3186 = vmatprep.subr.mxu0 0.0
    %3187 = vmatpush1.msra.mxu0 %v3169
    %3188 = vmatprep.subr.mxu0 0.0
    %3189 = vmatpush1.msra.mxu0 %v3170
    %3190 = vmatprep.subr.mxu0 0.0
    %3191 = vmatpush1.msra.mxu0 %v3171
    %3192 = vmatprep.subr.mxu0 0.0
    %3193 = vmatpush1.msra.mxu0 %v3172
    %3194 = vmatprep.subr.mxu0 0.0
    %3195 = vmatpush1.msra.mxu0 %v3173
    %3196 = vmatprep.subr.mxu0 0.0
    %3197 = vmatpush1.msra.mxu0 %v3174
    %3198 = vmatprep.subr.mxu0 0.0
    %3199 = vmatpush1.msra.mxu0 %v3175
    %3200 = vmatprep.subr.mxu0 0.0
    %3201 = vmatpush1.msra.mxu0 %v3176
    %3202 = vmatprep.subr.mxu0 0.0
    %3203 = vmatpush1.msra.mxu0 %v3177
    %3204 = vmatprep.subr.mxu0 0.0
    %3205 = vmatpush1.msra.mxu0 %v3178
    %3206 = vmatprep.subr.mxu0 0.0
    %3207 = vmatpush1.msra.mxu0 %v3179
    %3208 = vmatprep.subr.mxu0 0.0
    %3209 = vmatpush1.msra.mxu0 %v3180
    %3210 = vmatprep.subr.mxu0 0.0
    %3211 = vmatpush1.msra.mxu0 %v3181
    %3212 = vmatprep.subr.mxu0 0.0
    %3213 = vmatpush1.msra.mxu0 %v3182
    %3214 = vmatprep.subr.mxu0 0.0
    %3215 = vmatpush1.msra.mxu0 %v3183
    %3216 = vmatprep.subr.mxu0 0.0
    %3217 = vmatpush1.msra.mxu0 0.0
    %3218 = vmatprep.subr.mxu0 0.0
    %3219 = vmatpush1.msra.mxu0 0.0
    %3220 = vmatprep.subr.mxu0 0.0
    %3221 = vmatpush1.msra.mxu0 0.0
    %3222 = vmatprep.subr.mxu0 0.0
    %3223 = vmatpush1.msra.mxu0 0.0
    %3224 = vmatprep.subr.mxu0 0.0
    %3225 = vmatpush1.msra.mxu0 0.0
    %3226 = vmatprep.subr.mxu0 0.0
    %3227 = vmatpush1.msra.mxu0 0.0
    %3228 = vmatprep.subr.mxu0 0.0
    %3229 = vmatpush1.msra.mxu0 0.0
    %3230 = vmatprep.subr.mxu0 0.0
    %3231 = vmatpush1.msra.mxu0 0.0
    %3232 = vmatprep.subr.mxu0 0.0
    %3233 = vmatpush1.msra.mxu0 0.0
    %3234 = vmatprep.subr.mxu0 0.0
    %3235 = vmatpush1.msra.mxu0 0.0
    %3236 = vmatprep.subr.mxu0 0.0
    %3237 = vmatpush1.msra.mxu0 0.0
    %3238 = vmatprep.subr.mxu0 0.0
    %3239 = vmatpush1.msra.mxu0 0.0
    %3240 = vmatprep.subr.mxu0 0.0
    %3241 = vmatpush1.msra.mxu0 0.0
    %3242 = vmatprep.subr.mxu0 0.0
    %3243 = vmatpush1.msra.mxu0 0.0
    %3244 = vmatprep.subr.mxu0 0.0
    %3245 = vmatpush1.msra.mxu0 0.0
    %3246 = vmatprep.subr.mxu0 0.0
    %3247 = vmatpush1.msra.mxu0 0.0
    %3248 = vmatprep.mubr.f32.mxu0 0.0
    %3249 = vmatmul.mubr.f32.gmra.mrb[0].mxu0 %v3121
    %v3250 = vpop.f32.mrb[0].mxu0
    %v3251 = vadd.f32 0.0, %v3250
    %v3252 = vpop.f32.mrb[0].mxu0
    %3253 = vmatprep.mubr.f32.mxu0 0.0
    %3254 = vmatmul.mubr.f32.gmra.mrb[0].mxu0 %v3123
    %v3255 = vpop.f32.mrb[0].mxu0
    %v3256 = vadd.f32 0.0, %v3255
    %v3257 = vpop.f32.mrb[0].mxu0
    %3258 = vmatprep.mubr.f32.mxu0 0.0
    %3259 = vmatmul.mubr.f32.gmra.mrb[0].mxu0 %v3125
    %v3260 = vpop.f32.mrb[0].mxu0
    %v3261 = vadd.f32 0.0, %v3260
    %v3262 = vpop.f32.mrb[0].mxu0
    %3263 = vmatprep.mubr.f32.mxu0 0.0
    %3264 = vmatmul.mubr.f32.gmra.mrb[0].mxu0 %v3127
    %v3265 = vpop.f32.mrb[0].mxu0
    %v3266 = vadd.f32 0.0, %v3265
    %v3267 = vpop.f32.mrb[0].mxu0
    %3268 = vmatprep.mubr.f32.mxu0 0.0
    %3269 = vmatmul.mubr.f32.gmra.mrb[0].mxu0 %v3129
    %v3270 = vpop.f32.mrb[0].mxu0
    %v3271 = vadd.f32 0.0, %v3270
    %v3272 = vpop.f32.mrb[0].mxu0
    %3273 = vmatprep.mubr.f32.mxu0 0.0
    %3274 = vmatmul.mubr.f32.gmra.mrb[0].mxu0 %v3131
    %v3275 = vpop.f32.mrb[0].mxu0
    %v3276 = vadd.f32 0.0, %v3275
    %v3277 = vpop.f32.mrb[0].mxu0
    %3278 = vmatprep.mubr.f32.mxu0 0.0
    %3279 = vmatmul.mubr.f32.gmra.mrb[0].mxu0 %v3133
    %v3280 = vpop.f32.mrb[0].mxu0
    %v3281 = vadd.f32 0.0, %v3280
    %v3282 = vpop.f32.mrb[0].mxu0
    %3283 = vmatprep.mubr.f32.mxu0 0.0
    %3284 = vmatmul.mubr.f32.gmra.mrb[0].mxu0 %v3135
    %v3285 = vpop.f32.mrb[0].mxu0
    %v3286 = vadd.f32 0.0, %v3285
    %v3287 = vpop.f32.mrb[0].mxu0
    %3288 = vmatprep.mubr.f32.mxu0 0.0
    %3289 = vmatmul.mubr.f32.gmra.mrb[0].mxu0 %v3137
    %v3290 = vpop.f32.mrb[0].mxu0
    %v3291 = vadd.f32 0.0, %v3290
    %v3292 = vpop.f32.mrb[0].mxu0
    %3293 = vmatprep.mubr.f32.mxu0 0.0
    %3294 = vmatmul.mubr.f32.gmra.mrb[0].mxu0 %v3139
    %v3295 = vpop.f32.mrb[0].mxu0
    %v3296 = vadd.f32 0.0, %v3295
    %v3297 = vpop.f32.mrb[0].mxu0
    %3298 = vmatprep.mubr.f32.mxu0 0.0
    %3299 = vmatmul.mubr.f32.gmra.mrb[0].mxu0 %v3141
    %v3300 = vpop.f32.mrb[0].mxu0
    %v3301 = vadd.f32 0.0, %v3300
    %v3302 = vpop.f32.mrb[0].mxu0
    %3303 = vmatprep.mubr.f32.mxu0 0.0
    %3304 = vmatmul.mubr.f32.gmra.mrb[0].mxu0 %v3143
    %v3305 = vpop.f32.mrb[0].mxu0
    %v3306 = vadd.f32 0.0, %v3305
    %v3307 = vpop.f32.mrb[0].mxu0
    %3308 = vmatprep.mubr.f32.mxu0 0.0
    %3309 = vmatmul.mubr.f32.gmra.mrb[0].mxu0 %v3145
    %v3310 = vpop.f32.mrb[0].mxu0
    %v3311 = vadd.f32 0.0, %v3310
    %v3312 = vpop.f32.mrb[0].mxu0
    %3313 = vmatprep.mubr.f32.mxu0 0.0
    %3314 = vmatmul.mubr.f32.gmra.mrb[0].mxu0 %v3147
    %v3315 = vpop.f32.mrb[0].mxu0
    %v3316 = vadd.f32 0.0, %v3315
    %v3317 = vpop.f32.mrb[0].mxu0
    %3318 = vmatprep.mubr.f32.mxu0 0.0
    %3319 = vmatmul.mubr.f32.gmra.mrb[0].mxu0 %v3149
    %v3320 = vpop.f32.mrb[0].mxu0
    %v3321 = vadd.f32 0.0, %v3320
    %v3322 = vpop.f32.mrb[0].mxu0
    %3323 = vmatprep.mubr.f32.mxu0 0.0
    %3324 = vmatmul.mubr.f32.gmra.mrb[0].mxu0 %v3151
    %v3325 = vpop.f32.mrb[0].mxu0
    %v3326 = vadd.f32 0.0, %v3325
    %v3327 = vpop.f32.mrb[0].mxu0
    %3328 = vdwg.mxu0
    %vm3329 = vcmask 31744
    %3330 = vst.msk [vmem:[%s7] sm:$0xff] %vm3329, %v3251
    %3331 = vst.msk [vmem:[%s7 + $0x8] sm:$0xff] %vm3329, %v3256
    %3332 = vst.msk [vmem:[%s7 + $0x10] sm:$0xff] %vm3329, %v3261
    %3333 = vst.msk [vmem:[%s7 + $0x18] sm:$0xff] %vm3329, %v3266
    %3334 = vst.msk [vmem:[%s7 + $0x20] sm:$0xff] %vm3329, %v3271
    %3335 = vst.msk [vmem:[%s7 + $0x28] sm:$0xff] %vm3329, %v3276
    %3336 = vst.msk [vmem:[%s7 + $0x30] sm:$0xff] %vm3329, %v3281
    %3337 = vst.msk [vmem:[%s7 + $0x38] sm:$0xff] %vm3329, %v3286
    %3338 = vst.msk [vmem:[%s7 + $0x40] sm:$0xff] %vm3329, %v3291
    %3339 = vst.msk [vmem:[%s7 + $0x48] sm:$0xff] %vm3329, %v3296
    %3340 = vst.msk [vmem:[%s7 + $0x50] sm:$0xff] %vm3329, %v3301
    %3341 = vst.msk [vmem:[%s7 + $0x58] sm:$0xff] %vm3329, %v3306
    %3342 = vst.msk [vmem:[%s7 + $0x60] sm:$0xff] %vm3329, %v3311
    %3343 = vst.msk [vmem:[%s7 + $0x68] sm:$0xff] %vm3329, %v3316
    %3344 = vst.msk [vmem:[%s7 + $0x70] sm:$0xff] %vm3329, %v3321
    %3345 = vst.msk [vmem:[%s7 + $0x78] sm:$0xff] %vm3329, %v3326
    // Predicated region
    $region34: #{tpu_custom_call.1} parent=1 // pred_check
      _
    $region35: #{tpu_custom_call.1} parent=1 // pred_check_branch
      %3347 = sbr.rel (0) target = $region37
    $region36: #{tpu_custom_call.1} parent=1 // pred_region
      %s3349 = ssub.s32 2048, 2048
      %3350 = vsyncadd [#allocation4], %s3349
      %s3351 = sshll.u32 [#allocation7], 4
      %s3352 = int_to_ptr.vmem [resolvable:$true] %s3351
      %3357 = dma.vmem_to_hbm [thread:$0]  %s3352, 2048, %s6, [#allocation4], 128, 128, 8
    $region37: #{tpu_custom_call.1} parent=1 // pred_fallthru
      _
    // Predicated region
    $region38: #{tpu_custom_call.1} parent=1 // pred_check
      _
    $region39: #{tpu_custom_call.1} parent=1 // pred_check_branch
      %3359 = sbr.rel (0) target = $region41
    $region40: #{tpu_custom_call.1} parent=1 // pred_region
      _
    $region41: #{tpu_custom_call.1} parent=1 // pred_fallthru
      _
    // Predicated region
    $region42: #{tpu_custom_call.1} parent=1 // pred_check
      _
    $region43: #{tpu_custom_call.1} parent=1 // pred_check_branch
      %3361 = sbr.rel (0) target = $region45
    $region44: #{tpu_custom_call.1} parent=1 // pred_region
      %3362 = dma.done [#allocation4], 2048
    $region45: #{tpu_custom_call.1} parent=1 // pred_fallthru
      _
    // Predicated region
    $region46: #{tpu_custom_call.1} parent=1 // pred_check
      _
    $region47: #{tpu_custom_call.1} parent=1 // pred_check_branch
      %3364 = sbr.rel (0) target = $region49
    $region48: #{tpu_custom_call.1} parent=1 // pred_region
      _
    $region49: #{tpu_custom_call.1} parent=1 // pred_fallthru
      _
    %3365 = vsyncpa [#allocation3], 1
    %3366 = vsyncpa [#allocation6], 1
    %3367 = vsyncpa [#allocation4], 1

</llo_original>
